<compile_context>
chip_gen: v7x
topology: tpu7x:2x2x1
jax: 0.10.0
libtpu: 0.0.40
codegen_flags: <defaults>
</compile_context>

<pallas_src>
import functools

import jax
import jax.numpy as jnp
from jax import lax
from jax.experimental import pallas as pl
from jax.experimental.pallas import tpu as pltpu

EPS_LN = 1e-5
EPS_BN = 1e-5

# 3x3 conv tap ordering shared by the kernel (rolls) and the wrapper (masks and
# conv-weight flattening): tap index t = (dh+1)*3 + (dw+1).
_TAPS = tuple((dh, dw) for dh in (-1, 0, 1) for dw in (-1, 0, 1))


# ----------------------------- fused Pallas kernel -------------------------- #
def _fused_kernel(xcls_ref, patch_ref,
                  lncw_ref, lncb_ref,
                  wq_ref, bq_ref,
                  lnxw_ref, lnxb_ref,
                  wkv_ref, bkv_ref,
                  wproj_ref, bproj_ref,
                  wconv_ref, bconv_ref,
                  bnscale_ref, bnshift_ref,
                  mask_ref,
                  outcls_ref, outpatch_ref,
                  cols_ref,
                  *, num_heads, b_tile, n_cls, Hp, Wp):
  C = xcls_ref.shape[-1]
  N = Hp * Wp
  H = num_heads
  d = C // H
  bf16 = jnp.bfloat16
  f32 = jnp.float32

  # ---- LayerNorm(x_cls) over C for all b_tile*Cls rows at once ----
  xc = xcls_ref[...]                                        # [M, C] f32
  mu = jnp.mean(xc, axis=-1, keepdims=True)
  cc = xc - mu
  var = jnp.mean(cc * cc, axis=-1, keepdims=True)
  xn = cc * lax.rsqrt(var + EPS_LN) * lncw_ref[...] + lncb_ref[...]
  xn_bf = xn.astype(bf16)

  # ---- proj_q with head-major weights (attention scale pre-folded):
  #      q_h = xn @ Wq[h] + bq[h]  -> [M, d] per head, no lane slicing. ----
  q_heads = [jnp.dot(xn_bf, wq_ref[h], preferred_element_type=f32) + bq_ref[h]
             for h in range(H)]                             # H x [M, d] f32

  # ---- LayerNormGeneral(patch over (C,H,W)) per batch; normalized patches
  #      are lane-stacked so the 1x1-conv kv projection is ONE matmul over
  #      b_tile*N columns (weights pushed once per grid step). ----
  lnxw = lnxw_ref[...]
  lnxb = lnxb_ref[...]
  xps = []                                                  # raw bf16 patches
  xpn_parts = []
  for b in range(b_tile):
    xp_b = patch_ref[b]                                     # [C, N] bf16
    xps.append(xp_b)
    xf = xp_b.astype(f32)
    mu_p = jnp.mean(xf)
    cp = xf - mu_p
    s2 = jnp.mean(cp * cp)
    xpn_parts.append((cp * lax.rsqrt(s2 + EPS_LN) * lnxw + lnxb).astype(bf16))
  xpn_all = jnp.concatenate(xpn_parts, axis=1)              # [C, b_tile*N] bf16
  kv_all = (jnp.dot(wkv_ref[...], xpn_all, preferred_element_type=f32)
            + bkv_ref[...])                                 # [2C, b_tile*N] f32

  # ---- scores for every (batch, head) stacked along sublanes -> ONE fused
  #      softmax chain (single max / exp / sum / reciprocal). ----
  rows = []
  for b in range(b_tile):
    c0 = b * N
    for h in range(H):
      q_bh = q_heads[h][b * n_cls:(b + 1) * n_cls, :].astype(bf16)   # [Cls, d]
      k_bh = kv_all[h * d:(h + 1) * d, c0:c0 + N].astype(bf16)       # [d, N]
      rows.append(jnp.dot(q_bh, k_bh, preferred_element_type=f32))
  s = jnp.concatenate(rows, axis=0)                         # [b_tile*H*Cls, N]
  m = jnp.max(s, axis=-1, keepdims=True)
  e = jnp.exp(s - m)
  p = e * pl.reciprocal(jnp.sum(e, axis=-1, keepdims=True), approx=True)
  p_bf = p.astype(bf16)

  # ---- attn @ V per (batch, head); the head concat is folded into the
  #      output projection:  oc = x_cls + b_proj + sum_h o_h @ Wproj[h]. ----
  oc = xc + bproj_ref[...]                                  # [M, C] f32
  for h in range(H):
    o_h = []
    for b in range(b_tile):
      r0 = (b * H + h) * n_cls
      p_bh = p_bf[r0:r0 + n_cls, :]                         # [Cls, N] bf16
      v_bh = kv_all[C + h * d:C + (h + 1) * d,
                    b * N:(b + 1) * N].astype(bf16)         # [d, N] bf16
      # p @ v^T without a transpose copy: contract over the N axis.
      o_h.append(lax.dot_general(p_bh, v_bh,
                                 dimension_numbers=(((1,), (1,)), ((), ())),
                                 preferred_element_type=f32))   # [Cls, d]
    o_h = jnp.concatenate(o_h, axis=0).astype(bf16)         # [M, d]
    oc = oc + jnp.dot(o_h, wproj_ref[h], preferred_element_type=f32)
  outcls_ref[...] = oc

  # ---- cls -> patch matmul per batch, then im2col taps (lane rolls +
  #      precomputed boundary masks) written into the cols scratch; only one
  #      tap is live at a time, batches stacked along the lane axis. ----
  mask = mask_ref[...]                                      # [9, N] f32 (0/1)
  for b in range(b_tile):
    oc_b = oc[b * n_cls:(b + 1) * n_cls, :]                 # [Cls, C] f32
    # oc carries the f32 residual -> keep this small matmul in f32.
    opp = jnp.dot(oc_b, xps[b].astype(f32),
                  preferred_element_type=f32)               # [Cls, N] f32
    for t, (dh, dw) in enumerate(_TAPS):
      off = dh * Wp + dw
      tap = opp if off == 0 else pltpu.roll(opp, shift=(-off) % N, axis=1)
      cols_ref[t * n_cls:(t + 1) * n_cls, b * N:(b + 1) * N] = (
          (tap * mask[t:t + 1, :]).astype(bf16))

  # ---- 3x3 conv as ONE deep [C, 9*Cls] x [9*Cls, b_tile*N] matmul, folded
  #      BatchNorm (eval) scale/shift and GELU. ----
  y = (jnp.dot(wconv_ref[...], cols_ref[...], preferred_element_type=f32)
       + bconv_ref[...])                                    # [C, b_tile*N]
  y = y * bnscale_ref[...] + bnshift_ref[...]
  # TODO(synk): PyTorch nn.GELU() defaults to the exact erf form; erf has no
  # robust Mosaic lowering, so the tanh approximation is used (~1e-3 diff).
  y = jax.nn.gelu(y, approximate=True)
  for b in range(b_tile):
    outpatch_ref[b] = y[:, b * N:(b + 1) * N].astype(outpatch_ref.dtype)


# ------------------------------- wrapper ------------------------------------ #
def _pick_b_tile(batch, max_tile=8):
  """Largest divisor of `batch` <= max_tile, preferring >= 2 grid steps so
  both TensorCores stay busy on dual-TC chips (v7x)."""
  divisors = [t for t in range(1, min(max_tile, batch) + 1) if batch % t == 0]
  two_plus = [t for t in divisors if batch // t >= 2]
  return max(two_plus) if two_plus else max(divisors)


def semantic2feature_forward(x_cls, input_patch, params, *, num_heads,
                             b_tile=None, patch_io_dtype=jnp.bfloat16):
  """Returns (out_cls [B,Cls,C] f32, out_patch [B,C,Hp,Wp] patch_io_dtype)."""
  B, Cls, C = x_cls.shape
  _, _, Hp, Wp = input_patch.shape
  N = Hp * Wp
  H = num_heads
  d = C // H
  if b_tile is None:
    b_tile = _pick_b_tile(B)
  assert B % b_tile == 0, (B, b_tile)
  bf16 = jnp.bfloat16

  x_cls2d = x_cls.astype(jnp.float32).reshape(B * Cls, C)
  # Patch kept channel-major [C, N] per batch, bf16 in HBM/VMEM (halves the
  # dominant DMA traffic); LN stats are still computed in f32 in-kernel.
  patch = input_patch.astype(patch_io_dtype).reshape(B, C, N)

  scale = d ** (-0.5)
  # Head-major projection weights; attention scale folded into Wq/bq (exact).
  wq_hm = (params["wq_t"].reshape(C, H, d).transpose(1, 0, 2)
           * scale).astype(bf16)                                 # [H, C, d]
  bq_hm = (params["bq"].reshape(1, H, d).transpose(1, 0, 2) * scale)  # [H,1,d]
  wproj_hm = params["w_proj_t"].reshape(H, d, C).astype(bf16)    # [H, d, C]
  w_kv = params["w_kv"].astype(bf16)                             # [2C, C]
  # conv weight reordered so flat row index of `cols` = tap*Cls + class.
  w_conv = (params["w_conv"].transpose(0, 2, 3, 1)
            .reshape(C, 9 * Cls).astype(bf16))                   # [C, 9*Cls]

  # BatchNorm2d (eval) folded to per-channel scale/shift.
  bn_scale = params["bn_gamma"] / jnp.sqrt(params["bn_var"] + EPS_BN)
  bn_shift = params["bn_beta"] - params["bn_mean"] * bn_scale

  # Precomputed 0/1 boundary masks for the 9 conv taps (batch-independent).
  n_idx = jnp.arange(N, dtype=jnp.int32)
  row_i = n_idx // Wp
  col_j = n_idx % Wp
  tap_mask = jnp.stack(
      [((row_i + dh >= 0) & (row_i + dh < Hp) &
        (col_j + dw >= 0) & (col_j + dw < Wp)) for dh, dw in _TAPS],
      axis=0).astype(jnp.float32)                                # [9, N]

  def shared(x):
    return pl.BlockSpec(x.shape, lambda i, n=x.ndim: (0,) * n)

  # TODO(synk): the review suggested pipeline_mode=pl.Buffered(1) on these
  # grid-invariant weight blocks to avoid double-buffering them in VMEM;
  # skipped here (weights are a few KB at these shapes) to keep lowering
  # portable across jax versions.
  shared_args = [
      params["ln_cls_w"], params["ln_cls_b"],
      wq_hm, bq_hm,
      params["ln_x_w"], params["ln_x_b"],
      w_kv, params["b_kv"],
      wproj_hm, params["b_proj"],
      w_conv, params["b_conv"].reshape(C, 1),
      bn_scale.reshape(C, 1), bn_shift.reshape(C, 1),
      tap_mask,
  ]

  kernel = functools.partial(_fused_kernel, num_heads=H, b_tile=b_tile,
                             n_cls=Cls, Hp=Hp, Wp=Wp)
  out_cls, out_patch = pl.pallas_call(
      kernel,
      grid=(B // b_tile,),
      in_specs=[
          pl.BlockSpec((b_tile * Cls, C), lambda i: (i, 0)),   # x_cls rows
          pl.BlockSpec((b_tile, C, N), lambda i: (i, 0, 0)),   # patch
      ] + [shared(a) for a in shared_args],
      out_specs=[
          pl.BlockSpec((b_tile * Cls, C), lambda i: (i, 0)),
          pl.BlockSpec((b_tile, C, N), lambda i: (i, 0, 0)),
      ],
      out_shape=[jax.ShapeDtypeStruct((B * Cls, C), jnp.float32),
                 jax.ShapeDtypeStruct((B, C, N), patch_io_dtype)],
      scratch_shapes=[pltpu.VMEM((9 * Cls, b_tile * N), bf16)],
      compiler_params=pltpu.CompilerParams(
          dimension_semantics=("parallel",),
          vmem_limit_bytes=32 * 1024 * 1024),
  )(x_cls2d, patch, *shared_args)

  return out_cls.reshape(B, Cls, C), out_patch.reshape(B, C, Hp, Wp)


# ---------------------------- parameter init -------------------------------- #
def init_params(key, channels, num_classes):
  C, Cls = channels, num_classes
  ks = jax.random.split(key, 8)

  def w(k, shape, fan_in):
    return jax.random.normal(k, shape, jnp.float32) / jnp.sqrt(fan_in)

  return {
      # nn.LayerNorm(C)
      "ln_cls_w": jnp.ones((1, C), jnp.float32),
      "ln_cls_b": jnp.zeros((1, C), jnp.float32),
      # nn.Linear(C, C)  (stored pre-transposed: y = x @ wq_t + bq)
      "wq_t": w(ks[0], (C, C), C),
      "bq": w(ks[1], (1, C), C),
      # LayerNormGeneral(affine_shape=(C,1,1))
      "ln_x_w": jnp.ones((C, 1), jnp.float32),
      "ln_x_b": jnp.zeros((C, 1), jnp.float32),
      # nn.Conv2d(C, 2C, 1)
      "w_kv": w(ks[2], (2 * C, C), C),
      "b_kv": w(ks[3], (2 * C, 1), C),
      # nn.Linear(C, C)
      "w_proj_t": w(ks[4], (C, C), C),
      "b_proj": w(ks[5], (1, C), C),
      # nn.Conv2d(Cls, C, 3, 1, 1)
      "w_conv": w(ks[6], (C, Cls, 3, 3), Cls * 9),
      "b_conv": w(ks[7], (C,), Cls * 9),
      # nn.BatchNorm2d(C) (eval mode)
      "bn_gamma": jnp.ones((C,), jnp.float32),
      "bn_beta": jnp.zeros((C,), jnp.float32),
      "bn_mean": jnp.zeros((C,), jnp.float32),
      "bn_var": jnp.ones((C,), jnp.float32),
  }


# ------------------------- pure-JAX reference (f32 golden) ------------------ #
def reference_forward(x_cls, input_patch, params, num_heads):
  with jax.default_matmul_precision("highest"):
    B, Cls, C = x_cls.shape
    Hp, Wp = input_patch.shape[2:]
    N = Hp * Wp
    d = C // num_heads
    scale = d ** (-0.5)

    mu = x_cls.mean(-1, keepdims=True)
    c = x_cls - mu
    var = (c * c).mean(-1, keepdims=True)
    xn = c / jnp.sqrt(var + EPS_LN) * params["ln_cls_w"][0] + params["ln_cls_b"][0]
    q = xn @ params["wq_t"] + params["bq"][0]

    xp = input_patch
    mu = xp.mean(axis=(1, 2, 3), keepdims=True)
    cpx = xp - mu
    s = (cpx * cpx).mean(axis=(1, 2, 3), keepdims=True)
    xpn = cpx / jnp.sqrt(s + EPS_LN)
    xpn = xpn * params["ln_x_w"].reshape(1, C, 1, 1) + params["ln_x_b"].reshape(1, C, 1, 1)
    kv = (jnp.einsum("oc,bchw->bohw", params["w_kv"], xpn)
          + params["b_kv"].reshape(1, 2 * C, 1, 1))

    k = kv[:, :C].reshape(B, num_heads, d, N)
    v = kv[:, C:].reshape(B, num_heads, d, N).transpose(0, 1, 3, 2)
    qh = q.reshape(B, Cls, num_heads, d).transpose(0, 2, 1, 3)
    attn = jax.nn.softmax((qh @ k) * scale, axis=-1)
    oc = (attn @ v).transpose(0, 2, 1, 3).reshape(B, Cls, C)
    oc = oc @ params["w_proj_t"] + params["b_proj"][0]
    out_cls = x_cls + oc

    out_patch = (out_cls @ input_patch.reshape(B, C, N)).reshape(B, Cls, Hp, Wp)
    y = lax.conv_general_dilated(out_patch, params["w_conv"], (1, 1),
                                 ((1, 1), (1, 1)),
                                 dimension_numbers=("NCHW", "OIHW", "NCHW"),
                                 precision=lax.Precision.HIGHEST)
    y = y + params["b_conv"].reshape(1, C, 1, 1)
    bn_scale = params["bn_gamma"] / jnp.sqrt(params["bn_var"] + EPS_BN)
    bn_shift = params["bn_beta"] - params["bn_mean"] * bn_scale
    y = y * bn_scale.reshape(1, C, 1, 1) + bn_shift.reshape(1, C, 1, 1)
    y = jax.nn.gelu(y, approximate=True)
    return out_cls, y


# --------------------------------- main -------------------------------------- #
if __name__ == "__main__":
  # B=4 exercises b_tile=2 (two batches per grid step) with a 2-step grid.
  B, C, Cls, n_heads, Hp, Wp = 4, 32, 8, 4, 16, 16   # N = 256 -> lane-dense

  key = jax.random.PRNGKey(0)
  k1, k2, k3 = jax.random.split(key, 3)
  x_cls = jax.random.normal(k1, (B, Cls, C), jnp.float32)
  # The kernel consumes the patch in bf16; make the test input bf16-exact so
  # the golden comparison measures kernel arithmetic, not input quantization.
  input_patch = jax.random.normal(k2, (B, C, Hp, Wp), jnp.float32)
  input_patch = input_patch.astype(jnp.bfloat16).astype(jnp.float32)
  params = init_params(k3, C, Cls)

  fwd = jax.jit(functools.partial(semantic2feature_forward, num_heads=n_heads))
  out_cls, out_patch = fwd(x_cls, input_patch, params)
  jax.block_until_ready((out_cls, out_patch))

  assert out_cls.shape == (B, Cls, C)
  assert out_patch.shape == (B, C, Hp, Wp)

  ref_cls, ref_patch = reference_forward(x_cls, input_patch, params, n_heads)
  out_patch_f32 = out_patch.astype(jnp.float32)
  err_cls = float(jnp.max(jnp.abs(out_cls - ref_cls)))
  err_patch = float(jnp.max(jnp.abs(out_patch_f32 - ref_patch)))
  assert jnp.allclose(out_cls, ref_cls, rtol=5e-2, atol=5e-2), err_cls
  assert jnp.allclose(out_patch_f32, ref_patch, rtol=5e-2, atol=5e-2), err_patch

  print("KERNEL_OK")
</pallas_src>

<mosaic_0001>
module attributes {stable_mosaic.version = 11 : i64} {
  func.func @_fused_kernel(%arg0: i32, %arg1: memref<16x32xf32, #tpu.memory_space<vmem>>, %arg2: memref<2x32x256xbf16, #tpu.memory_space<vmem>>, %arg3: memref<1x32xf32, #tpu.memory_space<vmem>>, %arg4: memref<1x32xf32, #tpu.memory_space<vmem>>, %arg5: memref<4x32x8xbf16, #tpu.memory_space<vmem>>, %arg6: memref<4x1x8xf32, #tpu.memory_space<vmem>>, %arg7: memref<32x1xf32, #tpu.memory_space<vmem>>, %arg8: memref<32x1xf32, #tpu.memory_space<vmem>>, %arg9: memref<64x32xbf16, #tpu.memory_space<vmem>>, %arg10: memref<64x1xf32, #tpu.memory_space<vmem>>, %arg11: memref<4x8x32xbf16, #tpu.memory_space<vmem>>, %arg12: memref<1x32xf32, #tpu.memory_space<vmem>>, %arg13: memref<32x72xbf16, #tpu.memory_space<vmem>>, %arg14: memref<32x1xf32, #tpu.memory_space<vmem>>, %arg15: memref<32x1xf32, #tpu.memory_space<vmem>>, %arg16: memref<32x1xf32, #tpu.memory_space<vmem>>, %arg17: memref<9x256xf32, #tpu.memory_space<vmem>>, %arg18: memref<16x32xf32, #tpu.memory_space<vmem>>, %arg19: memref<2x32x256xbf16, #tpu.memory_space<vmem>>, %arg20: memref<72x512xbf16, #tpu.memory_space<vmem>>) attributes {dimension_semantics = [#tpu.dimension_semantics<parallel>], iteration_bounds = array<i64: 2>, scalar_prefetch = 0 : i64, scratch_operands = 1 : i64, tpu.core_type = #tpu.core_type<tc>, window_params = [{transform_indices = @transform_0, window_bounds = array<i64: 16, 32>}, {transform_indices = @transform_1, window_bounds = array<i64: 2, 32, 256>}, {pipeline_mode = #tpu.pipeline_mode<synchronous>, transform_indices = @transform_2, window_bounds = array<i64: 1, 32>}, {pipeline_mode = #tpu.pipeline_mode<synchronous>, transform_indices = @transform_3, window_bounds = array<i64: 1, 32>}, {pipeline_mode = #tpu.pipeline_mode<synchronous>, transform_indices = @transform_4, window_bounds = array<i64: 4, 32, 8>}, {pipeline_mode = #tpu.pipeline_mode<synchronous>, transform_indices = @transform_5, window_bounds = array<i64: 4, 1, 8>}, {pipeline_mode = #tpu.pipeline_mode<synchronous>, transform_indices = @transform_6, window_bounds = array<i64: 32, 1>}, {pipeline_mode = #tpu.pipeline_mode<synchronous>, transform_indices = @transform_7, window_bounds = array<i64: 32, 1>}, {pipeline_mode = #tpu.pipeline_mode<synchronous>, transform_indices = @transform_8, window_bounds = array<i64: 64, 32>}, {pipeline_mode = #tpu.pipeline_mode<synchronous>, transform_indices = @transform_9, window_bounds = array<i64: 64, 1>}, {pipeline_mode = #tpu.pipeline_mode<synchronous>, transform_indices = @transform_10, window_bounds = array<i64: 4, 8, 32>}, {pipeline_mode = #tpu.pipeline_mode<synchronous>, transform_indices = @transform_11, window_bounds = array<i64: 1, 32>}, {pipeline_mode = #tpu.pipeline_mode<synchronous>, transform_indices = @transform_12, window_bounds = array<i64: 32, 72>}, {pipeline_mode = #tpu.pipeline_mode<synchronous>, transform_indices = @transform_13, window_bounds = array<i64: 32, 1>}, {pipeline_mode = #tpu.pipeline_mode<synchronous>, transform_indices = @transform_14, window_bounds = array<i64: 32, 1>}, {pipeline_mode = #tpu.pipeline_mode<synchronous>, transform_indices = @transform_15, window_bounds = array<i64: 32, 1>}, {pipeline_mode = #tpu.pipeline_mode<synchronous>, transform_indices = @transform_16, window_bounds = array<i64: 9, 256>}, {transform_indices = @transform_17, window_bounds = array<i64: 16, 32>}, {transform_indices = @transform_18, window_bounds = array<i64: 2, 32, 256>}]} {
    %c0 = arith.constant 0 : index
    %c0_0 = arith.constant 0 : index
    %0 = vector.load %arg1[%c0, %c0_0] : memref<16x32xf32, #tpu.memory_space<vmem>>, vector<16x32xf32>
    %cst = arith.constant dense<0.000000e+00> : vector<16xf32>
    %1 = vector.multi_reduction <add>, %0, %cst [1] : vector<16x32xf32> to vector<16xf32>
    %2 = vector.shape_cast %1 : vector<16xf32> to vector<16x1xf32>
    %cst_1 = arith.constant 3.200000e+01 : f32
    %3 = vector.broadcast %cst_1 : f32 to vector<16x1xf32>
    %4 = arith.divf %2, %3 : vector<16x1xf32>
    %5 = vector.broadcast %4 : vector<16x1xf32> to vector<16x32xf32>
    %6 = arith.subf %0, %5 : vector<16x32xf32>
    %7 = arith.mulf %6, %6 : vector<16x32xf32>
    %cst_2 = arith.constant dense<0.000000e+00> : vector<16xf32>
    %8 = vector.multi_reduction <add>, %7, %cst_2 [1] : vector<16x32xf32> to vector<16xf32>
    %9 = vector.shape_cast %8 : vector<16xf32> to vector<16x1xf32>
    %cst_3 = arith.constant 3.200000e+01 : f32
    %10 = vector.broadcast %cst_3 : f32 to vector<16x1xf32>
    %11 = arith.divf %9, %10 : vector<16x1xf32>
    %cst_4 = arith.constant 9.99999974E-6 : f32
    %12 = vector.broadcast %cst_4 : f32 to vector<16x1xf32>
    %13 = arith.addf %11, %12 : vector<16x1xf32>
    %14 = math.rsqrt %13 : vector<16x1xf32>
    %15 = vector.broadcast %14 : vector<16x1xf32> to vector<16x32xf32>
    %16 = arith.mulf %6, %15 : vector<16x32xf32>
    %c0_5 = arith.constant 0 : index
    %c0_6 = arith.constant 0 : index
    %17 = vector.load %arg3[%c0_5, %c0_6] : memref<1x32xf32, #tpu.memory_space<vmem>>, vector<1x32xf32>
    %18 = vector.broadcast %17 : vector<1x32xf32> to vector<16x32xf32>
    %19 = arith.mulf %16, %18 : vector<16x32xf32>
    %c0_7 = arith.constant 0 : index
    %c0_8 = arith.constant 0 : index
    %20 = vector.load %arg4[%c0_7, %c0_8] : memref<1x32xf32, #tpu.memory_space<vmem>>, vector<1x32xf32>
    %21 = vector.broadcast %20 : vector<1x32xf32> to vector<16x32xf32>
    %22 = arith.addf %19, %21 : vector<16x32xf32>
    %23 = arith.truncf %22 : vector<16x32xf32> to vector<16x32xbf16>
    %c0_9 = arith.constant 0 : index
    %c0_10 = arith.constant 0 : index
    %c0_11 = arith.constant 0 : index
    %24 = vector.load %arg5[%c0_9, %c0_10, %c0_11] : memref<4x32x8xbf16, #tpu.memory_space<vmem>>, vector<1x32x8xbf16>
    %25 = vector.shape_cast %24 : vector<1x32x8xbf16> to vector<32x8xbf16>
    %cst_12 = arith.constant dense<0.000000e+00> : vector<16x8xf32>
    %26 = tpu.matmul %23, %25, %cst_12 {dimension_numbers = #tpu.dot_dimension_numbers<[1], [0], [0], [1], [0, 0, 1, 1], [], []>} : vector<16x32xbf16>, vector<32x8xbf16>, vector<16x8xf32> -> vector<16x8xf32>
    %c0_13 = arith.constant 0 : index
    %c0_14 = arith.constant 0 : index
    %c0_15 = arith.constant 0 : index
    %27 = vector.load %arg6[%c0_13, %c0_14, %c0_15] : memref<4x1x8xf32, #tpu.memory_space<vmem>>, vector<1x1x8xf32>
    %28 = vector.shape_cast %27 : vector<1x1x8xf32> to vector<1x8xf32>
    %29 = vector.broadcast %28 : vector<1x8xf32> to vector<16x8xf32>
    %30 = arith.addf %26, %29 : vector<16x8xf32>
    %c1 = arith.constant 1 : index
    %c0_16 = arith.constant 0 : index
    %c0_17 = arith.constant 0 : index
    %31 = vector.load %arg5[%c1, %c0_16, %c0_17] : memref<4x32x8xbf16, #tpu.memory_space<vmem>>, vector<1x32x8xbf16>
    %32 = vector.shape_cast %31 : vector<1x32x8xbf16> to vector<32x8xbf16>
    %cst_18 = arith.constant dense<0.000000e+00> : vector<16x8xf32>
    %33 = tpu.matmul %23, %32, %cst_18 {dimension_numbers = #tpu.dot_dimension_numbers<[1], [0], [0], [1], [0, 0, 1, 1], [], []>} : vector<16x32xbf16>, vector<32x8xbf16>, vector<16x8xf32> -> vector<16x8xf32>
    %c1_19 = arith.constant 1 : index
    %c0_20 = arith.constant 0 : index
    %c0_21 = arith.constant 0 : index
    %34 = vector.load %arg6[%c1_19, %c0_20, %c0_21] : memref<4x1x8xf32, #tpu.memory_space<vmem>>, vector<1x1x8xf32>
    %35 = vector.shape_cast %34 : vector<1x1x8xf32> to vector<1x8xf32>
    %36 = vector.broadcast %35 : vector<1x8xf32> to vector<16x8xf32>
    %37 = arith.addf %33, %36 : vector<16x8xf32>
    %c2 = arith.constant 2 : index
    %c0_22 = arith.constant 0 : index
    %c0_23 = arith.constant 0 : index
    %38 = vector.load %arg5[%c2, %c0_22, %c0_23] : memref<4x32x8xbf16, #tpu.memory_space<vmem>>, vector<1x32x8xbf16>
    %39 = vector.shape_cast %38 : vector<1x32x8xbf16> to vector<32x8xbf16>
    %cst_24 = arith.constant dense<0.000000e+00> : vector<16x8xf32>
    %40 = tpu.matmul %23, %39, %cst_24 {dimension_numbers = #tpu.dot_dimension_numbers<[1], [0], [0], [1], [0, 0, 1, 1], [], []>} : vector<16x32xbf16>, vector<32x8xbf16>, vector<16x8xf32> -> vector<16x8xf32>
    %c2_25 = arith.constant 2 : index
    %c0_26 = arith.constant 0 : index
    %c0_27 = arith.constant 0 : index
    %41 = vector.load %arg6[%c2_25, %c0_26, %c0_27] : memref<4x1x8xf32, #tpu.memory_space<vmem>>, vector<1x1x8xf32>
    %42 = vector.shape_cast %41 : vector<1x1x8xf32> to vector<1x8xf32>
    %43 = vector.broadcast %42 : vector<1x8xf32> to vector<16x8xf32>
    %44 = arith.addf %40, %43 : vector<16x8xf32>
    %c3 = arith.constant 3 : index
    %c0_28 = arith.constant 0 : index
    %c0_29 = arith.constant 0 : index
    %45 = vector.load %arg5[%c3, %c0_28, %c0_29] : memref<4x32x8xbf16, #tpu.memory_space<vmem>>, vector<1x32x8xbf16>
    %46 = vector.shape_cast %45 : vector<1x32x8xbf16> to vector<32x8xbf16>
    %cst_30 = arith.constant dense<0.000000e+00> : vector<16x8xf32>
    %47 = tpu.matmul %23, %46, %cst_30 {dimension_numbers = #tpu.dot_dimension_numbers<[1], [0], [0], [1], [0, 0, 1, 1], [], []>} : vector<16x32xbf16>, vector<32x8xbf16>, vector<16x8xf32> -> vector<16x8xf32>
    %c3_31 = arith.constant 3 : index
    %c0_32 = arith.constant 0 : index
    %c0_33 = arith.constant 0 : index
    %48 = vector.load %arg6[%c3_31, %c0_32, %c0_33] : memref<4x1x8xf32, #tpu.memory_space<vmem>>, vector<1x1x8xf32>
    %49 = vector.shape_cast %48 : vector<1x1x8xf32> to vector<1x8xf32>
    %50 = vector.broadcast %49 : vector<1x8xf32> to vector<16x8xf32>
    %51 = arith.addf %47, %50 : vector<16x8xf32>
    %c0_34 = arith.constant 0 : index
    %c0_35 = arith.constant 0 : index
    %52 = vector.load %arg7[%c0_34, %c0_35] : memref<32x1xf32, #tpu.memory_space<vmem>>, vector<32x1xf32>
    %c0_36 = arith.constant 0 : index
    %c0_37 = arith.constant 0 : index
    %53 = vector.load %arg8[%c0_36, %c0_37] : memref<32x1xf32, #tpu.memory_space<vmem>>, vector<32x1xf32>
    %c0_38 = arith.constant 0 : index
    %c0_39 = arith.constant 0 : index
    %c0_40 = arith.constant 0 : index
    %54 = vector.load %arg2[%c0_38, %c0_39, %c0_40] : memref<2x32x256xbf16, #tpu.memory_space<vmem>>, vector<1x32x256xbf16>
    %55 = vector.shape_cast %54 : vector<1x32x256xbf16> to vector<32x256xbf16>
    %56 = arith.extf %55 : vector<32x256xbf16> to vector<32x256xf32>
    %57 = vector.shape_cast %56 : vector<32x256xf32> to vector<1x32x256xf32>
    %cst_41 = arith.constant dense<0.000000e+00> : vector<1xf32>
    %58 = vector.multi_reduction <add>, %57, %cst_41 [1, 2] : vector<1x32x256xf32> to vector<1xf32>
    %59 = vector.shape_cast %58 : vector<1xf32> to vector<1x1x1xf32>
    %60 = vector.extract %59[0, 0, 0] : f32 from vector<1x1x1xf32>
    %cst_42 = arith.constant 8.192000e+03 : f32
    %61 = arith.divf %60, %cst_42 : f32
    %62 = vector.broadcast %61 : f32 to vector<32x256xf32>
    %63 = arith.subf %56, %62 : vector<32x256xf32>
    %64 = arith.mulf %63, %63 : vector<32x256xf32>
    %65 = vector.shape_cast %64 : vector<32x256xf32> to vector<1x32x256xf32>
    %cst_43 = arith.constant dense<0.000000e+00> : vector<1xf32>
    %66 = vector.multi_reduction <add>, %65, %cst_43 [1, 2] : vector<1x32x256xf32> to vector<1xf32>
    %67 = vector.shape_cast %66 : vector<1xf32> to vector<1x1x1xf32>
    %68 = vector.extract %67[0, 0, 0] : f32 from vector<1x1x1xf32>
    %cst_44 = arith.constant 8.192000e+03 : f32
    %69 = arith.divf %68, %cst_44 : f32
    %cst_45 = arith.constant 9.99999974E-6 : f32
    %70 = arith.addf %69, %cst_45 : f32
    %71 = math.rsqrt %70 : f32
    %72 = vector.broadcast %71 : f32 to vector<32x256xf32>
    %73 = arith.mulf %63, %72 : vector<32x256xf32>
    %74 = vector.broadcast %52 : vector<32x1xf32> to vector<32x256xf32>
    %75 = arith.mulf %73, %74 : vector<32x256xf32>
    %76 = vector.broadcast %53 : vector<32x1xf32> to vector<32x256xf32>
    %77 = arith.addf %75, %76 : vector<32x256xf32>
    %78 = arith.truncf %77 : vector<32x256xf32> to vector<32x256xbf16>
    %c1_46 = arith.constant 1 : index
    %c0_47 = arith.constant 0 : index
    %c0_48 = arith.constant 0 : index
    %79 = vector.load %arg2[%c1_46, %c0_47, %c0_48] : memref<2x32x256xbf16, #tpu.memory_space<vmem>>, vector<1x32x256xbf16>
    %80 = vector.shape_cast %79 : vector<1x32x256xbf16> to vector<32x256xbf16>
    %81 = arith.extf %80 : vector<32x256xbf16> to vector<32x256xf32>
    %82 = vector.shape_cast %81 : vector<32x256xf32> to vector<1x32x256xf32>
    %cst_49 = arith.constant dense<0.000000e+00> : vector<1xf32>
    %83 = vector.multi_reduction <add>, %82, %cst_49 [1, 2] : vector<1x32x256xf32> to vector<1xf32>
    %84 = vector.shape_cast %83 : vector<1xf32> to vector<1x1x1xf32>
    %85 = vector.extract %84[0, 0, 0] : f32 from vector<1x1x1xf32>
    %cst_50 = arith.constant 8.192000e+03 : f32
    %86 = arith.divf %85, %cst_50 : f32
    %87 = vector.broadcast %86 : f32 to vector<32x256xf32>
    %88 = arith.subf %81, %87 : vector<32x256xf32>
    %89 = arith.mulf %88, %88 : vector<32x256xf32>
    %90 = vector.shape_cast %89 : vector<32x256xf32> to vector<1x32x256xf32>
    %cst_51 = arith.constant dense<0.000000e+00> : vector<1xf32>
    %91 = vector.multi_reduction <add>, %90, %cst_51 [1, 2] : vector<1x32x256xf32> to vector<1xf32>
    %92 = vector.shape_cast %91 : vector<1xf32> to vector<1x1x1xf32>
    %93 = vector.extract %92[0, 0, 0] : f32 from vector<1x1x1xf32>
    %cst_52 = arith.constant 8.192000e+03 : f32
    %94 = arith.divf %93, %cst_52 : f32
    %cst_53 = arith.constant 9.99999974E-6 : f32
    %95 = arith.addf %94, %cst_53 : f32
    %96 = math.rsqrt %95 : f32
    %97 = vector.broadcast %96 : f32 to vector<32x256xf32>
    %98 = arith.mulf %88, %97 : vector<32x256xf32>
    %99 = vector.broadcast %52 : vector<32x1xf32> to vector<32x256xf32>
    %100 = arith.mulf %98, %99 : vector<32x256xf32>
    %101 = vector.broadcast %53 : vector<32x1xf32> to vector<32x256xf32>
    %102 = arith.addf %100, %101 : vector<32x256xf32>
    %103 = arith.truncf %102 : vector<32x256xf32> to vector<32x256xbf16>
    %104 = tpu.concatenate %78, %103 in 1 : vector<32x256xbf16>, vector<32x256xbf16> -> vector<32x512xbf16>
    %c0_54 = arith.constant 0 : index
    %c0_55 = arith.constant 0 : index
    %105 = vector.load %arg9[%c0_54, %c0_55] : memref<64x32xbf16, #tpu.memory_space<vmem>>, vector<64x32xbf16>
    %cst_56 = arith.constant dense<0.000000e+00> : vector<64x512xf32>
    %106 = tpu.matmul %105, %104, %cst_56 {dimension_numbers = #tpu.dot_dimension_numbers<[1], [0], [0], [1], [0, 0, 1, 1], [], []>} : vector<64x32xbf16>, vector<32x512xbf16>, vector<64x512xf32> -> vector<64x512xf32>
    %c0_57 = arith.constant 0 : index
    %c0_58 = arith.constant 0 : index
    %107 = vector.load %arg10[%c0_57, %c0_58] : memref<64x1xf32, #tpu.memory_space<vmem>>, vector<64x1xf32>
    %108 = vector.broadcast %107 : vector<64x1xf32> to vector<64x512xf32>
    %109 = arith.addf %106, %108 : vector<64x512xf32>
    %110 = vector.extract_strided_slice %30 {offsets = [0, 0], sizes = [8, 8], strides = [1, 1]} : vector<16x8xf32> to vector<8x8xf32>
    %111 = arith.truncf %110 : vector<8x8xf32> to vector<8x8xbf16>
    %112 = vector.extract_strided_slice %109 {offsets = [0, 0], sizes = [8, 256], strides = [1, 1]} : vector<64x512xf32> to vector<8x256xf32>
    %113 = arith.truncf %112 : vector<8x256xf32> to vector<8x256xbf16>
    %cst_59 = arith.constant dense<0.000000e+00> : vector<8x256xf32>
    %114 = tpu.matmul %111, %113, %cst_59 {dimension_numbers = #tpu.dot_dimension_numbers<[1], [0], [0], [1], [0, 0, 1, 1], [], []>} : vector<8x8xbf16>, vector<8x256xbf16>, vector<8x256xf32> -> vector<8x256xf32>
    %115 = vector.extract_strided_slice %37 {offsets = [0, 0], sizes = [8, 8], strides = [1, 1]} : vector<16x8xf32> to vector<8x8xf32>
    %116 = arith.truncf %115 : vector<8x8xf32> to vector<8x8xbf16>
    %117 = vector.extract_strided_slice %109 {offsets = [8, 0], sizes = [8, 256], strides = [1, 1]} : vector<64x512xf32> to vector<8x256xf32>
    %118 = arith.truncf %117 : vector<8x256xf32> to vector<8x256xbf16>
    %cst_60 = arith.constant dense<0.000000e+00> : vector<8x256xf32>
    %119 = tpu.matmul %116, %118, %cst_60 {dimension_numbers = #tpu.dot_dimension_numbers<[1], [0], [0], [1], [0, 0, 1, 1], [], []>} : vector<8x8xbf16>, vector<8x256xbf16>, vector<8x256xf32> -> vector<8x256xf32>
    %120 = vector.extract_strided_slice %44 {offsets = [0, 0], sizes = [8, 8], strides = [1, 1]} : vector<16x8xf32> to vector<8x8xf32>
    %121 = arith.truncf %120 : vector<8x8xf32> to vector<8x8xbf16>
    %122 = vector.extract_strided_slice %109 {offsets = [16, 0], sizes = [8, 256], strides = [1, 1]} : vector<64x512xf32> to vector<8x256xf32>
    %123 = arith.truncf %122 : vector<8x256xf32> to vector<8x256xbf16>
    %cst_61 = arith.constant dense<0.000000e+00> : vector<8x256xf32>
    %124 = tpu.matmul %121, %123, %cst_61 {dimension_numbers = #tpu.dot_dimension_numbers<[1], [0], [0], [1], [0, 0, 1, 1], [], []>} : vector<8x8xbf16>, vector<8x256xbf16>, vector<8x256xf32> -> vector<8x256xf32>
    %125 = vector.extract_strided_slice %51 {offsets = [0, 0], sizes = [8, 8], strides = [1, 1]} : vector<16x8xf32> to vector<8x8xf32>
    %126 = arith.truncf %125 : vector<8x8xf32> to vector<8x8xbf16>
    %127 = vector.extract_strided_slice %109 {offsets = [24, 0], sizes = [8, 256], strides = [1, 1]} : vector<64x512xf32> to vector<8x256xf32>
    %128 = arith.truncf %127 : vector<8x256xf32> to vector<8x256xbf16>
    %cst_62 = arith.constant dense<0.000000e+00> : vector<8x256xf32>
    %129 = tpu.matmul %126, %128, %cst_62 {dimension_numbers = #tpu.dot_dimension_numbers<[1], [0], [0], [1], [0, 0, 1, 1], [], []>} : vector<8x8xbf16>, vector<8x256xbf16>, vector<8x256xf32> -> vector<8x256xf32>
    %130 = vector.extract_strided_slice %30 {offsets = [8, 0], sizes = [8, 8], strides = [1, 1]} : vector<16x8xf32> to vector<8x8xf32>
    %131 = arith.truncf %130 : vector<8x8xf32> to vector<8x8xbf16>
    %132 = vector.extract_strided_slice %109 {offsets = [0, 256], sizes = [8, 256], strides = [1, 1]} : vector<64x512xf32> to vector<8x256xf32>
    %133 = arith.truncf %132 : vector<8x256xf32> to vector<8x256xbf16>
    %cst_63 = arith.constant dense<0.000000e+00> : vector<8x256xf32>
    %134 = tpu.matmul %131, %133, %cst_63 {dimension_numbers = #tpu.dot_dimension_numbers<[1], [0], [0], [1], [0, 0, 1, 1], [], []>} : vector<8x8xbf16>, vector<8x256xbf16>, vector<8x256xf32> -> vector<8x256xf32>
    %135 = vector.extract_strided_slice %37 {offsets = [8, 0], sizes = [8, 8], strides = [1, 1]} : vector<16x8xf32> to vector<8x8xf32>
    %136 = arith.truncf %135 : vector<8x8xf32> to vector<8x8xbf16>
    %137 = vector.extract_strided_slice %109 {offsets = [8, 256], sizes = [8, 256], strides = [1, 1]} : vector<64x512xf32> to vector<8x256xf32>
    %138 = arith.truncf %137 : vector<8x256xf32> to vector<8x256xbf16>
    %cst_64 = arith.constant dense<0.000000e+00> : vector<8x256xf32>
    %139 = tpu.matmul %136, %138, %cst_64 {dimension_numbers = #tpu.dot_dimension_numbers<[1], [0], [0], [1], [0, 0, 1, 1], [], []>} : vector<8x8xbf16>, vector<8x256xbf16>, vector<8x256xf32> -> vector<8x256xf32>
    %140 = vector.extract_strided_slice %44 {offsets = [8, 0], sizes = [8, 8], strides = [1, 1]} : vector<16x8xf32> to vector<8x8xf32>
    %141 = arith.truncf %140 : vector<8x8xf32> to vector<8x8xbf16>
    %142 = vector.extract_strided_slice %109 {offsets = [16, 256], sizes = [8, 256], strides = [1, 1]} : vector<64x512xf32> to vector<8x256xf32>
    %143 = arith.truncf %142 : vector<8x256xf32> to vector<8x256xbf16>
    %cst_65 = arith.constant dense<0.000000e+00> : vector<8x256xf32>
    %144 = tpu.matmul %141, %143, %cst_65 {dimension_numbers = #tpu.dot_dimension_numbers<[1], [0], [0], [1], [0, 0, 1, 1], [], []>} : vector<8x8xbf16>, vector<8x256xbf16>, vector<8x256xf32> -> vector<8x256xf32>
    %145 = vector.extract_strided_slice %51 {offsets = [8, 0], sizes = [8, 8], strides = [1, 1]} : vector<16x8xf32> to vector<8x8xf32>
    %146 = arith.truncf %145 : vector<8x8xf32> to vector<8x8xbf16>
    %147 = vector.extract_strided_slice %109 {offsets = [24, 256], sizes = [8, 256], strides = [1, 1]} : vector<64x512xf32> to vector<8x256xf32>
    %148 = arith.truncf %147 : vector<8x256xf32> to vector<8x256xbf16>
    %cst_66 = arith.constant dense<0.000000e+00> : vector<8x256xf32>
    %149 = tpu.matmul %146, %148, %cst_66 {dimension_numbers = #tpu.dot_dimension_numbers<[1], [0], [0], [1], [0, 0, 1, 1], [], []>} : vector<8x8xbf16>, vector<8x256xbf16>, vector<8x256xf32> -> vector<8x256xf32>
    %150 = tpu.concatenate %114, %119, %124, %129, %134, %139, %144, %149 in 0 : vector<8x256xf32>, vector<8x256xf32>, vector<8x256xf32>, vector<8x256xf32>, vector<8x256xf32>, vector<8x256xf32>, vector<8x256xf32>, vector<8x256xf32> -> vector<64x256xf32>
    %cst_67 = arith.constant dense<0xFF800000> : vector<64xf32>
    %151 = vector.multi_reduction <maximumf>, %150, %cst_67 [1] : vector<64x256xf32> to vector<64xf32>
    %152 = vector.shape_cast %151 : vector<64xf32> to vector<64x1xf32>
    %153 = vector.broadcast %152 : vector<64x1xf32> to vector<64x256xf32>
    %154 = arith.subf %150, %153 : vector<64x256xf32>
    %155 = math.exp %154 : vector<64x256xf32>
    %cst_68 = arith.constant dense<0.000000e+00> : vector<64xf32>
    %156 = vector.multi_reduction <add>, %155, %cst_68 [1] : vector<64x256xf32> to vector<64xf32>
    %157 = vector.shape_cast %156 : vector<64xf32> to vector<64x1xf32>
    %158 = tpu.reciprocal %157 {approx = true} : vector<64x1xf32> -> vector<64x1xf32>
    %159 = vector.broadcast %158 : vector<64x1xf32> to vector<64x256xf32>
    %160 = arith.mulf %155, %159 : vector<64x256xf32>
    %161 = arith.truncf %160 : vector<64x256xf32> to vector<64x256xbf16>
    %c0_69 = arith.constant 0 : index
    %c0_70 = arith.constant 0 : index
    %162 = vector.load %arg12[%c0_69, %c0_70] : memref<1x32xf32, #tpu.memory_space<vmem>>, vector<1x32xf32>
    %163 = vector.broadcast %162 : vector<1x32xf32> to vector<16x32xf32>
    %164 = arith.addf %0, %163 : vector<16x32xf32>
    %165 = vector.extract_strided_slice %161 {offsets = [0, 0], sizes = [8, 256], strides = [1, 1]} : vector<64x256xbf16> to vector<8x256xbf16>
    %166 = vector.extract_strided_slice %109 {offsets = [32, 0], sizes = [8, 256], strides = [1, 1]} : vector<64x512xf32> to vector<8x256xf32>
    %167 = arith.truncf %166 : vector<8x256xf32> to vector<8x256xbf16>
    %cst_71 = arith.constant dense<0.000000e+00> : vector<8x8xf32>
    %168 = tpu.matmul %165, %167, %cst_71 {dimension_numbers = #tpu.dot_dimension_numbers<[1], [1], [0], [0], [0, 0, 1, 0], [], []>} : vector<8x256xbf16>, vector<8x256xbf16>, vector<8x8xf32> -> vector<8x8xf32>
    %169 = vector.extract_strided_slice %161 {offsets = [32, 0], sizes = [8, 256], strides = [1, 1]} : vector<64x256xbf16> to vector<8x256xbf16>
    %170 = vector.extract_strided_slice %109 {offsets = [32, 256], sizes = [8, 256], strides = [1, 1]} : vector<64x512xf32> to vector<8x256xf32>
    %171 = arith.truncf %170 : vector<8x256xf32> to vector<8x256xbf16>
    %cst_72 = arith.constant dense<0.000000e+00> : vector<8x8xf32>
    %172 = tpu.matmul %169, %171, %cst_72 {dimension_numbers = #tpu.dot_dimension_numbers<[1], [1], [0], [0], [0, 0, 1, 0], [], []>} : vector<8x256xbf16>, vector<8x256xbf16>, vector<8x8xf32> -> vector<8x8xf32>
    %173 = tpu.concatenate %168, %172 in 0 : vector<8x8xf32>, vector<8x8xf32> -> vector<16x8xf32>
    %174 = arith.truncf %173 : vector<16x8xf32> to vector<16x8xbf16>
    %c0_73 = arith.constant 0 : index
    %c0_74 = arith.constant 0 : index
    %c0_75 = arith.constant 0 : index
    %175 = vector.load %arg11[%c0_73, %c0_74, %c0_75] : memref<4x8x32xbf16, #tpu.memory_space<vmem>>, vector<1x8x32xbf16>
    %176 = vector.shape_cast %175 : vector<1x8x32xbf16> to vector<8x32xbf16>
    %cst_76 = arith.constant dense<0.000000e+00> : vector<16x32xf32>
    %177 = tpu.matmul %174, %176, %cst_76 {dimension_numbers = #tpu.dot_dimension_numbers<[1], [0], [0], [1], [0, 0, 1, 1], [], []>} : vector<16x8xbf16>, vector<8x32xbf16>, vector<16x32xf32> -> vector<16x32xf32>
    %178 = arith.addf %164, %177 : vector<16x32xf32>
    %179 = vector.extract_strided_slice %161 {offsets = [8, 0], sizes = [8, 256], strides = [1, 1]} : vector<64x256xbf16> to vector<8x256xbf16>
    %180 = vector.extract_strided_slice %109 {offsets = [40, 0], sizes = [8, 256], strides = [1, 1]} : vector<64x512xf32> to vector<8x256xf32>
    %181 = arith.truncf %180 : vector<8x256xf32> to vector<8x256xbf16>
    %cst_77 = arith.constant dense<0.000000e+00> : vector<8x8xf32>
    %182 = tpu.matmul %179, %181, %cst_77 {dimension_numbers = #tpu.dot_dimension_numbers<[1], [1], [0], [0], [0, 0, 1, 0], [], []>} : vector<8x256xbf16>, vector<8x256xbf16>, vector<8x8xf32> -> vector<8x8xf32>
    %183 = vector.extract_strided_slice %161 {offsets = [40, 0], sizes = [8, 256], strides = [1, 1]} : vector<64x256xbf16> to vector<8x256xbf16>
    %184 = vector.extract_strided_slice %109 {offsets = [40, 256], sizes = [8, 256], strides = [1, 1]} : vector<64x512xf32> to vector<8x256xf32>
    %185 = arith.truncf %184 : vector<8x256xf32> to vector<8x256xbf16>
    %cst_78 = arith.constant dense<0.000000e+00> : vector<8x8xf32>
    %186 = tpu.matmul %183, %185, %cst_78 {dimension_numbers = #tpu.dot_dimension_numbers<[1], [1], [0], [0], [0, 0, 1, 0], [], []>} : vector<8x256xbf16>, vector<8x256xbf16>, vector<8x8xf32> -> vector<8x8xf32>
    %187 = tpu.concatenate %182, %186 in 0 : vector<8x8xf32>, vector<8x8xf32> -> vector<16x8xf32>
    %188 = arith.truncf %187 : vector<16x8xf32> to vector<16x8xbf16>
    %c1_79 = arith.constant 1 : index
    %c0_80 = arith.constant 0 : index
    %c0_81 = arith.constant 0 : index
    %189 = vector.load %arg11[%c1_79, %c0_80, %c0_81] : memref<4x8x32xbf16, #tpu.memory_space<vmem>>, vector<1x8x32xbf16>
    %190 = vector.shape_cast %189 : vector<1x8x32xbf16> to vector<8x32xbf16>
    %cst_82 = arith.constant dense<0.000000e+00> : vector<16x32xf32>
    %191 = tpu.matmul %188, %190, %cst_82 {dimension_numbers = #tpu.dot_dimension_numbers<[1], [0], [0], [1], [0, 0, 1, 1], [], []>} : vector<16x8xbf16>, vector<8x32xbf16>, vector<16x32xf32> -> vector<16x32xf32>
    %192 = arith.addf %178, %191 : vector<16x32xf32>
    %193 = vector.extract_strided_slice %161 {offsets = [16, 0], sizes = [8, 256], strides = [1, 1]} : vector<64x256xbf16> to vector<8x256xbf16>
    %194 = vector.extract_strided_slice %109 {offsets = [48, 0], sizes = [8, 256], strides = [1, 1]} : vector<64x512xf32> to vector<8x256xf32>
    %195 = arith.truncf %194 : vector<8x256xf32> to vector<8x256xbf16>
    %cst_83 = arith.constant dense<0.000000e+00> : vector<8x8xf32>
    %196 = tpu.matmul %193, %195, %cst_83 {dimension_numbers = #tpu.dot_dimension_numbers<[1], [1], [0], [0], [0, 0, 1, 0], [], []>} : vector<8x256xbf16>, vector<8x256xbf16>, vector<8x8xf32> -> vector<8x8xf32>
    %197 = vector.extract_strided_slice %161 {offsets = [48, 0], sizes = [8, 256], strides = [1, 1]} : vector<64x256xbf16> to vector<8x256xbf16>
    %198 = vector.extract_strided_slice %109 {offsets = [48, 256], sizes = [8, 256], strides = [1, 1]} : vector<64x512xf32> to vector<8x256xf32>
    %199 = arith.truncf %198 : vector<8x256xf32> to vector<8x256xbf16>
    %cst_84 = arith.constant dense<0.000000e+00> : vector<8x8xf32>
    %200 = tpu.matmul %197, %199, %cst_84 {dimension_numbers = #tpu.dot_dimension_numbers<[1], [1], [0], [0], [0, 0, 1, 0], [], []>} : vector<8x256xbf16>, vector<8x256xbf16>, vector<8x8xf32> -> vector<8x8xf32>
    %201 = tpu.concatenate %196, %200 in 0 : vector<8x8xf32>, vector<8x8xf32> -> vector<16x8xf32>
    %202 = arith.truncf %201 : vector<16x8xf32> to vector<16x8xbf16>
    %c2_85 = arith.constant 2 : index
    %c0_86 = arith.constant 0 : index
    %c0_87 = arith.constant 0 : index
    %203 = vector.load %arg11[%c2_85, %c0_86, %c0_87] : memref<4x8x32xbf16, #tpu.memory_space<vmem>>, vector<1x8x32xbf16>
    %204 = vector.shape_cast %203 : vector<1x8x32xbf16> to vector<8x32xbf16>
    %cst_88 = arith.constant dense<0.000000e+00> : vector<16x32xf32>
    %205 = tpu.matmul %202, %204, %cst_88 {dimension_numbers = #tpu.dot_dimension_numbers<[1], [0], [0], [1], [0, 0, 1, 1], [], []>} : vector<16x8xbf16>, vector<8x32xbf16>, vector<16x32xf32> -> vector<16x32xf32>
    %206 = arith.addf %192, %205 : vector<16x32xf32>
    %207 = vector.extract_strided_slice %161 {offsets = [24, 0], sizes = [8, 256], strides = [1, 1]} : vector<64x256xbf16> to vector<8x256xbf16>
    %208 = vector.extract_strided_slice %109 {offsets = [56, 0], sizes = [8, 256], strides = [1, 1]} : vector<64x512xf32> to vector<8x256xf32>
    %209 = arith.truncf %208 : vector<8x256xf32> to vector<8x256xbf16>
    %cst_89 = arith.constant dense<0.000000e+00> : vector<8x8xf32>
    %210 = tpu.matmul %207, %209, %cst_89 {dimension_numbers = #tpu.dot_dimension_numbers<[1], [1], [0], [0], [0, 0, 1, 0], [], []>} : vector<8x256xbf16>, vector<8x256xbf16>, vector<8x8xf32> -> vector<8x8xf32>
    %211 = vector.extract_strided_slice %161 {offsets = [56, 0], sizes = [8, 256], strides = [1, 1]} : vector<64x256xbf16> to vector<8x256xbf16>
    %212 = vector.extract_strided_slice %109 {offsets = [56, 256], sizes = [8, 256], strides = [1, 1]} : vector<64x512xf32> to vector<8x256xf32>
    %213 = arith.truncf %212 : vector<8x256xf32> to vector<8x256xbf16>
    %cst_90 = arith.constant dense<0.000000e+00> : vector<8x8xf32>
    %214 = tpu.matmul %211, %213, %cst_90 {dimension_numbers = #tpu.dot_dimension_numbers<[1], [1], [0], [0], [0, 0, 1, 0], [], []>} : vector<8x256xbf16>, vector<8x256xbf16>, vector<8x8xf32> -> vector<8x8xf32>
    %215 = tpu.concatenate %210, %214 in 0 : vector<8x8xf32>, vector<8x8xf32> -> vector<16x8xf32>
    %216 = arith.truncf %215 : vector<16x8xf32> to vector<16x8xbf16>
    %c3_91 = arith.constant 3 : index
    %c0_92 = arith.constant 0 : index
    %c0_93 = arith.constant 0 : index
    %217 = vector.load %arg11[%c3_91, %c0_92, %c0_93] : memref<4x8x32xbf16, #tpu.memory_space<vmem>>, vector<1x8x32xbf16>
    %218 = vector.shape_cast %217 : vector<1x8x32xbf16> to vector<8x32xbf16>
    %cst_94 = arith.constant dense<0.000000e+00> : vector<16x32xf32>
    %219 = tpu.matmul %216, %218, %cst_94 {dimension_numbers = #tpu.dot_dimension_numbers<[1], [0], [0], [1], [0, 0, 1, 1], [], []>} : vector<16x8xbf16>, vector<8x32xbf16>, vector<16x32xf32> -> vector<16x32xf32>
    %220 = arith.addf %206, %219 : vector<16x32xf32>
    %c0_95 = arith.constant 0 : index
    %c0_96 = arith.constant 0 : index
    %221 = vector.load %arg18[%c0_95, %c0_96] : memref<16x32xf32, #tpu.memory_space<vmem>>, vector<16x32xf32>
    tpu.vector_store %arg18[%c0_95, %c0_96], %220 {strides = array<i32>} : memref<16x32xf32, #tpu.memory_space<vmem>>, vector<16x32xf32>,
    %c0_97 = arith.constant 0 : index
    %c0_98 = arith.constant 0 : index
    %222 = vector.load %arg17[%c0_97, %c0_98] : memref<9x256xf32, #tpu.memory_space<vmem>>, vector<9x256xf32>
    %223 = vector.extract_strided_slice %220 {offsets = [0, 0], sizes = [8, 32], strides = [1, 1]} : vector<16x32xf32> to vector<8x32xf32>
    %224 = arith.extf %55 : vector<32x256xbf16> to vector<32x256xf32>
    %cst_99 = arith.constant dense<0.000000e+00> : vector<8x256xf32>
    %225 = tpu.matmul %223, %224, %cst_99 {dimension_numbers = #tpu.dot_dimension_numbers<[1], [0], [0], [1], [0, 0, 1, 1], [], []>} : vector<8x32xf32>, vector<32x256xf32>, vector<8x256xf32> -> vector<8x256xf32>
    %c17_i32 = arith.constant 17 : i32
    %226 = tpu.dynamic_rotate %225 by %c17_i32 dim 1 : vector<8x256xf32>, i32 -> vector<8x256xf32>
    %227 = vector.extract_strided_slice %222 {offsets = [0, 0], sizes = [1, 256], strides = [1, 1]} : vector<9x256xf32> to vector<1x256xf32>
    %228 = vector.broadcast %227 : vector<1x256xf32> to vector<8x256xf32>
    %229 = arith.mulf %226, %228 : vector<8x256xf32>
    %230 = arith.truncf %229 : vector<8x256xf32> to vector<8x256xbf16>
    %c0_100 = arith.constant 0 : index
    %c0_101 = arith.constant 0 : index
    %231 = vector.load %arg20[%c0_100, %c0_101] : memref<72x512xbf16, #tpu.memory_space<vmem>>, vector<8x256xbf16>
    tpu.vector_store %arg20[%c0_100, %c0_101], %230 {strides = array<i32>} : memref<72x512xbf16, #tpu.memory_space<vmem>>, vector<8x256xbf16>,
    %c16_i32 = arith.constant 16 : i32
    %232 = tpu.dynamic_rotate %225 by %c16_i32 dim 1 : vector<8x256xf32>, i32 -> vector<8x256xf32>
    %233 = vector.extract_strided_slice %222 {offsets = [1, 0], sizes = [1, 256], strides = [1, 1]} : vector<9x256xf32> to vector<1x256xf32>
    %234 = vector.broadcast %233 : vector<1x256xf32> to vector<8x256xf32>
    %235 = arith.mulf %232, %234 : vector<8x256xf32>
    %236 = arith.truncf %235 : vector<8x256xf32> to vector<8x256xbf16>
    %c8 = arith.constant 8 : index
    %c0_102 = arith.constant 0 : index
    %237 = vector.load %arg20[%c8, %c0_102] : memref<72x512xbf16, #tpu.memory_space<vmem>>, vector<8x256xbf16>
    tpu.vector_store %arg20[%c8, %c0_102], %236 {strides = array<i32>} : memref<72x512xbf16, #tpu.memory_space<vmem>>, vector<8x256xbf16>,
    %c15_i32 = arith.constant 15 : i32
    %238 = tpu.dynamic_rotate %225 by %c15_i32 dim 1 : vector<8x256xf32>, i32 -> vector<8x256xf32>
    %239 = vector.extract_strided_slice %222 {offsets = [2, 0], sizes = [1, 256], strides = [1, 1]} : vector<9x256xf32> to vector<1x256xf32>
    %240 = vector.broadcast %239 : vector<1x256xf32> to vector<8x256xf32>
    %241 = arith.mulf %238, %240 : vector<8x256xf32>
    %242 = arith.truncf %241 : vector<8x256xf32> to vector<8x256xbf16>
    %c16 = arith.constant 16 : index
    %c0_103 = arith.constant 0 : index
    %243 = vector.load %arg20[%c16, %c0_103] : memref<72x512xbf16, #tpu.memory_space<vmem>>, vector<8x256xbf16>
    tpu.vector_store %arg20[%c16, %c0_103], %242 {strides = array<i32>} : memref<72x512xbf16, #tpu.memory_space<vmem>>, vector<8x256xbf16>,
    %c1_i32 = arith.constant 1 : i32
    %244 = tpu.dynamic_rotate %225 by %c1_i32 dim 1 : vector<8x256xf32>, i32 -> vector<8x256xf32>
    %245 = vector.extract_strided_slice %222 {offsets = [3, 0], sizes = [1, 256], strides = [1, 1]} : vector<9x256xf32> to vector<1x256xf32>
    %246 = vector.broadcast %245 : vector<1x256xf32> to vector<8x256xf32>
    %247 = arith.mulf %244, %246 : vector<8x256xf32>
    %248 = arith.truncf %247 : vector<8x256xf32> to vector<8x256xbf16>
    %c24 = arith.constant 24 : index
    %c0_104 = arith.constant 0 : index
    %249 = vector.load %arg20[%c24, %c0_104] : memref<72x512xbf16, #tpu.memory_space<vmem>>, vector<8x256xbf16>
    tpu.vector_store %arg20[%c24, %c0_104], %248 {strides = array<i32>} : memref<72x512xbf16, #tpu.memory_space<vmem>>, vector<8x256xbf16>,
    %250 = vector.extract_strided_slice %222 {offsets = [4, 0], sizes = [1, 256], strides = [1, 1]} : vector<9x256xf32> to vector<1x256xf32>
    %251 = vector.broadcast %250 : vector<1x256xf32> to vector<8x256xf32>
    %252 = arith.mulf %225, %251 : vector<8x256xf32>
    %253 = arith.truncf %252 : vector<8x256xf32> to vector<8x256xbf16>
    %c32 = arith.constant 32 : index
    %c0_105 = arith.constant 0 : index
    %254 = vector.load %arg20[%c32, %c0_105] : memref<72x512xbf16, #tpu.memory_space<vmem>>, vector<8x256xbf16>
    tpu.vector_store %arg20[%c32, %c0_105], %253 {strides = array<i32>} : memref<72x512xbf16, #tpu.memory_space<vmem>>, vector<8x256xbf16>,
    %c255_i32 = arith.constant 255 : i32
    %255 = tpu.dynamic_rotate %225 by %c255_i32 dim 1 : vector<8x256xf32>, i32 -> vector<8x256xf32>
    %256 = vector.extract_strided_slice %222 {offsets = [5, 0], sizes = [1, 256], strides = [1, 1]} : vector<9x256xf32> to vector<1x256xf32>
    %257 = vector.broadcast %256 : vector<1x256xf32> to vector<8x256xf32>
    %258 = arith.mulf %255, %257 : vector<8x256xf32>
    %259 = arith.truncf %258 : vector<8x256xf32> to vector<8x256xbf16>
    %c40 = arith.constant 40 : index
    %c0_106 = arith.constant 0 : index
    %260 = vector.load %arg20[%c40, %c0_106] : memref<72x512xbf16, #tpu.memory_space<vmem>>, vector<8x256xbf16>
    tpu.vector_store %arg20[%c40, %c0_106], %259 {strides = array<i32>} : memref<72x512xbf16, #tpu.memory_space<vmem>>, vector<8x256xbf16>,
    %c241_i32 = arith.constant 241 : i32
    %261 = tpu.dynamic_rotate %225 by %c241_i32 dim 1 : vector<8x256xf32>, i32 -> vector<8x256xf32>
    %262 = vector.extract_strided_slice %222 {offsets = [6, 0], sizes = [1, 256], strides = [1, 1]} : vector<9x256xf32> to vector<1x256xf32>
    %263 = vector.broadcast %262 : vector<1x256xf32> to vector<8x256xf32>
    %264 = arith.mulf %261, %263 : vector<8x256xf32>
    %265 = arith.truncf %264 : vector<8x256xf32> to vector<8x256xbf16>
    %c48 = arith.constant 48 : index
    %c0_107 = arith.constant 0 : index
    %266 = vector.load %arg20[%c48, %c0_107] : memref<72x512xbf16, #tpu.memory_space<vmem>>, vector<8x256xbf16>
    tpu.vector_store %arg20[%c48, %c0_107], %265 {strides = array<i32>} : memref<72x512xbf16, #tpu.memory_space<vmem>>, vector<8x256xbf16>,
    %c240_i32 = arith.constant 240 : i32
    %267 = tpu.dynamic_rotate %225 by %c240_i32 dim 1 : vector<8x256xf32>, i32 -> vector<8x256xf32>
    %268 = vector.extract_strided_slice %222 {offsets = [7, 0], sizes = [1, 256], strides = [1, 1]} : vector<9x256xf32> to vector<1x256xf32>
    %269 = vector.broadcast %268 : vector<1x256xf32> to vector<8x256xf32>
    %270 = arith.mulf %267, %269 : vector<8x256xf32>
    %271 = arith.truncf %270 : vector<8x256xf32> to vector<8x256xbf16>
    %c56 = arith.constant 56 : index
    %c0_108 = arith.constant 0 : index
    %272 = vector.load %arg20[%c56, %c0_108] : memref<72x512xbf16, #tpu.memory_space<vmem>>, vector<8x256xbf16>
    tpu.vector_store %arg20[%c56, %c0_108], %271 {strides = array<i32>} : memref<72x512xbf16, #tpu.memory_space<vmem>>, vector<8x256xbf16>,
    %c239_i32 = arith.constant 239 : i32
    %273 = tpu.dynamic_rotate %225 by %c239_i32 dim 1 : vector<8x256xf32>, i32 -> vector<8x256xf32>
    %274 = vector.extract_strided_slice %222 {offsets = [8, 0], sizes = [1, 256], strides = [1, 1]} : vector<9x256xf32> to vector<1x256xf32>
    %275 = vector.broadcast %274 : vector<1x256xf32> to vector<8x256xf32>
    %276 = arith.mulf %273, %275 : vector<8x256xf32>
    %277 = arith.truncf %276 : vector<8x256xf32> to vector<8x256xbf16>
    %c64 = arith.constant 64 : index
    %c0_109 = arith.constant 0 : index
    %278 = vector.load %arg20[%c64, %c0_109] : memref<72x512xbf16, #tpu.memory_space<vmem>>, vector<8x256xbf16>
    tpu.vector_store %arg20[%c64, %c0_109], %277 {strides = array<i32>} : memref<72x512xbf16, #tpu.memory_space<vmem>>, vector<8x256xbf16>,
    %279 = vector.extract_strided_slice %220 {offsets = [8, 0], sizes = [8, 32], strides = [1, 1]} : vector<16x32xf32> to vector<8x32xf32>
    %280 = arith.extf %80 : vector<32x256xbf16> to vector<32x256xf32>
    %cst_110 = arith.constant dense<0.000000e+00> : vector<8x256xf32>
    %281 = tpu.matmul %279, %280, %cst_110 {dimension_numbers = #tpu.dot_dimension_numbers<[1], [0], [0], [1], [0, 0, 1, 1], [], []>} : vector<8x32xf32>, vector<32x256xf32>, vector<8x256xf32> -> vector<8x256xf32>
    %c17_i32_111 = arith.constant 17 : i32
    %282 = tpu.dynamic_rotate %281 by %c17_i32_111 dim 1 : vector<8x256xf32>, i32 -> vector<8x256xf32>
    %283 = vector.extract_strided_slice %222 {offsets = [0, 0], sizes = [1, 256], strides = [1, 1]} : vector<9x256xf32> to vector<1x256xf32>
    %284 = vector.broadcast %283 : vector<1x256xf32> to vector<8x256xf32>
    %285 = arith.mulf %282, %284 : vector<8x256xf32>
    %286 = arith.truncf %285 : vector<8x256xf32> to vector<8x256xbf16>
    %c0_112 = arith.constant 0 : index
    %c256 = arith.constant 256 : index
    %287 = vector.load %arg20[%c0_112, %c256] : memref<72x512xbf16, #tpu.memory_space<vmem>>, vector<8x256xbf16>
    tpu.vector_store %arg20[%c0_112, %c256], %286 {strides = array<i32>} : memref<72x512xbf16, #tpu.memory_space<vmem>>, vector<8x256xbf16>,
    %c16_i32_113 = arith.constant 16 : i32
    %288 = tpu.dynamic_rotate %281 by %c16_i32_113 dim 1 : vector<8x256xf32>, i32 -> vector<8x256xf32>
    %289 = vector.extract_strided_slice %222 {offsets = [1, 0], sizes = [1, 256], strides = [1, 1]} : vector<9x256xf32> to vector<1x256xf32>
    %290 = vector.broadcast %289 : vector<1x256xf32> to vector<8x256xf32>
    %291 = arith.mulf %288, %290 : vector<8x256xf32>
    %292 = arith.truncf %291 : vector<8x256xf32> to vector<8x256xbf16>
    %c8_114 = arith.constant 8 : index
    %c256_115 = arith.constant 256 : index
    %293 = vector.load %arg20[%c8_114, %c256_115] : memref<72x512xbf16, #tpu.memory_space<vmem>>, vector<8x256xbf16>
    tpu.vector_store %arg20[%c8_114, %c256_115], %292 {strides = array<i32>} : memref<72x512xbf16, #tpu.memory_space<vmem>>, vector<8x256xbf16>,
    %c15_i32_116 = arith.constant 15 : i32
    %294 = tpu.dynamic_rotate %281 by %c15_i32_116 dim 1 : vector<8x256xf32>, i32 -> vector<8x256xf32>
    %295 = vector.extract_strided_slice %222 {offsets = [2, 0], sizes = [1, 256], strides = [1, 1]} : vector<9x256xf32> to vector<1x256xf32>
    %296 = vector.broadcast %295 : vector<1x256xf32> to vector<8x256xf32>
    %297 = arith.mulf %294, %296 : vector<8x256xf32>
    %298 = arith.truncf %297 : vector<8x256xf32> to vector<8x256xbf16>
    %c16_117 = arith.constant 16 : index
    %c256_118 = arith.constant 256 : index
    %299 = vector.load %arg20[%c16_117, %c256_118] : memref<72x512xbf16, #tpu.memory_space<vmem>>, vector<8x256xbf16>
    tpu.vector_store %arg20[%c16_117, %c256_118], %298 {strides = array<i32>} : memref<72x512xbf16, #tpu.memory_space<vmem>>, vector<8x256xbf16>,
    %c1_i32_119 = arith.constant 1 : i32
    %300 = tpu.dynamic_rotate %281 by %c1_i32_119 dim 1 : vector<8x256xf32>, i32 -> vector<8x256xf32>
    %301 = vector.extract_strided_slice %222 {offsets = [3, 0], sizes = [1, 256], strides = [1, 1]} : vector<9x256xf32> to vector<1x256xf32>
    %302 = vector.broadcast %301 : vector<1x256xf32> to vector<8x256xf32>
    %303 = arith.mulf %300, %302 : vector<8x256xf32>
    %304 = arith.truncf %303 : vector<8x256xf32> to vector<8x256xbf16>
    %c24_120 = arith.constant 24 : index
    %c256_121 = arith.constant 256 : index
    %305 = vector.load %arg20[%c24_120, %c256_121] : memref<72x512xbf16, #tpu.memory_space<vmem>>, vector<8x256xbf16>
    tpu.vector_store %arg20[%c24_120, %c256_121], %304 {strides = array<i32>} : memref<72x512xbf16, #tpu.memory_space<vmem>>, vector<8x256xbf16>,
    %306 = vector.extract_strided_slice %222 {offsets = [4, 0], sizes = [1, 256], strides = [1, 1]} : vector<9x256xf32> to vector<1x256xf32>
    %307 = vector.broadcast %306 : vector<1x256xf32> to vector<8x256xf32>
    %308 = arith.mulf %281, %307 : vector<8x256xf32>
    %309 = arith.truncf %308 : vector<8x256xf32> to vector<8x256xbf16>
    %c32_122 = arith.constant 32 : index
    %c256_123 = arith.constant 256 : index
    %310 = vector.load %arg20[%c32_122, %c256_123] : memref<72x512xbf16, #tpu.memory_space<vmem>>, vector<8x256xbf16>
    tpu.vector_store %arg20[%c32_122, %c256_123], %309 {strides = array<i32>} : memref<72x512xbf16, #tpu.memory_space<vmem>>, vector<8x256xbf16>,
    %c255_i32_124 = arith.constant 255 : i32
    %311 = tpu.dynamic_rotate %281 by %c255_i32_124 dim 1 : vector<8x256xf32>, i32 -> vector<8x256xf32>
    %312 = vector.extract_strided_slice %222 {offsets = [5, 0], sizes = [1, 256], strides = [1, 1]} : vector<9x256xf32> to vector<1x256xf32>
    %313 = vector.broadcast %312 : vector<1x256xf32> to vector<8x256xf32>
    %314 = arith.mulf %311, %313 : vector<8x256xf32>
    %315 = arith.truncf %314 : vector<8x256xf32> to vector<8x256xbf16>
    %c40_125 = arith.constant 40 : index
    %c256_126 = arith.constant 256 : index
    %316 = vector.load %arg20[%c40_125, %c256_126] : memref<72x512xbf16, #tpu.memory_space<vmem>>, vector<8x256xbf16>
    tpu.vector_store %arg20[%c40_125, %c256_126], %315 {strides = array<i32>} : memref<72x512xbf16, #tpu.memory_space<vmem>>, vector<8x256xbf16>,
    %c241_i32_127 = arith.constant 241 : i32
    %317 = tpu.dynamic_rotate %281 by %c241_i32_127 dim 1 : vector<8x256xf32>, i32 -> vector<8x256xf32>
    %318 = vector.extract_strided_slice %222 {offsets = [6, 0], sizes = [1, 256], strides = [1, 1]} : vector<9x256xf32> to vector<1x256xf32>
    %319 = vector.broadcast %318 : vector<1x256xf32> to vector<8x256xf32>
    %320 = arith.mulf %317, %319 : vector<8x256xf32>
    %321 = arith.truncf %320 : vector<8x256xf32> to vector<8x256xbf16>
    %c48_128 = arith.constant 48 : index
    %c256_129 = arith.constant 256 : index
    %322 = vector.load %arg20[%c48_128, %c256_129] : memref<72x512xbf16, #tpu.memory_space<vmem>>, vector<8x256xbf16>
    tpu.vector_store %arg20[%c48_128, %c256_129], %321 {strides = array<i32>} : memref<72x512xbf16, #tpu.memory_space<vmem>>, vector<8x256xbf16>,
    %c240_i32_130 = arith.constant 240 : i32
    %323 = tpu.dynamic_rotate %281 by %c240_i32_130 dim 1 : vector<8x256xf32>, i32 -> vector<8x256xf32>
    %324 = vector.extract_strided_slice %222 {offsets = [7, 0], sizes = [1, 256], strides = [1, 1]} : vector<9x256xf32> to vector<1x256xf32>
    %325 = vector.broadcast %324 : vector<1x256xf32> to vector<8x256xf32>
    %326 = arith.mulf %323, %325 : vector<8x256xf32>
    %327 = arith.truncf %326 : vector<8x256xf32> to vector<8x256xbf16>
    %c56_131 = arith.constant 56 : index
    %c256_132 = arith.constant 256 : index
    %328 = vector.load %arg20[%c56_131, %c256_132] : memref<72x512xbf16, #tpu.memory_space<vmem>>, vector<8x256xbf16>
    tpu.vector_store %arg20[%c56_131, %c256_132], %327 {strides = array<i32>} : memref<72x512xbf16, #tpu.memory_space<vmem>>, vector<8x256xbf16>,
    %c239_i32_133 = arith.constant 239 : i32
    %329 = tpu.dynamic_rotate %281 by %c239_i32_133 dim 1 : vector<8x256xf32>, i32 -> vector<8x256xf32>
    %330 = vector.extract_strided_slice %222 {offsets = [8, 0], sizes = [1, 256], strides = [1, 1]} : vector<9x256xf32> to vector<1x256xf32>
    %331 = vector.broadcast %330 : vector<1x256xf32> to vector<8x256xf32>
    %332 = arith.mulf %329, %331 : vector<8x256xf32>
    %333 = arith.truncf %332 : vector<8x256xf32> to vector<8x256xbf16>
    %c64_134 = arith.constant 64 : index
    %c256_135 = arith.constant 256 : index
    %334 = vector.load %arg20[%c64_134, %c256_135] : memref<72x512xbf16, #tpu.memory_space<vmem>>, vector<8x256xbf16>
    tpu.vector_store %arg20[%c64_134, %c256_135], %333 {strides = array<i32>} : memref<72x512xbf16, #tpu.memory_space<vmem>>, vector<8x256xbf16>,
    %c0_136 = arith.constant 0 : index
    %c0_137 = arith.constant 0 : index
    %335 = vector.load %arg13[%c0_136, %c0_137] : memref<32x72xbf16, #tpu.memory_space<vmem>>, vector<32x72xbf16>
    %c0_138 = arith.constant 0 : index
    %c0_139 = arith.constant 0 : index
    %336 = vector.load %arg20[%c0_138, %c0_139] : memref<72x512xbf16, #tpu.memory_space<vmem>>, vector<72x512xbf16>
    %cst_140 = arith.constant dense<0.000000e+00> : vector<32x512xf32>
    %337 = tpu.matmul %335, %336, %cst_140 {dimension_numbers = #tpu.dot_dimension_numbers<[1], [0], [0], [1], [0, 0, 1, 1], [], []>} : vector<32x72xbf16>, vector<72x512xbf16>, vector<32x512xf32> -> vector<32x512xf32>
    %c0_141 = arith.constant 0 : index
    %c0_142 = arith.constant 0 : index
    %338 = vector.load %arg14[%c0_141, %c0_142] : memref<32x1xf32, #tpu.memory_space<vmem>>, vector<32x1xf32>
    %339 = vector.broadcast %338 : vector<32x1xf32> to vector<32x512xf32>
    %340 = arith.addf %337, %339 : vector<32x512xf32>
    %c0_143 = arith.constant 0 : index
    %c0_144 = arith.constant 0 : index
    %341 = vector.load %arg15[%c0_143, %c0_144] : memref<32x1xf32, #tpu.memory_space<vmem>>, vector<32x1xf32>
    %342 = vector.broadcast %341 : vector<32x1xf32> to vector<32x512xf32>
    %343 = arith.mulf %340, %342 : vector<32x512xf32>
    %c0_145 = arith.constant 0 : index
    %c0_146 = arith.constant 0 : index
    %344 = vector.load %arg16[%c0_145, %c0_146] : memref<32x1xf32, #tpu.memory_space<vmem>>, vector<32x1xf32>
    %345 = vector.broadcast %344 : vector<32x1xf32> to vector<32x512xf32>
    %346 = arith.addf %343, %345 : vector<32x512xf32>
    %347 = arith.mulf %346, %346 : vector<32x512xf32>
    %348 = arith.mulf %346, %347 : vector<32x512xf32>
    %cst_147 = arith.constant 4.471500e-02 : f32
    %349 = vector.broadcast %cst_147 : f32 to vector<32x512xf32>
    %350 = arith.mulf %349, %348 : vector<32x512xf32>
    %351 = arith.addf %346, %350 : vector<32x512xf32>
    %cst_148 = arith.constant 0.797884583 : f32
    %352 = vector.broadcast %cst_148 : f32 to vector<32x512xf32>
    %353 = arith.mulf %352, %351 : vector<32x512xf32>
    %354 = math.tanh %353 : vector<32x512xf32>
    %cst_149 = arith.constant 1.000000e+00 : f32
    %355 = vector.broadcast %cst_149 : f32 to vector<32x512xf32>
    %356 = arith.addf %355, %354 : vector<32x512xf32>
    %cst_150 = arith.constant 5.000000e-01 : f32
    %357 = vector.broadcast %cst_150 : f32 to vector<32x512xf32>
    %358 = arith.mulf %357, %356 : vector<32x512xf32>
    %359 = arith.mulf %346, %358 : vector<32x512xf32>
    %360 = vector.extract_strided_slice %359 {offsets = [0, 0], sizes = [32, 256], strides = [1, 1]} : vector<32x512xf32> to vector<32x256xf32>
    %361 = arith.truncf %360 : vector<32x256xf32> to vector<32x256xbf16>
    %c0_151 = arith.constant 0 : index
    %c0_152 = arith.constant 0 : index
    %c0_153 = arith.constant 0 : index
    %362 = vector.load %arg19[%c0_151, %c0_152, %c0_153] : memref<2x32x256xbf16, #tpu.memory_space<vmem>>, vector<1x32x256xbf16>
    %363 = vector.shape_cast %362 : vector<1x32x256xbf16> to vector<32x256xbf16>
    %364 = vector.shape_cast %361 : vector<32x256xbf16> to vector<1x32x256xbf16>
    tpu.vector_store %arg19[%c0_151, %c0_152, %c0_153], %364 {strides = array<i32>} : memref<2x32x256xbf16, #tpu.memory_space<vmem>>, vector<1x32x256xbf16>,
    %365 = vector.extract_strided_slice %359 {offsets = [0, 256], sizes = [32, 256], strides = [1, 1]} : vector<32x512xf32> to vector<32x256xf32>
    %366 = arith.truncf %365 : vector<32x256xf32> to vector<32x256xbf16>
    %c1_154 = arith.constant 1 : index
    %c0_155 = arith.constant 0 : index
    %c0_156 = arith.constant 0 : index
    %367 = vector.load %arg19[%c1_154, %c0_155, %c0_156] : memref<2x32x256xbf16, #tpu.memory_space<vmem>>, vector<1x32x256xbf16>
    %368 = vector.shape_cast %367 : vector<1x32x256xbf16> to vector<32x256xbf16>
    %369 = vector.shape_cast %366 : vector<32x256xbf16> to vector<1x32x256xbf16>
    tpu.vector_store %arg19[%c1_154, %c0_155, %c0_156], %369 {strides = array<i32>} : memref<2x32x256xbf16, #tpu.memory_space<vmem>>, vector<1x32x256xbf16>,
    return
  }
  func.func @transform_0(%arg0: i32) -> (i32, i32) {
    %c0_i32 = arith.constant 0 : i32
    %c0_i32_0 = arith.constant 0 : i32
    return %arg0, %c0_i32 : i32, i32
  }
  func.func @transform_1(%arg0: i32) -> (i32, i32, i32) {
    %c0_i32 = arith.constant 0 : i32
    %c0_i32_0 = arith.constant 0 : i32
    %c0_i32_1 = arith.constant 0 : i32
    return %arg0, %c0_i32, %c0_i32_0 : i32, i32, i32
  }
  func.func @transform_2(%arg0: i32) -> (i32, i32) {
    %c0_i32 = arith.constant 0 : i32
    %c0_i32_0 = arith.constant 0 : i32
    %c0_i32_1 = arith.constant 0 : i32
    return %c0_i32, %c0_i32_0 : i32, i32
  }
  func.func @transform_3(%arg0: i32) -> (i32, i32) {
    %c0_i32 = arith.constant 0 : i32
    %c0_i32_0 = arith.constant 0 : i32
    %c0_i32_1 = arith.constant 0 : i32
    return %c0_i32, %c0_i32_0 : i32, i32
  }
  func.func @transform_4(%arg0: i32) -> (i32, i32, i32) {
    %c0_i32 = arith.constant 0 : i32
    %c0_i32_0 = arith.constant 0 : i32
    %c0_i32_1 = arith.constant 0 : i32
    %c0_i32_2 = arith.constant 0 : i32
    return %c0_i32, %c0_i32_0, %c0_i32_1 : i32, i32, i32
  }
  func.func @transform_5(%arg0: i32) -> (i32, i32, i32) {
    %c0_i32 = arith.constant 0 : i32
    %c0_i32_0 = arith.constant 0 : i32
    %c0_i32_1 = arith.constant 0 : i32
    %c0_i32_2 = arith.constant 0 : i32
    return %c0_i32, %c0_i32_0, %c0_i32_1 : i32, i32, i32
  }
  func.func @transform_6(%arg0: i32) -> (i32, i32) {
    %c0_i32 = arith.constant 0 : i32
    %c0_i32_0 = arith.constant 0 : i32
    %c0_i32_1 = arith.constant 0 : i32
    return %c0_i32, %c0_i32_0 : i32, i32
  }
  func.func @transform_7(%arg0: i32) -> (i32, i32) {
    %c0_i32 = arith.constant 0 : i32
    %c0_i32_0 = arith.constant 0 : i32
    %c0_i32_1 = arith.constant 0 : i32
    return %c0_i32, %c0_i32_0 : i32, i32
  }
  func.func @transform_8(%arg0: i32) -> (i32, i32) {
    %c0_i32 = arith.constant 0 : i32
    %c0_i32_0 = arith.constant 0 : i32
    %c0_i32_1 = arith.constant 0 : i32
    return %c0_i32, %c0_i32_0 : i32, i32
  }
  func.func @transform_9(%arg0: i32) -> (i32, i32) {
    %c0_i32 = arith.constant 0 : i32
    %c0_i32_0 = arith.constant 0 : i32
    %c0_i32_1 = arith.constant 0 : i32
    return %c0_i32, %c0_i32_0 : i32, i32
  }
  func.func @transform_10(%arg0: i32) -> (i32, i32, i32) {
    %c0_i32 = arith.constant 0 : i32
    %c0_i32_0 = arith.constant 0 : i32
    %c0_i32_1 = arith.constant 0 : i32
    %c0_i32_2 = arith.constant 0 : i32
    return %c0_i32, %c0_i32_0, %c0_i32_1 : i32, i32, i32
  }
  func.func @transform_11(%arg0: i32) -> (i32, i32) {
    %c0_i32 = arith.constant 0 : i32
    %c0_i32_0 = arith.constant 0 : i32
    %c0_i32_1 = arith.constant 0 : i32
    return %c0_i32, %c0_i32_0 : i32, i32
  }
  func.func @transform_12(%arg0: i32) -> (i32, i32) {
    %c0_i32 = arith.constant 0 : i32
    %c0_i32_0 = arith.constant 0 : i32
    %c0_i32_1 = arith.constant 0 : i32
    return %c0_i32, %c0_i32_0 : i32, i32
  }
  func.func @transform_13(%arg0: i32) -> (i32, i32) {
    %c0_i32 = arith.constant 0 : i32
    %c0_i32_0 = arith.constant 0 : i32
    %c0_i32_1 = arith.constant 0 : i32
    return %c0_i32, %c0_i32_0 : i32, i32
  }
  func.func @transform_14(%arg0: i32) -> (i32, i32) {
    %c0_i32 = arith.constant 0 : i32
    %c0_i32_0 = arith.constant 0 : i32
    %c0_i32_1 = arith.constant 0 : i32
    return %c0_i32, %c0_i32_0 : i32, i32
  }
  func.func @transform_15(%arg0: i32) -> (i32, i32) {
    %c0_i32 = arith.constant 0 : i32
    %c0_i32_0 = arith.constant 0 : i32
    %c0_i32_1 = arith.constant 0 : i32
    return %c0_i32, %c0_i32_0 : i32, i32
  }
  func.func @transform_16(%arg0: i32) -> (i32, i32) {
    %c0_i32 = arith.constant 0 : i32
    %c0_i32_0 = arith.constant 0 : i32
    %c0_i32_1 = arith.constant 0 : i32
    return %c0_i32, %c0_i32_0 : i32, i32
  }
  func.func @transform_17(%arg0: i32) -> (i32, i32) {
    %c0_i32 = arith.constant 0 : i32
    %c0_i32_0 = arith.constant 0 : i32
    return %arg0, %c0_i32 : i32, i32
  }
  func.func @transform_18(%arg0: i32) -> (i32, i32, i32) {
    %c0_i32 = arith.constant 0 : i32
    %c0_i32_0 = arith.constant 0 : i32
    %c0_i32_1 = arith.constant 0 : i32
    return %arg0, %c0_i32, %c0_i32_0 : i32, i32, i32
  }
}

</mosaic_0001>

<llo_original>
// kernel: semantic2feature_forward.1
$region0: #{semantic2feature_forward.1}
  #allocation0 [shape = 'u32[]', space=smem, size = 0x4, offset = 0x4, fixed_abs, tag = 'smem constant byte address 0x4 - core index']
  #allocation1 [shape = 'u32[144,128]{1,0:T(1,128)}', space=vmem, size = 0x12000, scoped, tag = 'internal scratch']
  #allocation2 [shape = 'bf16[72,512]{1,0:T(8,128)(2,1)}', space=vmem, size = 0x12000, scoped, tag = 'scratch operand']
  %s0 = inlined_call_operand.vmem [shape: f32[32,32], index: 0, kind: input, shape index: {}]
  %s1 = inlined_call_operand.vmem [shape: bf16[4,32,256], index: 1, kind: input, shape index: {}]
  %s2 = inlined_call_operand.vmem [shape: f32[1,32], index: 2, kind: input, shape index: {}]
  %s3 = inlined_call_operand.vmem [shape: f32[1,32], index: 3, kind: input, shape index: {}]
  %s4 = inlined_call_operand.vmem [shape: bf16[4,32,8], index: 4, kind: input, shape index: {}]
  %s5 = inlined_call_operand.vmem [shape: f32[4,1,8], index: 5, kind: input, shape index: {}]
  %s6 = inlined_call_operand.vmem [shape: f32[32,1], index: 6, kind: input, shape index: {}]
  %s7 = inlined_call_operand.vmem [shape: f32[32,1], index: 7, kind: input, shape index: {}]
  %s8 = inlined_call_operand.vmem [shape: bf16[64,32], index: 8, kind: input, shape index: {}]
  %s9 = inlined_call_operand.vmem [shape: f32[64,1], index: 9, kind: input, shape index: {}]
  %s10 = inlined_call_operand.vmem [shape: bf16[4,8,32], index: 10, kind: input, shape index: {}]
  %s11 = inlined_call_operand.vmem [shape: f32[1,32], index: 11, kind: input, shape index: {}]
  %s12 = inlined_call_operand.vmem [shape: bf16[32,72], index: 12, kind: input, shape index: {}]
  %s13 = inlined_call_operand.vmem [shape: f32[32,1], index: 13, kind: input, shape index: {}]
  %s14 = inlined_call_operand.vmem [shape: f32[32,1], index: 14, kind: input, shape index: {}]
  %s15 = inlined_call_operand.vmem [shape: f32[32,1], index: 15, kind: input, shape index: {}]
  %s16 = inlined_call_operand.vmem [shape: f32[9,256], index: 16, kind: input, shape index: {}]
  %s17 = inlined_call_operand.hbm [shape: f32[32,32], index: 17, kind: output, shape index: {0}]
  %s18 = inlined_call_operand.vmem [shape: bf16[4,32,256], index: 18, kind: output, shape index: {1}]
  %19 = xla_tuple %s17, %s18
  %s20 = sld [smem:[#allocation0]]
  $region109: #{semantic2feature_forward.1} parent=0
    _
  %s22 = ssub.s32 1, %s20
  %s23 = scalar_select 0, %s22, %s20
  $region1: #{semantic2feature_forward.1} parent=0
    #allocation3 [shape = 'u8[16384]{0}', space=vmem, size = 0x4000, scoped, tag = 'output window, operand 0']
    #allocation4 [shape = 's32[2]{0}', space=sflag, size = 0x8, scoped, tag = 'scoped memory for semantic2feature_forward.1']
    %24 = vsyncpa [#allocation4], 0
    %s25 = scalar_lea.sflag [#allocation4], 1
    %26 = vsyncpa %s25, 0
    loop: start=0, step=1, limit=4
    $region2: #{semantic2feature_forward.1} parent=1 // loop_pre_header
      _
    $region3: #{semantic2feature_forward.1} parent=1 // loop_header
      %s28 = sphi 0, %s32
      %p29 = scmp.ge.s32.totalorder %s28, 4
      %s38 = sphi 0, %s40
      %s41 = sphi 0, %s38
      %s42 = sphi 0, %s41
      %s58 = sphi 0, %s42
      %s64 = sphi 0, %s66
      %s67 = sphi 0, %s64
      %s68 = sphi 0, %s67
      %s84 = sphi 0, %s68
      %s88 = sphi 0, %s88
      %s90 = sphi 0, %s88
      %s91 = sphi 0, %s90
      %s105 = sphi 0, %s91
      %s109 = sphi 0, %s109
      %s111 = sphi 0, %s109
      %s112 = sphi 0, %s111
      %s126 = sphi 0, %s112
      %s130 = sphi 0, %s130
      %s132 = sphi 0, %s130
      %s133 = sphi 0, %s132
      %s147 = sphi 0, %s133
      %s151 = sphi 0, %s151
      %s153 = sphi 0, %s151
      %s154 = sphi 0, %s153
      %s168 = sphi 0, %s154
      %s172 = sphi 0, %s172
      %s174 = sphi 0, %s172
      %s175 = sphi 0, %s174
      %s189 = sphi 0, %s175
      %s193 = sphi 0, %s193
      %s195 = sphi 0, %s193
      %s196 = sphi 0, %s195
      %s210 = sphi 0, %s196
      %s214 = sphi 0, %s214
      %s216 = sphi 0, %s214
      %s217 = sphi 0, %s216
      %s231 = sphi 0, %s217
      %s235 = sphi 0, %s235
      %s237 = sphi 0, %s235
      %s238 = sphi 0, %s237
      %s252 = sphi 0, %s238
      %s256 = sphi 0, %s256
      %s258 = sphi 0, %s256
      %s259 = sphi 0, %s258
      %s273 = sphi 0, %s259
      %s277 = sphi 0, %s277
      %s279 = sphi 0, %s277
      %s280 = sphi 0, %s279
      %s294 = sphi 0, %s280
      %s298 = sphi 0, %s298
      %s300 = sphi 0, %s298
      %s301 = sphi 0, %s300
      %s315 = sphi 0, %s301
      %s319 = sphi 0, %s319
      %s321 = sphi 0, %s319
      %s322 = sphi 0, %s321
      %s336 = sphi 0, %s322
      %s340 = sphi 0, %s340
      %s342 = sphi 0, %s340
      %s343 = sphi 0, %s342
      %s357 = sphi 0, %s343
      %s361 = sphi 0, %s361
      %s363 = sphi 0, %s361
      %s364 = sphi 0, %s363
      %s378 = sphi 0, %s364
      %s382 = sphi 0, %s382
      %s384 = sphi 0, %s382
      %s385 = sphi 0, %s384
      %s399 = sphi 0, %s385
      %s405 = sphi 0, %s407
      %s408 = sphi 0, %s405
      %s409 = sphi 0, %s408
      %s425 = sphi 0, %s409
      %s431 = sphi 0, %s433
      %s434 = sphi 0, %s431
      %s435 = sphi 0, %s434
      %s451 = sphi 0, %s435
    $region4: #{semantic2feature_forward.1} parent=1 // loop_header_branch
      %31 = sbr.rel (%p29) target = $region8
    $region5: #{semantic2feature_forward.1} parent=1 // loop_body
      %s33 = ssub.s32 %s28, 1
      %s34 = ssub.s32 %s28, 2
      %s35 = sadd.s32 %s28, 1
      %s36 = ssub.s32 %s28, %s35
      %p37 = scmp.eq.s32.totalorder %s36, 0
      %s39 = sadd.s32 %s38, 1
      %s40 = scalar_select %p37, %s38, %s39
      %p43 = pneg %p37
      %p44 = scmp.eq.s32.totalorder %s28, 1
      %p45 = por %p43, %p44
      %p46 = scmp.ne.s32.totalorder %s38, %s41
      %p47 = scmp.eq.s32.totalorder %s28, 0
      %p48 = por %p46, %p47
      %p49 = scmp.ne.s32.totalorder %s38, %s41
      %p50 = scmp.eq.s32.totalorder %s33, 1
      %p51 = por %p49, %p50
      %p52 = scmp.ne.s32.totalorder %s41, %s42
      %p53 = scmp.eq.s32.totalorder %s33, 0
      %p54 = por %p52, %p53
      %p55 = scmp.ne.s32.totalorder %s41, %s42
      %p56 = scmp.eq.s32.totalorder %s34, 1
      %p57 = por %p55, %p56
      %p59 = scmp.ne.s32.totalorder %s42, %s58
      %p60 = scmp.eq.s32.totalorder %s34, 0
      %p61 = por %p59, %p60
      %s62 = ssub.s32 %s28, %s35
      %p63 = scmp.eq.s32.totalorder %s62, 0
      %s65 = sadd.s32 %s64, 1
      %s66 = scalar_select %p63, %s64, %s65
      %p69 = pneg %p63
      %p70 = scmp.eq.s32.totalorder %s28, 1
      %p71 = por %p69, %p70
      %p72 = scmp.ne.s32.totalorder %s64, %s67
      %p73 = scmp.eq.s32.totalorder %s28, 0
      %p74 = por %p72, %p73
      %p75 = scmp.ne.s32.totalorder %s64, %s67
      %p76 = scmp.eq.s32.totalorder %s33, 1
      %p77 = por %p75, %p76
      %p78 = scmp.ne.s32.totalorder %s67, %s68
      %p79 = scmp.eq.s32.totalorder %s33, 0
      %p80 = por %p78, %p79
      %p81 = scmp.ne.s32.totalorder %s67, %s68
      %p82 = scmp.eq.s32.totalorder %s34, 1
      %p83 = por %p81, %p82
      %p85 = scmp.ne.s32.totalorder %s68, %s84
      %p86 = scmp.eq.s32.totalorder %s34, 0
      %p87 = por %p85, %p86
      %s89 = sadd.s32 %s88, 1
      %p92 = scmp.eq.s32.totalorder %s28, 1
      %p93 = scmp.ne.s32.totalorder %s88, %s90
      %p94 = scmp.eq.s32.totalorder %s28, 0
      %p95 = por %p93, %p94
      %p96 = scmp.ne.s32.totalorder %s88, %s90
      %p97 = scmp.eq.s32.totalorder %s33, 1
      %p98 = por %p96, %p97
      %p99 = scmp.ne.s32.totalorder %s90, %s91
      %p100 = scmp.eq.s32.totalorder %s33, 0
      %p101 = por %p99, %p100
      %p102 = scmp.ne.s32.totalorder %s90, %s91
      %p103 = scmp.eq.s32.totalorder %s34, 1
      %p104 = por %p102, %p103
      %p106 = scmp.ne.s32.totalorder %s91, %s105
      %p107 = scmp.eq.s32.totalorder %s34, 0
      %p108 = por %p106, %p107
      %s110 = sadd.s32 %s109, 1
      %p113 = scmp.eq.s32.totalorder %s28, 1
      %p114 = scmp.ne.s32.totalorder %s109, %s111
      %p115 = scmp.eq.s32.totalorder %s28, 0
      %p116 = por %p114, %p115
      %p117 = scmp.ne.s32.totalorder %s109, %s111
      %p118 = scmp.eq.s32.totalorder %s33, 1
      %p119 = por %p117, %p118
      %p120 = scmp.ne.s32.totalorder %s111, %s112
      %p121 = scmp.eq.s32.totalorder %s33, 0
      %p122 = por %p120, %p121
      %p123 = scmp.ne.s32.totalorder %s111, %s112
      %p124 = scmp.eq.s32.totalorder %s34, 1
      %p125 = por %p123, %p124
      %p127 = scmp.ne.s32.totalorder %s112, %s126
      %p128 = scmp.eq.s32.totalorder %s34, 0
      %p129 = por %p127, %p128
      %s131 = sadd.s32 %s130, 1
      %p134 = scmp.eq.s32.totalorder %s28, 1
      %p135 = scmp.ne.s32.totalorder %s130, %s132
      %p136 = scmp.eq.s32.totalorder %s28, 0
      %p137 = por %p135, %p136
      %p138 = scmp.ne.s32.totalorder %s130, %s132
      %p139 = scmp.eq.s32.totalorder %s33, 1
      %p140 = por %p138, %p139
      %p141 = scmp.ne.s32.totalorder %s132, %s133
      %p142 = scmp.eq.s32.totalorder %s33, 0
      %p143 = por %p141, %p142
      %p144 = scmp.ne.s32.totalorder %s132, %s133
      %p145 = scmp.eq.s32.totalorder %s34, 1
      %p146 = por %p144, %p145
      %p148 = scmp.ne.s32.totalorder %s133, %s147
      %p149 = scmp.eq.s32.totalorder %s34, 0
      %p150 = por %p148, %p149
      %s152 = sadd.s32 %s151, 1
      %p155 = scmp.eq.s32.totalorder %s28, 1
      %p156 = scmp.ne.s32.totalorder %s151, %s153
      %p157 = scmp.eq.s32.totalorder %s28, 0
      %p158 = por %p156, %p157
      %p159 = scmp.ne.s32.totalorder %s151, %s153
      %p160 = scmp.eq.s32.totalorder %s33, 1
      %p161 = por %p159, %p160
      %p162 = scmp.ne.s32.totalorder %s153, %s154
      %p163 = scmp.eq.s32.totalorder %s33, 0
      %p164 = por %p162, %p163
      %p165 = scmp.ne.s32.totalorder %s153, %s154
      %p166 = scmp.eq.s32.totalorder %s34, 1
      %p167 = por %p165, %p166
      %p169 = scmp.ne.s32.totalorder %s154, %s168
      %p170 = scmp.eq.s32.totalorder %s34, 0
      %p171 = por %p169, %p170
      %s173 = sadd.s32 %s172, 1
      %p176 = scmp.eq.s32.totalorder %s28, 1
      %p177 = scmp.ne.s32.totalorder %s172, %s174
      %p178 = scmp.eq.s32.totalorder %s28, 0
      %p179 = por %p177, %p178
      %p180 = scmp.ne.s32.totalorder %s172, %s174
      %p181 = scmp.eq.s32.totalorder %s33, 1
      %p182 = por %p180, %p181
      %p183 = scmp.ne.s32.totalorder %s174, %s175
      %p184 = scmp.eq.s32.totalorder %s33, 0
      %p185 = por %p183, %p184
      %p186 = scmp.ne.s32.totalorder %s174, %s175
      %p187 = scmp.eq.s32.totalorder %s34, 1
      %p188 = por %p186, %p187
      %p190 = scmp.ne.s32.totalorder %s175, %s189
      %p191 = scmp.eq.s32.totalorder %s34, 0
      %p192 = por %p190, %p191
      %s194 = sadd.s32 %s193, 1
      %p197 = scmp.eq.s32.totalorder %s28, 1
      %p198 = scmp.ne.s32.totalorder %s193, %s195
      %p199 = scmp.eq.s32.totalorder %s28, 0
      %p200 = por %p198, %p199
      %p201 = scmp.ne.s32.totalorder %s193, %s195
      %p202 = scmp.eq.s32.totalorder %s33, 1
      %p203 = por %p201, %p202
      %p204 = scmp.ne.s32.totalorder %s195, %s196
      %p205 = scmp.eq.s32.totalorder %s33, 0
      %p206 = por %p204, %p205
      %p207 = scmp.ne.s32.totalorder %s195, %s196
      %p208 = scmp.eq.s32.totalorder %s34, 1
      %p209 = por %p207, %p208
      %p211 = scmp.ne.s32.totalorder %s196, %s210
      %p212 = scmp.eq.s32.totalorder %s34, 0
      %p213 = por %p211, %p212
      %s215 = sadd.s32 %s214, 1
      %p218 = scmp.eq.s32.totalorder %s28, 1
      %p219 = scmp.ne.s32.totalorder %s214, %s216
      %p220 = scmp.eq.s32.totalorder %s28, 0
      %p221 = por %p219, %p220
      %p222 = scmp.ne.s32.totalorder %s214, %s216
      %p223 = scmp.eq.s32.totalorder %s33, 1
      %p224 = por %p222, %p223
      %p225 = scmp.ne.s32.totalorder %s216, %s217
      %p226 = scmp.eq.s32.totalorder %s33, 0
      %p227 = por %p225, %p226
      %p228 = scmp.ne.s32.totalorder %s216, %s217
      %p229 = scmp.eq.s32.totalorder %s34, 1
      %p230 = por %p228, %p229
      %p232 = scmp.ne.s32.totalorder %s217, %s231
      %p233 = scmp.eq.s32.totalorder %s34, 0
      %p234 = por %p232, %p233
      %s236 = sadd.s32 %s235, 1
      %p239 = scmp.eq.s32.totalorder %s28, 1
      %p240 = scmp.ne.s32.totalorder %s235, %s237
      %p241 = scmp.eq.s32.totalorder %s28, 0
      %p242 = por %p240, %p241
      %p243 = scmp.ne.s32.totalorder %s235, %s237
      %p244 = scmp.eq.s32.totalorder %s33, 1
      %p245 = por %p243, %p244
      %p246 = scmp.ne.s32.totalorder %s237, %s238
      %p247 = scmp.eq.s32.totalorder %s33, 0
      %p248 = por %p246, %p247
      %p249 = scmp.ne.s32.totalorder %s237, %s238
      %p250 = scmp.eq.s32.totalorder %s34, 1
      %p251 = por %p249, %p250
      %p253 = scmp.ne.s32.totalorder %s238, %s252
      %p254 = scmp.eq.s32.totalorder %s34, 0
      %p255 = por %p253, %p254
      %s257 = sadd.s32 %s256, 1
      %p260 = scmp.eq.s32.totalorder %s28, 1
      %p261 = scmp.ne.s32.totalorder %s256, %s258
      %p262 = scmp.eq.s32.totalorder %s28, 0
      %p263 = por %p261, %p262
      %p264 = scmp.ne.s32.totalorder %s256, %s258
      %p265 = scmp.eq.s32.totalorder %s33, 1
      %p266 = por %p264, %p265
      %p267 = scmp.ne.s32.totalorder %s258, %s259
      %p268 = scmp.eq.s32.totalorder %s33, 0
      %p269 = por %p267, %p268
      %p270 = scmp.ne.s32.totalorder %s258, %s259
      %p271 = scmp.eq.s32.totalorder %s34, 1
      %p272 = por %p270, %p271
      %p274 = scmp.ne.s32.totalorder %s259, %s273
      %p275 = scmp.eq.s32.totalorder %s34, 0
      %p276 = por %p274, %p275
      %s278 = sadd.s32 %s277, 1
      %p281 = scmp.eq.s32.totalorder %s28, 1
      %p282 = scmp.ne.s32.totalorder %s277, %s279
      %p283 = scmp.eq.s32.totalorder %s28, 0
      %p284 = por %p282, %p283
      %p285 = scmp.ne.s32.totalorder %s277, %s279
      %p286 = scmp.eq.s32.totalorder %s33, 1
      %p287 = por %p285, %p286
      %p288 = scmp.ne.s32.totalorder %s279, %s280
      %p289 = scmp.eq.s32.totalorder %s33, 0
      %p290 = por %p288, %p289
      %p291 = scmp.ne.s32.totalorder %s279, %s280
      %p292 = scmp.eq.s32.totalorder %s34, 1
      %p293 = por %p291, %p292
      %p295 = scmp.ne.s32.totalorder %s280, %s294
      %p296 = scmp.eq.s32.totalorder %s34, 0
      %p297 = por %p295, %p296
      %s299 = sadd.s32 %s298, 1
      %p302 = scmp.eq.s32.totalorder %s28, 1
      %p303 = scmp.ne.s32.totalorder %s298, %s300
      %p304 = scmp.eq.s32.totalorder %s28, 0
      %p305 = por %p303, %p304
      %p306 = scmp.ne.s32.totalorder %s298, %s300
      %p307 = scmp.eq.s32.totalorder %s33, 1
      %p308 = por %p306, %p307
      %p309 = scmp.ne.s32.totalorder %s300, %s301
      %p310 = scmp.eq.s32.totalorder %s33, 0
      %p311 = por %p309, %p310
      %p312 = scmp.ne.s32.totalorder %s300, %s301
      %p313 = scmp.eq.s32.totalorder %s34, 1
      %p314 = por %p312, %p313
      %p316 = scmp.ne.s32.totalorder %s301, %s315
      %p317 = scmp.eq.s32.totalorder %s34, 0
      %p318 = por %p316, %p317
      %s320 = sadd.s32 %s319, 1
      %p323 = scmp.eq.s32.totalorder %s28, 1
      %p324 = scmp.ne.s32.totalorder %s319, %s321
      %p325 = scmp.eq.s32.totalorder %s28, 0
      %p326 = por %p324, %p325
      %p327 = scmp.ne.s32.totalorder %s319, %s321
      %p328 = scmp.eq.s32.totalorder %s33, 1
      %p329 = por %p327, %p328
      %p330 = scmp.ne.s32.totalorder %s321, %s322
      %p331 = scmp.eq.s32.totalorder %s33, 0
      %p332 = por %p330, %p331
      %p333 = scmp.ne.s32.totalorder %s321, %s322
      %p334 = scmp.eq.s32.totalorder %s34, 1
      %p335 = por %p333, %p334
      %p337 = scmp.ne.s32.totalorder %s322, %s336
      %p338 = scmp.eq.s32.totalorder %s34, 0
      %p339 = por %p337, %p338
      %s341 = sadd.s32 %s340, 1
      %p344 = scmp.eq.s32.totalorder %s28, 1
      %p345 = scmp.ne.s32.totalorder %s340, %s342
      %p346 = scmp.eq.s32.totalorder %s28, 0
      %p347 = por %p345, %p346
      %p348 = scmp.ne.s32.totalorder %s340, %s342
      %p349 = scmp.eq.s32.totalorder %s33, 1
      %p350 = por %p348, %p349
      %p351 = scmp.ne.s32.totalorder %s342, %s343
      %p352 = scmp.eq.s32.totalorder %s33, 0
      %p353 = por %p351, %p352
      %p354 = scmp.ne.s32.totalorder %s342, %s343
      %p355 = scmp.eq.s32.totalorder %s34, 1
      %p356 = por %p354, %p355
      %p358 = scmp.ne.s32.totalorder %s343, %s357
      %p359 = scmp.eq.s32.totalorder %s34, 0
      %p360 = por %p358, %p359
      %s362 = sadd.s32 %s361, 1
      %p365 = scmp.eq.s32.totalorder %s28, 1
      %p366 = scmp.ne.s32.totalorder %s361, %s363
      %p367 = scmp.eq.s32.totalorder %s28, 0
      %p368 = por %p366, %p367
      %p369 = scmp.ne.s32.totalorder %s361, %s363
      %p370 = scmp.eq.s32.totalorder %s33, 1
      %p371 = por %p369, %p370
      %p372 = scmp.ne.s32.totalorder %s363, %s364
      %p373 = scmp.eq.s32.totalorder %s33, 0
      %p374 = por %p372, %p373
      %p375 = scmp.ne.s32.totalorder %s363, %s364
      %p376 = scmp.eq.s32.totalorder %s34, 1
      %p377 = por %p375, %p376
      %p379 = scmp.ne.s32.totalorder %s364, %s378
      %p380 = scmp.eq.s32.totalorder %s34, 0
      %p381 = por %p379, %p380
      %s383 = sadd.s32 %s382, 1
      %p386 = scmp.eq.s32.totalorder %s28, 1
      %p387 = scmp.ne.s32.totalorder %s382, %s384
      %p388 = scmp.eq.s32.totalorder %s28, 0
      %p389 = por %p387, %p388
      %p390 = scmp.ne.s32.totalorder %s382, %s384
      %p391 = scmp.eq.s32.totalorder %s33, 1
      %p392 = por %p390, %p391
      %p393 = scmp.ne.s32.totalorder %s384, %s385
      %p394 = scmp.eq.s32.totalorder %s33, 0
      %p395 = por %p393, %p394
      %p396 = scmp.ne.s32.totalorder %s384, %s385
      %p397 = scmp.eq.s32.totalorder %s34, 1
      %p398 = por %p396, %p397
      %p400 = scmp.ne.s32.totalorder %s385, %s399
      %p401 = scmp.eq.s32.totalorder %s34, 0
      %p402 = por %p400, %p401
      %s403 = ssub.s32 %s28, %s35
      %p404 = scmp.eq.s32.totalorder %s403, 0
      %s406 = sadd.s32 %s405, 1
      %s407 = scalar_select %p404, %s405, %s406
      %p410 = pneg %p404
      %p411 = scmp.eq.s32.totalorder %s28, 1
      %p412 = por %p410, %p411
      %p413 = scmp.ne.s32.totalorder %s405, %s408
      %p414 = scmp.eq.s32.totalorder %s28, 0
      %p415 = por %p413, %p414
      %p416 = scmp.ne.s32.totalorder %s405, %s408
      %p417 = scmp.eq.s32.totalorder %s33, 1
      %p418 = por %p416, %p417
      %p419 = scmp.ne.s32.totalorder %s408, %s409
      %p420 = scmp.eq.s32.totalorder %s33, 0
      %p421 = por %p419, %p420
      %p422 = scmp.ne.s32.totalorder %s408, %s409
      %p423 = scmp.eq.s32.totalorder %s34, 1
      %p424 = por %p422, %p423
      %p426 = scmp.ne.s32.totalorder %s409, %s425
      %p427 = scmp.eq.s32.totalorder %s34, 0
      %p428 = por %p426, %p427
      %s429 = ssub.s32 %s28, %s35
      %p430 = scmp.eq.s32.totalorder %s429, 0
      %s432 = sadd.s32 %s431, 1
      %s433 = scalar_select %p430, %s431, %s432
      %p436 = pneg %p430
      %p437 = scmp.eq.s32.totalorder %s28, 1
      %p438 = por %p436, %p437
      %p439 = scmp.ne.s32.totalorder %s431, %s434
      %p440 = scmp.eq.s32.totalorder %s28, 0
      %p441 = por %p439, %p440
      %p442 = scmp.ne.s32.totalorder %s431, %s434
      %p443 = scmp.eq.s32.totalorder %s33, 1
      %p444 = por %p442, %p443
      %p445 = scmp.ne.s32.totalorder %s434, %s435
      %p446 = scmp.eq.s32.totalorder %s33, 0
      %p447 = por %p445, %p446
      %p448 = scmp.ne.s32.totalorder %s434, %s435
      %p449 = scmp.eq.s32.totalorder %s34, 1
      %p450 = por %p448, %p449
      %p452 = scmp.ne.s32.totalorder %s435, %s451
      %p453 = scmp.eq.s32.totalorder %s34, 0
      %p454 = por %p452, %p453
      %p455 = scmp.le.s32.totalorder 1, %s28
      %p456 = scmp.lt.s32.totalorder %s28, 3
      %p457 = pnand %p455, %p456
      %p458 = pneg %p457
      // Predicated region
      $region9: #{semantic2feature_forward.1} parent=5 // pred_check
        _
      $region10: #{semantic2feature_forward.1} parent=5 // pred_check_branch
        %460 = sbr.rel (%p457) target = $region12
      $region11: #{semantic2feature_forward.1} parent=5 // pred_region
        %s461 = ssub.s32 %s28, 1
        // Predicated region
        $region13: #{semantic2feature_forward.1} parent=11 // pred_check
          %p462 = pneg %p101
        $region14: #{semantic2feature_forward.1} parent=11 // pred_check_branch
          %464 = sbr.rel (%p462) target = $region16
        $region15: #{semantic2feature_forward.1} parent=11 // pred_region
          _
        $region16: #{semantic2feature_forward.1} parent=11 // pred_fallthru
          _
        // Predicated region
        $region17: #{semantic2feature_forward.1} parent=11 // pred_check
          %p465 = pneg %p122
        $region18: #{semantic2feature_forward.1} parent=11 // pred_check_branch
          %467 = sbr.rel (%p465) target = $region20
        $region19: #{semantic2feature_forward.1} parent=11 // pred_region
          _
        $region20: #{semantic2feature_forward.1} parent=11 // pred_fallthru
          _
        // Predicated region
        $region21: #{semantic2feature_forward.1} parent=11 // pred_check
          %p468 = pneg %p143
        $region22: #{semantic2feature_forward.1} parent=11 // pred_check_branch
          %470 = sbr.rel (%p468) target = $region24
        $region23: #{semantic2feature_forward.1} parent=11 // pred_region
          _
        $region24: #{semantic2feature_forward.1} parent=11 // pred_fallthru
          _
        // Predicated region
        $region25: #{semantic2feature_forward.1} parent=11 // pred_check
          %p471 = pneg %p164
        $region26: #{semantic2feature_forward.1} parent=11 // pred_check_branch
          %473 = sbr.rel (%p471) target = $region28
        $region27: #{semantic2feature_forward.1} parent=11 // pred_region
          _
        $region28: #{semantic2feature_forward.1} parent=11 // pred_fallthru
          _
        // Predicated region
        $region29: #{semantic2feature_forward.1} parent=11 // pred_check
          %p474 = pneg %p185
        $region30: #{semantic2feature_forward.1} parent=11 // pred_check_branch
          %476 = sbr.rel (%p474) target = $region32
        $region31: #{semantic2feature_forward.1} parent=11 // pred_region
          _
        $region32: #{semantic2feature_forward.1} parent=11 // pred_fallthru
          _
        // Predicated region
        $region33: #{semantic2feature_forward.1} parent=11 // pred_check
          %p477 = pneg %p206
        $region34: #{semantic2feature_forward.1} parent=11 // pred_check_branch
          %479 = sbr.rel (%p477) target = $region36
        $region35: #{semantic2feature_forward.1} parent=11 // pred_region
          _
        $region36: #{semantic2feature_forward.1} parent=11 // pred_fallthru
          _
        // Predicated region
        $region37: #{semantic2feature_forward.1} parent=11 // pred_check
          %p480 = pneg %p227
        $region38: #{semantic2feature_forward.1} parent=11 // pred_check_branch
          %482 = sbr.rel (%p480) target = $region40
        $region39: #{semantic2feature_forward.1} parent=11 // pred_region
          _
        $region40: #{semantic2feature_forward.1} parent=11 // pred_fallthru
          _
        // Predicated region
        $region41: #{semantic2feature_forward.1} parent=11 // pred_check
          %p483 = pneg %p248
        $region42: #{semantic2feature_forward.1} parent=11 // pred_check_branch
          %485 = sbr.rel (%p483) target = $region44
        $region43: #{semantic2feature_forward.1} parent=11 // pred_region
          _
        $region44: #{semantic2feature_forward.1} parent=11 // pred_fallthru
          _
        // Predicated region
        $region45: #{semantic2feature_forward.1} parent=11 // pred_check
          %p486 = pneg %p269
        $region46: #{semantic2feature_forward.1} parent=11 // pred_check_branch
          %488 = sbr.rel (%p486) target = $region48
        $region47: #{semantic2feature_forward.1} parent=11 // pred_region
          _
        $region48: #{semantic2feature_forward.1} parent=11 // pred_fallthru
          _
        // Predicated region
        $region49: #{semantic2feature_forward.1} parent=11 // pred_check
          %p489 = pneg %p290
        $region50: #{semantic2feature_forward.1} parent=11 // pred_check_branch
          %491 = sbr.rel (%p489) target = $region52
        $region51: #{semantic2feature_forward.1} parent=11 // pred_region
          _
        $region52: #{semantic2feature_forward.1} parent=11 // pred_fallthru
          _
        // Predicated region
        $region53: #{semantic2feature_forward.1} parent=11 // pred_check
          %p492 = pneg %p311
        $region54: #{semantic2feature_forward.1} parent=11 // pred_check_branch
          %494 = sbr.rel (%p492) target = $region56
        $region55: #{semantic2feature_forward.1} parent=11 // pred_region
          _
        $region56: #{semantic2feature_forward.1} parent=11 // pred_fallthru
          _
        // Predicated region
        $region57: #{semantic2feature_forward.1} parent=11 // pred_check
          %p495 = pneg %p332
        $region58: #{semantic2feature_forward.1} parent=11 // pred_check_branch
          %497 = sbr.rel (%p495) target = $region60
        $region59: #{semantic2feature_forward.1} parent=11 // pred_region
          _
        $region60: #{semantic2feature_forward.1} parent=11 // pred_fallthru
          _
        // Predicated region
        $region61: #{semantic2feature_forward.1} parent=11 // pred_check
          %p498 = pneg %p353
        $region62: #{semantic2feature_forward.1} parent=11 // pred_check_branch
          %500 = sbr.rel (%p498) target = $region64
        $region63: #{semantic2feature_forward.1} parent=11 // pred_region
          _
        $region64: #{semantic2feature_forward.1} parent=11 // pred_fallthru
          _
        // Predicated region
        $region65: #{semantic2feature_forward.1} parent=11 // pred_check
          %p501 = pneg %p374
        $region66: #{semantic2feature_forward.1} parent=11 // pred_check_branch
          %503 = sbr.rel (%p501) target = $region68
        $region67: #{semantic2feature_forward.1} parent=11 // pred_region
          _
        $region68: #{semantic2feature_forward.1} parent=11 // pred_fallthru
          _
        // Predicated region
        $region69: #{semantic2feature_forward.1} parent=11 // pred_check
          %p504 = pneg %p395
        $region70: #{semantic2feature_forward.1} parent=11 // pred_check_branch
          %506 = sbr.rel (%p504) target = $region72
        $region71: #{semantic2feature_forward.1} parent=11 // pred_region
          _
        $region72: #{semantic2feature_forward.1} parent=11 // pred_fallthru
          _
      $region12: #{semantic2feature_forward.1} parent=5 // pred_fallthru
        _
      %p507 = scmp.lt.s32.totalorder %s28, 2
      // Predicated region
      $region73: #{semantic2feature_forward.1} parent=5 // pred_check
        %p508 = pneg %p507
      $region74: #{semantic2feature_forward.1} parent=5 // pred_check_branch
        %510 = sbr.rel (%p508) target = $region76
      $region75: #{semantic2feature_forward.1} parent=5 // pred_region
        // Predicated region
        $region77: #{semantic2feature_forward.1} parent=75 // pred_check
          %p511 = pneg %p48
        $region78: #{semantic2feature_forward.1} parent=75 // pred_check_branch
          %513 = sbr.rel (%p511) target = $region80
        $region79: #{semantic2feature_forward.1} parent=75 // pred_region
          %s514 = smul.u32 2, %s28
          %p515 = scmp.lt.s32.totalorder %s514, 3
          %s516 = scalar_select %p515, %s514, 3
          %s517 = smul.addr %s516, 8
          %s518 = scalar_lea.vmem %s0, %s517
          %s519 = smul.u32 2, %s28
        $region80: #{semantic2feature_forward.1} parent=75 // pred_fallthru
          _
        // Predicated region
        $region81: #{semantic2feature_forward.1} parent=75 // pred_check
          %p520 = pneg %p74
        $region82: #{semantic2feature_forward.1} parent=75 // pred_check_branch
          %522 = sbr.rel (%p520) target = $region84
        $region83: #{semantic2feature_forward.1} parent=75 // pred_region
          %s523 = smul.u32 2, %s28
          %p524 = scmp.lt.s32.totalorder %s523, 3
          %s525 = scalar_select %p524, %s523, 3
          %s526 = smul.addr %s525, 8
          %s527 = smul.addr %s526, 4
          %s528 = scalar_lea.vmem %s1, %s527
          %s529 = smul.u32 2, %s28
        $region84: #{semantic2feature_forward.1} parent=75 // pred_fallthru
          _
      $region76: #{semantic2feature_forward.1} parent=5 // pred_fallthru
        _
      %p530 = scmp.le.s32.totalorder 1, %s28
      %p531 = scmp.lt.s32.totalorder %s28, 3
      %p532 = pnand %p530, %p531
      %p533 = pneg %p532
      // Predicated region
      $region85: #{semantic2feature_forward.1} parent=5 // pred_check
        _
      $region86: #{semantic2feature_forward.1} parent=5 // pred_check_branch
        %535 = sbr.rel (%p532) target = $region88
      $region87: #{semantic2feature_forward.1} parent=5 // pred_region
        %s536 = ssub.s32 %s28, 1
        %s537 = smul.u32 2, %s33
        %p538 = scmp.lt.s32.totalorder %s537, 3
        %s539 = scalar_select %p538, %s537, 3
        %s540 = smul.addr %s539, 8
        %s541 = scalar_lea.vmem %s0, %s540
        %p542 = pneg %p54
        %p543 = pneg %p51
        %s544 = smul.u32 2, %s33
        %p545 = scmp.lt.s32.totalorder %s544, 3
        %s546 = scalar_select %p545, %s544, 3
        %s547 = smul.addr %s546, 8
        %s548 = smul.addr %s547, 4
        %s549 = scalar_lea.vmem %s1, %s548
        %p550 = pneg %p80
        %p551 = pneg %p77
        %p552 = pneg %p101
        %p553 = pneg %p98
        %p554 = pneg %p122
        %p555 = pneg %p119
        %p556 = pneg %p143
        %p557 = pneg %p140
        %p558 = pneg %p164
        %p559 = pneg %p161
        %p560 = pneg %p185
        %p561 = pneg %p182
        %p562 = pneg %p206
        %p563 = pneg %p203
        %p564 = pneg %p227
        %p565 = pneg %p224
        %p566 = pneg %p248
        %p567 = pneg %p245
        %p568 = pneg %p269
        %p569 = pneg %p266
        %p570 = pneg %p290
        %p571 = pneg %p287
        %p572 = pneg %p311
        %p573 = pneg %p308
        %p574 = pneg %p332
        %p575 = pneg %p329
        %p576 = pneg %p353
        %p577 = pneg %p350
        %p578 = pneg %p374
        %p579 = pneg %p371
        %p580 = pneg %p395
        %p581 = pneg %p392
        %p582 = pneg %p421
        %p583 = pneg %p418
        %s584 = sand.u32 %s408, 1
        %s585 = scalar_lea.sflag [#allocation4], %s584
        %s586 = sand.u32 %s408, 1
        %s587 = smul.addr %s586, 16
        %s588 = scalar_lea.vmem [#allocation3], %s587
        %p589 = pneg %p447
        %p590 = pneg %p444
        %s591 = smul.u32 2, %s33
        %p592 = scmp.lt.s32.totalorder %s591, 3
        %s593 = scalar_select %p592, %s591, 3
        %s594 = smul.addr %s593, 8
        %s595 = smul.addr %s594, 4
        %s596 = scalar_lea.vmem %s18, %s595
        %s597 = smul.u32 2, %s33
        %p598 = scmp.lt.s32.totalorder %s597, 3
        %s599 = scalar_select %p598, %s597, 3
        %s600 = smul.addr %s599, 8
        %s601 = scalar_lea.vmem %s0, %s600
        %s602 = smul.u32 2, %s33
        %s603 = smul.u32 2, %s33
        %p604 = scmp.lt.s32.totalorder %s603, 3
        %s605 = scalar_select %p604, %s603, 3
        %s606 = smul.addr %s605, 8
        %s607 = smul.addr %s606, 4
        %s608 = scalar_lea.vmem %s1, %s607
        %s609 = smul.u32 2, %s33
        %s610 = smul.u32 2, %s33
        %s611 = smul.u32 2, %s33
        %p612 = scmp.lt.s32.totalorder %s611, 3
        %s613 = scalar_select %p612, %s611, 3
        %s614 = smul.addr %s613, 8
        %s615 = smul.addr %s614, 4
        %s616 = scalar_lea.vmem %s18, %s615
        %s617 = smul.u32 2, %s33
        %v619 = vld [vmem:[%s601] sm:$0xff]
        %v620 = vld [vmem:[%s601 + $0x8] sm:$0xff]
        %vm621 = vcmask 261120
        %v622 = vsel %vm621, %v619, 0.0
        %623 = vadd.xlane.f32.xlu0 %v622
        %v624 = vpop.xlane.xlu0 %623
        %v625 = vsel %vm621, %v620, 0.0
        %626 = vadd.xlane.f32.xlu0 %v625
        %v627 = vpop.xlane.xlu0 %626
        %v628 = vrcp.pop 32.0
        %v629 = vmul.f32 %v624, %v628
        %v630 = vmul.f32 %v627, %v628
        %v631 = vsub.f32 %v619, %v629
        %v632 = vsub.f32 %v620, %v630
        %v633 = vmul.f32 %v631, %v631
        %v634 = vmul.f32 %v632, %v632
        %v635 = vsel %vm621, %v633, 0.0
        %636 = vadd.xlane.f32.xlu0 %v635
        %v637 = vpop.xlane.xlu0 %636
        %v638 = vsel %vm621, %v634, 0.0
        %639 = vadd.xlane.f32.xlu0 %v638
        %v640 = vpop.xlane.xlu0 %639
        %v641 = vmul.f32 %v637, %v628
        %v642 = vmul.f32 %v640, %v628
        %v643 = vadd.f32 %v641, 1e-05
        %v644 = vadd.f32 %v642, 1e-05
        %v645 = vrsqrt.pop %v643
        %v646 = vrsqrt.pop %v644
        %v647 = vmul.f32 %v631, %v645
        %v648 = vmul.f32 %v632, %v646
        %v649 = vld [vmem:[%s2] sm:$0x1]
        %v651 = vlaneseq
        %v652 = vshrl.u32 %v651, 7
        %v653 = vsub.s32 0, %v652
        %v654 = vrot.slane %v649, %v653
        %v656 = vmul.f32 %v647, %v654
        %v657 = vmul.f32 %v648, %v654
        %v658 = vld [vmem:[%s3] sm:$0x1]
        %v660 = vlaneseq
        %v661 = vshrl.u32 %v660, 7
        %v662 = vsub.s32 0, %v661
        %v663 = vrot.slane %v658, %v662
        %v665 = vadd.f32 %v656, %v663
        %v666 = vadd.f32 %v657, %v663
        %v667 = vpack.c.bf16 %v666, %v665
        %v668 = vld [vmem:[%s4] sm:$0xf]
        %v669 = vld [vmem:[%s4 + $0x4] sm:$0xf]
        %v670 = vld [vmem:[%s4 + $0x8] sm:$0xf]
        %v671 = vld [vmem:[%s4 + $0xc] sm:$0xf]
        %v672 = vld [vmem:[%s5] sm:$0x1]
        %v674 = vlaneseq
        %v675 = vshrl.u32 %v674, 7
        %v676 = vsub.s32 0, %v675
        %v677 = vrot.slane %v672, %v676
        %v683 = vunpack.c.l.b16 %v668
        %v684 = vunpack.c.l.b16 %v669
        %v685 = vunpack.c.l.b16 %v670
        %v686 = vunpack.c.l.b16 %v671
        %v687 = vpack.c.b16 %v684, %v683
        %v688 = vpack.c.b16 %v686, %v685
        %v692 = vsel %vm621, %v667, 0
        %694 = vmatprep.subr.bf16.mxu0 0
        %695 = vmatpush1.bf16.msra.mxu0 %v687
        %696 = vmatprep.subr.bf16.mxu0 0
        %697 = vmatpush1.bf16.msra.mxu0 %v688
        %698 = vmatprep.subr.bf16.mxu0 0
        %699 = vmatpush1.bf16.msra.mxu0 0
        %700 = vmatprep.subr.bf16.mxu0 0
        %701 = vmatpush1.bf16.msra.mxu0 0
        %702 = vmatprep.subr.bf16.mxu0 0
        %703 = vmatpush1.bf16.msra.mxu0 0
        %704 = vmatprep.subr.bf16.mxu0 0
        %705 = vmatpush1.bf16.msra.mxu0 0
        %706 = vmatprep.subr.bf16.mxu0 0
        %707 = vmatpush1.bf16.msra.mxu0 0
        %708 = vmatprep.subr.bf16.mxu0 0
        %709 = vmatpush1.bf16.msra.mxu0 0
        %710 = vmatprep.subr.bf16.mxu0 0
        %711 = vmatpush1.bf16.msra.mxu0 0
        %712 = vmatprep.subr.bf16.mxu0 0
        %713 = vmatpush1.bf16.msra.mxu0 0
        %714 = vmatprep.subr.bf16.mxu0 0
        %715 = vmatpush1.bf16.msra.mxu0 0
        %716 = vmatprep.subr.bf16.mxu0 0
        %717 = vmatpush1.bf16.msra.mxu0 0
        %718 = vmatprep.subr.bf16.mxu0 0
        %719 = vmatpush1.bf16.msra.mxu0 0
        %720 = vmatprep.subr.bf16.mxu0 0
        %721 = vmatpush1.bf16.msra.mxu0 0
        %722 = vmatprep.subr.bf16.mxu0 0
        %723 = vmatpush1.bf16.msra.mxu0 0
        %724 = vmatprep.subr.bf16.mxu0 0
        %725 = vmatpush1.bf16.msra.mxu0 0
        %726 = vmatprep.mubr.bf16.mxu0 0
        %727 = vmatmul.mubr.bf16.gmra.mrb[0].mxu0 %v692
        %v728 = vpop.f32.mrb[0].mxu0
        %v729 = vadd.f32 %v677, %v728
        %v730 = vpop.f32.mrb[0].mxu0
        %v731 = vpop.f32.mrb[0].mxu0
        %v732 = vadd.f32 %v677, %v731
        %v733 = vpop.f32.mrb[0].mxu0
        %734 = vdwg.mxu0
        %s735 = scalar_lea.vmem %s4, 16
        %v736 = vld [vmem:[%s735] sm:$0xf]
        %v737 = vld [vmem:[%s735 + $0x4] sm:$0xf]
        %v738 = vld [vmem:[%s735 + $0x8] sm:$0xf]
        %v739 = vld [vmem:[%s735 + $0xc] sm:$0xf]
        %s740 = scalar_lea.vmem %s5, 1
        %v741 = vld [vmem:[%s740] sm:$0x1]
        %v743 = vlaneseq
        %v744 = vshrl.u32 %v743, 7
        %v745 = vsub.s32 0, %v744
        %v746 = vrot.slane %v741, %v745
        %v752 = vunpack.c.l.b16 %v736
        %v753 = vunpack.c.l.b16 %v737
        %v754 = vunpack.c.l.b16 %v738
        %v755 = vunpack.c.l.b16 %v739
        %v756 = vpack.c.b16 %v753, %v752
        %v757 = vpack.c.b16 %v755, %v754
        %760 = vmatprep.subr.bf16.mxu0 0
        %761 = vmatpush1.bf16.msra.mxu0 %v756
        %762 = vmatprep.subr.bf16.mxu0 0
        %763 = vmatpush1.bf16.msra.mxu0 %v757
        %764 = vmatprep.subr.bf16.mxu0 0
        %765 = vmatpush1.bf16.msra.mxu0 0
        %766 = vmatprep.subr.bf16.mxu0 0
        %767 = vmatpush1.bf16.msra.mxu0 0
        %768 = vmatprep.subr.bf16.mxu0 0
        %769 = vmatpush1.bf16.msra.mxu0 0
        %770 = vmatprep.subr.bf16.mxu0 0
        %771 = vmatpush1.bf16.msra.mxu0 0
        %772 = vmatprep.subr.bf16.mxu0 0
        %773 = vmatpush1.bf16.msra.mxu0 0
        %774 = vmatprep.subr.bf16.mxu0 0
        %775 = vmatpush1.bf16.msra.mxu0 0
        %776 = vmatprep.subr.bf16.mxu0 0
        %777 = vmatpush1.bf16.msra.mxu0 0
        %778 = vmatprep.subr.bf16.mxu0 0
        %779 = vmatpush1.bf16.msra.mxu0 0
        %780 = vmatprep.subr.bf16.mxu0 0
        %781 = vmatpush1.bf16.msra.mxu0 0
        %782 = vmatprep.subr.bf16.mxu0 0
        %783 = vmatpush1.bf16.msra.mxu0 0
        %784 = vmatprep.subr.bf16.mxu0 0
        %785 = vmatpush1.bf16.msra.mxu0 0
        %786 = vmatprep.subr.bf16.mxu0 0
        %787 = vmatpush1.bf16.msra.mxu0 0
        %788 = vmatprep.subr.bf16.mxu0 0
        %789 = vmatpush1.bf16.msra.mxu0 0
        %790 = vmatprep.subr.bf16.mxu0 0
        %791 = vmatpush1.bf16.msra.mxu0 0
        %792 = vmatprep.mubr.bf16.mxu0 0
        %793 = vmatmul.mubr.bf16.gmra.mrb[0].mxu0 %v692
        %v794 = vpop.f32.mrb[0].mxu0
        %v795 = vadd.f32 %v746, %v794
        %v796 = vpop.f32.mrb[0].mxu0
        %v797 = vpop.f32.mrb[0].mxu0
        %v798 = vadd.f32 %v746, %v797
        %v799 = vpop.f32.mrb[0].mxu0
        %800 = vdwg.mxu0
        %s801 = scalar_lea.vmem %s4, 32
        %v802 = vld [vmem:[%s801] sm:$0xf]
        %v803 = vld [vmem:[%s801 + $0x4] sm:$0xf]
        %v804 = vld [vmem:[%s801 + $0x8] sm:$0xf]
        %v805 = vld [vmem:[%s801 + $0xc] sm:$0xf]
        %s806 = scalar_lea.vmem %s5, 2
        %v807 = vld [vmem:[%s806] sm:$0x1]
        %v809 = vlaneseq
        %v810 = vshrl.u32 %v809, 7
        %v811 = vsub.s32 0, %v810
        %v812 = vrot.slane %v807, %v811
        %v818 = vunpack.c.l.b16 %v802
        %v819 = vunpack.c.l.b16 %v803
        %v820 = vunpack.c.l.b16 %v804
        %v821 = vunpack.c.l.b16 %v805
        %v822 = vpack.c.b16 %v819, %v818
        %v823 = vpack.c.b16 %v821, %v820
        %826 = vmatprep.subr.bf16.mxu0 0
        %827 = vmatpush1.bf16.msra.mxu0 %v822
        %828 = vmatprep.subr.bf16.mxu0 0
        %829 = vmatpush1.bf16.msra.mxu0 %v823
        %830 = vmatprep.subr.bf16.mxu0 0
        %831 = vmatpush1.bf16.msra.mxu0 0
        %832 = vmatprep.subr.bf16.mxu0 0
        %833 = vmatpush1.bf16.msra.mxu0 0
        %834 = vmatprep.subr.bf16.mxu0 0
        %835 = vmatpush1.bf16.msra.mxu0 0
        %836 = vmatprep.subr.bf16.mxu0 0
        %837 = vmatpush1.bf16.msra.mxu0 0
        %838 = vmatprep.subr.bf16.mxu0 0
        %839 = vmatpush1.bf16.msra.mxu0 0
        %840 = vmatprep.subr.bf16.mxu0 0
        %841 = vmatpush1.bf16.msra.mxu0 0
        %842 = vmatprep.subr.bf16.mxu0 0
        %843 = vmatpush1.bf16.msra.mxu0 0
        %844 = vmatprep.subr.bf16.mxu0 0
        %845 = vmatpush1.bf16.msra.mxu0 0
        %846 = vmatprep.subr.bf16.mxu0 0
        %847 = vmatpush1.bf16.msra.mxu0 0
        %848 = vmatprep.subr.bf16.mxu0 0
        %849 = vmatpush1.bf16.msra.mxu0 0
        %850 = vmatprep.subr.bf16.mxu0 0
        %851 = vmatpush1.bf16.msra.mxu0 0
        %852 = vmatprep.subr.bf16.mxu0 0
        %853 = vmatpush1.bf16.msra.mxu0 0
        %854 = vmatprep.subr.bf16.mxu0 0
        %855 = vmatpush1.bf16.msra.mxu0 0
        %856 = vmatprep.subr.bf16.mxu0 0
        %857 = vmatpush1.bf16.msra.mxu0 0
        %858 = vmatprep.mubr.bf16.mxu0 0
        %859 = vmatmul.mubr.bf16.gmra.mrb[0].mxu0 %v692
        %v860 = vpop.f32.mrb[0].mxu0
        %v861 = vadd.f32 %v812, %v860
        %v862 = vpop.f32.mrb[0].mxu0
        %v863 = vpop.f32.mrb[0].mxu0
        %v864 = vadd.f32 %v812, %v863
        %v865 = vpop.f32.mrb[0].mxu0
        %866 = vdwg.mxu0
        %s867 = scalar_lea.vmem %s4, 48
        %v868 = vld [vmem:[%s867] sm:$0xf]
        %v869 = vld [vmem:[%s867 + $0x4] sm:$0xf]
        %v870 = vld [vmem:[%s867 + $0x8] sm:$0xf]
        %v871 = vld [vmem:[%s867 + $0xc] sm:$0xf]
        %s872 = scalar_lea.vmem %s5, 3
        %v873 = vld [vmem:[%s872] sm:$0x1]
        %v875 = vlaneseq
        %v876 = vshrl.u32 %v875, 7
        %v877 = vsub.s32 0, %v876
        %v878 = vrot.slane %v873, %v877
        %v884 = vunpack.c.l.b16 %v868
        %v885 = vunpack.c.l.b16 %v869
        %v886 = vunpack.c.l.b16 %v870
        %v887 = vunpack.c.l.b16 %v871
        %v888 = vpack.c.b16 %v885, %v884
        %v889 = vpack.c.b16 %v887, %v886
        %892 = vmatprep.subr.bf16.mxu0 0
        %893 = vmatpush1.bf16.msra.mxu0 %v888
        %894 = vmatprep.subr.bf16.mxu0 0
        %895 = vmatpush1.bf16.msra.mxu0 %v889
        %896 = vmatprep.subr.bf16.mxu0 0
        %897 = vmatpush1.bf16.msra.mxu0 0
        %898 = vmatprep.subr.bf16.mxu0 0
        %899 = vmatpush1.bf16.msra.mxu0 0
        %900 = vmatprep.subr.bf16.mxu0 0
        %901 = vmatpush1.bf16.msra.mxu0 0
        %902 = vmatprep.subr.bf16.mxu0 0
        %903 = vmatpush1.bf16.msra.mxu0 0
        %904 = vmatprep.subr.bf16.mxu0 0
        %905 = vmatpush1.bf16.msra.mxu0 0
        %906 = vmatprep.subr.bf16.mxu0 0
        %907 = vmatpush1.bf16.msra.mxu0 0
        %908 = vmatprep.subr.bf16.mxu0 0
        %909 = vmatpush1.bf16.msra.mxu0 0
        %910 = vmatprep.subr.bf16.mxu0 0
        %911 = vmatpush1.bf16.msra.mxu0 0
        %912 = vmatprep.subr.bf16.mxu0 0
        %913 = vmatpush1.bf16.msra.mxu0 0
        %914 = vmatprep.subr.bf16.mxu0 0
        %915 = vmatpush1.bf16.msra.mxu0 0
        %916 = vmatprep.subr.bf16.mxu0 0
        %917 = vmatpush1.bf16.msra.mxu0 0
        %918 = vmatprep.subr.bf16.mxu0 0
        %919 = vmatpush1.bf16.msra.mxu0 0
        %920 = vmatprep.subr.bf16.mxu0 0
        %921 = vmatpush1.bf16.msra.mxu0 0
        %922 = vmatprep.subr.bf16.mxu0 0
        %923 = vmatpush1.bf16.msra.mxu0 0
        %924 = vmatprep.mubr.bf16.mxu0 0
        %925 = vmatmul.mubr.bf16.gmra.mrb[0].mxu0 %v692
        %v926 = vpop.f32.mrb[0].mxu0
        %v927 = vadd.f32 %v878, %v926
        %v928 = vpop.f32.mrb[0].mxu0
        %v929 = vpop.f32.mrb[0].mxu0
        %v930 = vadd.f32 %v878, %v929
        %v931 = vpop.f32.mrb[0].mxu0
        %932 = vdwg.mxu0
        %v933 = vld [vmem:[%s6] sm:$0xff]
        %v934 = vld [vmem:[%s6 + $0x8] sm:$0xff]
        %v935 = vld [vmem:[%s6 + $0x10] sm:$0xff]
        %v936 = vld [vmem:[%s6 + $0x18] sm:$0xff]
        %v937 = vld [vmem:[%s7] sm:$0xff]
        %v938 = vld [vmem:[%s7 + $0x8] sm:$0xff]
        %v939 = vld [vmem:[%s7 + $0x10] sm:$0xff]
        %v940 = vld [vmem:[%s7 + $0x18] sm:$0xff]
        %v941 = vld [vmem:[%s608] sm:$0xff]
        %v942 = vld [vmem:[%s608 + $0x8] sm:$0xff]
        %v943 = vld [vmem:[%s608 + $0x10] sm:$0xff]
        %v944 = vld [vmem:[%s608 + $0x18] sm:$0xff]
        %v945 = vunpack.c.l.bf16 %v941
        %v946 = vunpack.c.h.bf16 %v941
        %v947 = vunpack.c.l.bf16 %v942
        %v948 = vunpack.c.h.bf16 %v942
        %v949 = vunpack.c.l.bf16 %v943
        %v950 = vunpack.c.h.bf16 %v943
        %v951 = vunpack.c.l.bf16 %v944
        %v952 = vunpack.c.h.bf16 %v944
        %v953 = vadd.f32 %v945, %v946
        %v954 = vadd.f32 %v953, %v947
        %v955 = vadd.f32 %v954, %v948
        %v956 = vadd.f32 %v955, %v949
        %v957 = vadd.f32 %v956, %v950
        %v958 = vadd.f32 %v957, %v951
        %v959 = vadd.f32 %v958, %v952
        %960 = vadd.xlane.f32.xlu0 %v959
        %v961 = vpop.xlane.xlu0 %960
        %v962 = vrot.slane %v961, 4
        %v963 = vadd.f32 %v961, %v962
        %v964 = vrot.slane %v963, 2
        %v965 = vadd.f32 %v963, %v964
        %v966 = vrot.slane %v965, 1
        %v967 = vadd.f32 %v965, %v966
        %s968 = vtos %v967
        %v969 = vrcp.pop 8192.0
        %s970 = vtos %v969
        %s971 = smul.f32 %s968, %s970
        %v972 = vstv %s971
        %v973 = vsub.f32 %v945, %v972
        %v974 = vsub.f32 %v946, %v972
        %v975 = vsub.f32 %v947, %v972
        %v976 = vsub.f32 %v948, %v972
        %v977 = vsub.f32 %v949, %v972
        %v978 = vsub.f32 %v950, %v972
        %v979 = vsub.f32 %v951, %v972
        %v980 = vsub.f32 %v952, %v972
        %v981 = vmul.f32 %v973, %v973
        %v982 = vmul.f32 %v974, %v974
        %v983 = vmul.f32 %v975, %v975
        %v984 = vmul.f32 %v976, %v976
        %v985 = vmul.f32 %v977, %v977
        %v986 = vmul.f32 %v978, %v978
        %v987 = vmul.f32 %v979, %v979
        %v988 = vmul.f32 %v980, %v980
        %v989 = vadd.f32 %v981, %v982
        %v990 = vadd.f32 %v989, %v983
        %v991 = vadd.f32 %v990, %v984
        %v992 = vadd.f32 %v991, %v985
        %v993 = vadd.f32 %v992, %v986
        %v994 = vadd.f32 %v993, %v987
        %v995 = vadd.f32 %v994, %v988
        %996 = vadd.xlane.f32.xlu0 %v995
        %v997 = vpop.xlane.xlu0 %996
        %v998 = vrot.slane %v997, 4
        %v999 = vadd.f32 %v997, %v998
        %v1000 = vrot.slane %v999, 2
        %v1001 = vadd.f32 %v999, %v1000
        %v1002 = vrot.slane %v1001, 1
        %v1003 = vadd.f32 %v1001, %v1002
        %s1004 = vtos %v1003
        %v1005 = vrcp.pop 8192.0
        %s1006 = vtos %v1005
        %s1007 = smul.f32 %s1004, %s1006
        %s1008 = sadd.f32 %s1007, 1e-05
        %v1009 = vstv %s1008
        %v1010 = vrsqrt.pop %v1009
        %s1011 = vtos %v1010
        %v1012 = vstv %s1011
        %v1013 = vmul.f32 %v973, %v1012
        %v1014 = vmul.f32 %v974, %v1012
        %v1015 = vmul.f32 %v975, %v1012
        %v1016 = vmul.f32 %v976, %v1012
        %v1017 = vmul.f32 %v977, %v1012
        %v1018 = vmul.f32 %v978, %v1012
        %v1019 = vmul.f32 %v979, %v1012
        %v1020 = vmul.f32 %v980, %v1012
        %1022 = vset.pattern.permute.xlu0 0
        %1023 = vperm.xlu0 %1022, %v933
        %v1024 = vpop.permute.xlu0 %1023
        %1027 = vset.pattern.permute.xlu0 0
        %1028 = vperm.xlu0 %1027, %v934
        %v1029 = vpop.permute.xlu0 %1028
        %1032 = vset.pattern.permute.xlu0 0
        %1033 = vperm.xlu0 %1032, %v935
        %v1034 = vpop.permute.xlu0 %1033
        %1037 = vset.pattern.permute.xlu0 0
        %1038 = vperm.xlu0 %1037, %v936
        %v1039 = vpop.permute.xlu0 %1038
        %v1041 = vmul.f32 %v1013, %v1024
        %v1042 = vmul.f32 %v1014, %v1024
        %v1043 = vmul.f32 %v1015, %v1029
        %v1044 = vmul.f32 %v1016, %v1029
        %v1045 = vmul.f32 %v1017, %v1034
        %v1046 = vmul.f32 %v1018, %v1034
        %v1047 = vmul.f32 %v1019, %v1039
        %v1048 = vmul.f32 %v1020, %v1039
        %1050 = vset.pattern.permute.xlu0 0
        %1051 = vperm.xlu0 %1050, %v937
        %v1052 = vpop.permute.xlu0 %1051
        %1055 = vset.pattern.permute.xlu0 0
        %1056 = vperm.xlu0 %1055, %v938
        %v1057 = vpop.permute.xlu0 %1056
        %1060 = vset.pattern.permute.xlu0 0
        %1061 = vperm.xlu0 %1060, %v939
        %v1062 = vpop.permute.xlu0 %1061
        %1065 = vset.pattern.permute.xlu0 0
        %1066 = vperm.xlu0 %1065, %v940
        %v1067 = vpop.permute.xlu0 %1066
        %v1069 = vadd.f32 %v1041, %v1052
        %v1070 = vadd.f32 %v1042, %v1052
        %v1071 = vadd.f32 %v1043, %v1057
        %v1072 = vadd.f32 %v1044, %v1057
        %v1073 = vadd.f32 %v1045, %v1062
        %v1074 = vadd.f32 %v1046, %v1062
        %v1075 = vadd.f32 %v1047, %v1067
        %v1076 = vadd.f32 %v1048, %v1067
        %v1077 = vpack.c.bf16 %v1071, %v1069
        %v1078 = vpack.c.bf16 %v1072, %v1070
        %v1079 = vpack.c.bf16 %v1075, %v1073
        %v1080 = vpack.c.bf16 %v1076, %v1074
        %s1081 = scalar_lea.vmem %s608, 32
        %v1082 = vld [vmem:[%s1081] sm:$0xff]
        %v1083 = vld [vmem:[%s1081 + $0x8] sm:$0xff]
        %v1084 = vld [vmem:[%s1081 + $0x10] sm:$0xff]
        %v1085 = vld [vmem:[%s1081 + $0x18] sm:$0xff]
        %v1086 = vunpack.c.l.bf16 %v1082
        %v1087 = vunpack.c.h.bf16 %v1082
        %v1088 = vunpack.c.l.bf16 %v1083
        %v1089 = vunpack.c.h.bf16 %v1083
        %v1090 = vunpack.c.l.bf16 %v1084
        %v1091 = vunpack.c.h.bf16 %v1084
        %v1092 = vunpack.c.l.bf16 %v1085
        %v1093 = vunpack.c.h.bf16 %v1085
        %v1094 = vadd.f32 %v1086, %v1087
        %v1095 = vadd.f32 %v1094, %v1088
        %v1096 = vadd.f32 %v1095, %v1089
        %v1097 = vadd.f32 %v1096, %v1090
        %v1098 = vadd.f32 %v1097, %v1091
        %v1099 = vadd.f32 %v1098, %v1092
        %v1100 = vadd.f32 %v1099, %v1093
        %1101 = vadd.xlane.f32.xlu0 %v1100
        %v1102 = vpop.xlane.xlu0 %1101
        %v1103 = vrot.slane %v1102, 4
        %v1104 = vadd.f32 %v1102, %v1103
        %v1105 = vrot.slane %v1104, 2
        %v1106 = vadd.f32 %v1104, %v1105
        %v1107 = vrot.slane %v1106, 1
        %v1108 = vadd.f32 %v1106, %v1107
        %s1109 = vtos %v1108
        %v1110 = vrcp.pop 8192.0
        %s1111 = vtos %v1110
        %s1112 = smul.f32 %s1109, %s1111
        %v1113 = vstv %s1112
        %v1114 = vsub.f32 %v1086, %v1113
        %v1115 = vsub.f32 %v1087, %v1113
        %v1116 = vsub.f32 %v1088, %v1113
        %v1117 = vsub.f32 %v1089, %v1113
        %v1118 = vsub.f32 %v1090, %v1113
        %v1119 = vsub.f32 %v1091, %v1113
        %v1120 = vsub.f32 %v1092, %v1113
        %v1121 = vsub.f32 %v1093, %v1113
        %v1122 = vmul.f32 %v1114, %v1114
        %v1123 = vmul.f32 %v1115, %v1115
        %v1124 = vmul.f32 %v1116, %v1116
        %v1125 = vmul.f32 %v1117, %v1117
        %v1126 = vmul.f32 %v1118, %v1118
        %v1127 = vmul.f32 %v1119, %v1119
        %v1128 = vmul.f32 %v1120, %v1120
        %v1129 = vmul.f32 %v1121, %v1121
        %v1130 = vadd.f32 %v1122, %v1123
        %v1131 = vadd.f32 %v1130, %v1124
        %v1132 = vadd.f32 %v1131, %v1125
        %v1133 = vadd.f32 %v1132, %v1126
        %v1134 = vadd.f32 %v1133, %v1127
        %v1135 = vadd.f32 %v1134, %v1128
        %v1136 = vadd.f32 %v1135, %v1129
        %1137 = vadd.xlane.f32.xlu0 %v1136
        %v1138 = vpop.xlane.xlu0 %1137
        %v1139 = vrot.slane %v1138, 4
        %v1140 = vadd.f32 %v1138, %v1139
        %v1141 = vrot.slane %v1140, 2
        %v1142 = vadd.f32 %v1140, %v1141
        %v1143 = vrot.slane %v1142, 1
        %v1144 = vadd.f32 %v1142, %v1143
        %s1145 = vtos %v1144
        %v1146 = vrcp.pop 8192.0
        %s1147 = vtos %v1146
        %s1148 = smul.f32 %s1145, %s1147
        %s1149 = sadd.f32 %s1148, 1e-05
        %v1150 = vstv %s1149
        %v1151 = vrsqrt.pop %v1150
        %s1152 = vtos %v1151
        %v1153 = vstv %s1152
        %v1154 = vmul.f32 %v1114, %v1153
        %v1155 = vmul.f32 %v1115, %v1153
        %v1156 = vmul.f32 %v1116, %v1153
        %v1157 = vmul.f32 %v1117, %v1153
        %v1158 = vmul.f32 %v1118, %v1153
        %v1159 = vmul.f32 %v1119, %v1153
        %v1160 = vmul.f32 %v1120, %v1153
        %v1161 = vmul.f32 %v1121, %v1153
        %v1162 = vmul.f32 %v1154, %v1024
        %v1163 = vmul.f32 %v1155, %v1024
        %v1164 = vmul.f32 %v1156, %v1029
        %v1165 = vmul.f32 %v1157, %v1029
        %v1166 = vmul.f32 %v1158, %v1034
        %v1167 = vmul.f32 %v1159, %v1034
        %v1168 = vmul.f32 %v1160, %v1039
        %v1169 = vmul.f32 %v1161, %v1039
        %v1170 = vadd.f32 %v1162, %v1052
        %v1171 = vadd.f32 %v1163, %v1052
        %v1172 = vadd.f32 %v1164, %v1057
        %v1173 = vadd.f32 %v1165, %v1057
        %v1174 = vadd.f32 %v1166, %v1062
        %v1175 = vadd.f32 %v1167, %v1062
        %v1176 = vadd.f32 %v1168, %v1067
        %v1177 = vadd.f32 %v1169, %v1067
        %v1178 = vpack.c.bf16 %v1172, %v1170
        %v1179 = vpack.c.bf16 %v1173, %v1171
        %v1180 = vpack.c.bf16 %v1176, %v1174
        %v1181 = vpack.c.bf16 %v1177, %v1175
        %v1182 = vld [vmem:[%s8] sm:$0xf]
        %v1183 = vld [vmem:[%s8 + $0x4] sm:$0xf]
        %v1184 = vld [vmem:[%s8 + $0x8] sm:$0xf]
        %v1185 = vld [vmem:[%s8 + $0xc] sm:$0xf]
        %v1186 = vld [vmem:[%s8 + $0x10] sm:$0xf]
        %v1187 = vld [vmem:[%s8 + $0x14] sm:$0xf]
        %v1188 = vld [vmem:[%s8 + $0x18] sm:$0xf]
        %v1189 = vld [vmem:[%s8 + $0x1c] sm:$0xf]
        %v1190 = vld [vmem:[%s9] sm:$0xff]
        %v1191 = vld [vmem:[%s9 + $0x8] sm:$0xff]
        %v1192 = vld [vmem:[%s9 + $0x10] sm:$0xff]
        %v1193 = vld [vmem:[%s9 + $0x18] sm:$0xff]
        %v1194 = vld [vmem:[%s9 + $0x20] sm:$0xff]
        %v1195 = vld [vmem:[%s9 + $0x28] sm:$0xff]
        %v1196 = vld [vmem:[%s9 + $0x30] sm:$0xff]
        %v1197 = vld [vmem:[%s9 + $0x38] sm:$0xff]
        %1199 = vset.pattern.permute.xlu0 0
        %1200 = vperm.xlu0 %1199, %v1190
        %v1201 = vpop.permute.xlu0 %1200
        %1204 = vset.pattern.permute.xlu0 0
        %1205 = vperm.xlu0 %1204, %v1191
        %v1206 = vpop.permute.xlu0 %1205
        %1209 = vset.pattern.permute.xlu0 0
        %1210 = vperm.xlu0 %1209, %v1192
        %v1211 = vpop.permute.xlu0 %1210
        %1214 = vset.pattern.permute.xlu0 0
        %1215 = vperm.xlu0 %1214, %v1193
        %v1216 = vpop.permute.xlu0 %1215
        %1219 = vset.pattern.permute.xlu0 0
        %1220 = vperm.xlu0 %1219, %v1194
        %v1221 = vpop.permute.xlu0 %1220
        %1224 = vset.pattern.permute.xlu0 0
        %1225 = vperm.xlu0 %1224, %v1195
        %v1226 = vpop.permute.xlu0 %1225
        %1229 = vset.pattern.permute.xlu0 0
        %1230 = vperm.xlu0 %1229, %v1196
        %v1231 = vpop.permute.xlu0 %1230
        %1234 = vset.pattern.permute.xlu0 0
        %1235 = vperm.xlu0 %1234, %v1197
        %v1236 = vpop.permute.xlu0 %1235
        %v1246 = vunpack.c.l.b16 %v1182
        %v1247 = vunpack.c.l.b16 %v1183
        %v1248 = vunpack.c.l.b16 %v1184
        %v1249 = vunpack.c.l.b16 %v1185
        %v1250 = vunpack.c.l.b16 %v1186
        %v1251 = vunpack.c.l.b16 %v1187
        %v1252 = vunpack.c.l.b16 %v1188
        %v1253 = vunpack.c.l.b16 %v1189
        %v1254 = vpack.c.b16 %v1247, %v1246
        %v1255 = vpack.c.b16 %v1249, %v1248
        %v1256 = vpack.c.b16 %v1251, %v1250
        %v1257 = vpack.c.b16 %v1253, %v1252
        %v1259 = vsel %vm621, %v1254, 0
        %v1262 = vsel %vm621, %v1255, 0
        %v1265 = vsel %vm621, %v1256, 0
        %v1268 = vsel %vm621, %v1257, 0
        %1270 = vmatprep.subr.bf16.mxu0 %v1078
        %1271 = vmatpush1.bf16.msra.mxu0 %v1077
        %1272 = vmatprep.subr.bf16.mxu0 %v1080
        %1273 = vmatpush1.bf16.msra.mxu0 %v1079
        %1274 = vmatprep.subr.bf16.mxu0 0
        %1275 = vmatpush1.bf16.msra.mxu0 0
        %1276 = vmatprep.subr.bf16.mxu0 0
        %1277 = vmatpush1.bf16.msra.mxu0 0
        %1278 = vmatprep.subr.bf16.mxu0 0
        %1279 = vmatpush1.bf16.msra.mxu0 0
        %1280 = vmatprep.subr.bf16.mxu0 0
        %1281 = vmatpush1.bf16.msra.mxu0 0
        %1282 = vmatprep.subr.bf16.mxu0 0
        %1283 = vmatpush1.bf16.msra.mxu0 0
        %1284 = vmatprep.subr.bf16.mxu0 0
        %1285 = vmatpush1.bf16.msra.mxu0 0
        %1286 = vmatprep.subr.bf16.mxu0 0
        %1287 = vmatpush1.bf16.msra.mxu0 0
        %1288 = vmatprep.subr.bf16.mxu0 0
        %1289 = vmatpush1.bf16.msra.mxu0 0
        %1290 = vmatprep.subr.bf16.mxu0 0
        %1291 = vmatpush1.bf16.msra.mxu0 0
        %1292 = vmatprep.subr.bf16.mxu0 0
        %1293 = vmatpush1.bf16.msra.mxu0 0
        %1294 = vmatprep.subr.bf16.mxu0 0
        %1295 = vmatpush1.bf16.msra.mxu0 0
        %1296 = vmatprep.subr.bf16.mxu0 0
        %1297 = vmatpush1.bf16.msra.mxu0 0
        %1298 = vmatprep.subr.bf16.mxu0 0
        %1299 = vmatpush1.bf16.msra.mxu0 0
        %1300 = vmatprep.subr.bf16.mxu0 0
        %1301 = vmatpush1.bf16.msra.mxu0 0
        %1302 = vmatprep.mubr.bf16.mxu0 0
        %1303 = vmatmul.mubr.bf16.gmra.mrb[0].mxu0 %v1259
        %v1304 = vpop.f32.mrb[0].mxu0
        %v1305 = vadd.f32 %v1201, %v1304
        %v1306 = vpop.f32.mrb[0].mxu0
        %v1307 = vadd.f32 %v1201, %v1306
        %v1308 = vpop.f32.mrb[0].mxu0
        %v1309 = vadd.f32 %v1206, %v1308
        %v1310 = vpop.f32.mrb[0].mxu0
        %v1311 = vadd.f32 %v1206, %v1310
        %1312 = vmatprep.mubr.bf16.mxu0 0
        %1313 = vmatmul.mubr.bf16.gmra.mrb[0].mxu0 %v1262
        %v1314 = vpop.f32.mrb[0].mxu0
        %v1315 = vadd.f32 %v1211, %v1314
        %v1316 = vpop.f32.mrb[0].mxu0
        %v1317 = vadd.f32 %v1211, %v1316
        %v1318 = vpop.f32.mrb[0].mxu0
        %v1319 = vadd.f32 %v1216, %v1318
        %v1320 = vpop.f32.mrb[0].mxu0
        %v1321 = vadd.f32 %v1216, %v1320
        %1322 = vmatprep.mubr.bf16.mxu0 0
        %1323 = vmatmul.mubr.bf16.gmra.mrb[0].mxu0 %v1265
        %v1324 = vpop.f32.mrb[0].mxu0
        %v1325 = vadd.f32 %v1221, %v1324
        %v1326 = vpop.f32.mrb[0].mxu0
        %v1327 = vadd.f32 %v1221, %v1326
        %v1328 = vpop.f32.mrb[0].mxu0
        %v1329 = vadd.f32 %v1226, %v1328
        %v1330 = vpop.f32.mrb[0].mxu0
        %v1331 = vadd.f32 %v1226, %v1330
        %1332 = vmatprep.mubr.bf16.mxu0 0
        %1333 = vmatmul.mubr.bf16.gmra.mrb[0].mxu0 %v1268
        %v1334 = vpop.f32.mrb[0].mxu0
        %v1335 = vadd.f32 %v1231, %v1334
        %v1336 = vpop.f32.mrb[0].mxu0
        %v1337 = vadd.f32 %v1231, %v1336
        %v1338 = vpop.f32.mrb[0].mxu0
        %v1339 = vadd.f32 %v1236, %v1338
        %v1340 = vpop.f32.mrb[0].mxu0
        %v1341 = vadd.f32 %v1236, %v1340
        %1342 = vdwg.mxu0
        %1343 = vmatprep.subr.bf16.mxu0 %v1179
        %1344 = vmatpush1.bf16.msra.mxu0 %v1178
        %1345 = vmatprep.subr.bf16.mxu0 %v1181
        %1346 = vmatpush1.bf16.msra.mxu0 %v1180
        %1347 = vmatprep.subr.bf16.mxu0 0
        %1348 = vmatpush1.bf16.msra.mxu0 0
        %1349 = vmatprep.subr.bf16.mxu0 0
        %1350 = vmatpush1.bf16.msra.mxu0 0
        %1351 = vmatprep.subr.bf16.mxu0 0
        %1352 = vmatpush1.bf16.msra.mxu0 0
        %1353 = vmatprep.subr.bf16.mxu0 0
        %1354 = vmatpush1.bf16.msra.mxu0 0
        %1355 = vmatprep.subr.bf16.mxu0 0
        %1356 = vmatpush1.bf16.msra.mxu0 0
        %1357 = vmatprep.subr.bf16.mxu0 0
        %1358 = vmatpush1.bf16.msra.mxu0 0
        %1359 = vmatprep.subr.bf16.mxu0 0
        %1360 = vmatpush1.bf16.msra.mxu0 0
        %1361 = vmatprep.subr.bf16.mxu0 0
        %1362 = vmatpush1.bf16.msra.mxu0 0
        %1363 = vmatprep.subr.bf16.mxu0 0
        %1364 = vmatpush1.bf16.msra.mxu0 0
        %1365 = vmatprep.subr.bf16.mxu0 0
        %1366 = vmatpush1.bf16.msra.mxu0 0
        %1367 = vmatprep.subr.bf16.mxu0 0
        %1368 = vmatpush1.bf16.msra.mxu0 0
        %1369 = vmatprep.subr.bf16.mxu0 0
        %1370 = vmatpush1.bf16.msra.mxu0 0
        %1371 = vmatprep.subr.bf16.mxu0 0
        %1372 = vmatpush1.bf16.msra.mxu0 0
        %1373 = vmatprep.subr.bf16.mxu0 0
        %1374 = vmatpush1.bf16.msra.mxu0 0
        %1375 = vmatprep.mubr.bf16.mxu0 0
        %1376 = vmatmul.mubr.bf16.gmra.mrb[0].mxu0 %v1259
        %v1377 = vpop.f32.mrb[0].mxu0
        %v1378 = vadd.f32 %v1201, %v1377
        %v1379 = vpop.f32.mrb[0].mxu0
        %v1380 = vadd.f32 %v1201, %v1379
        %v1381 = vpop.f32.mrb[0].mxu0
        %v1382 = vadd.f32 %v1206, %v1381
        %v1383 = vpop.f32.mrb[0].mxu0
        %v1384 = vadd.f32 %v1206, %v1383
        %1385 = vmatprep.mubr.bf16.mxu0 0
        %1386 = vmatmul.mubr.bf16.gmra.mrb[0].mxu0 %v1262
        %v1387 = vpop.f32.mrb[0].mxu0
        %v1388 = vadd.f32 %v1211, %v1387
        %v1389 = vpop.f32.mrb[0].mxu0
        %v1390 = vadd.f32 %v1211, %v1389
        %v1391 = vpop.f32.mrb[0].mxu0
        %v1392 = vadd.f32 %v1216, %v1391
        %v1393 = vpop.f32.mrb[0].mxu0
        %v1394 = vadd.f32 %v1216, %v1393
        %1395 = vmatprep.mubr.bf16.mxu0 0
        %1396 = vmatmul.mubr.bf16.gmra.mrb[0].mxu0 %v1265
        %v1397 = vpop.f32.mrb[0].mxu0
        %v1398 = vadd.f32 %v1221, %v1397
        %v1399 = vpop.f32.mrb[0].mxu0
        %v1400 = vadd.f32 %v1221, %v1399
        %v1401 = vpop.f32.mrb[0].mxu0
        %v1402 = vadd.f32 %v1226, %v1401
        %v1403 = vpop.f32.mrb[0].mxu0
        %v1404 = vadd.f32 %v1226, %v1403
        %1405 = vmatprep.mubr.bf16.mxu0 0
        %1406 = vmatmul.mubr.bf16.gmra.mrb[0].mxu0 %v1268
        %v1407 = vpop.f32.mrb[0].mxu0
        %v1408 = vadd.f32 %v1231, %v1407
        %v1409 = vpop.f32.mrb[0].mxu0
        %v1410 = vadd.f32 %v1231, %v1409
        %v1411 = vpop.f32.mrb[0].mxu0
        %v1412 = vadd.f32 %v1236, %v1411
        %v1413 = vpop.f32.mrb[0].mxu0
        %v1414 = vadd.f32 %v1236, %v1413
        %1415 = vdwg.mxu0
        %v1416 = vpack.c.bf16 %v729, %v729
        %v1417 = vpack.c.bf16 %v1305, %v1305
        %v1418 = vpack.c.bf16 %v1307, %v1307
        %vm1419 = vcmask 64512
        %v1421 = vsel %vm1419, %v1416, 0
        %vm1423 = vcmask 1043456
        %v1425 = vsel %vm1423, %v1417, 0
        %v1428 = vsel %vm1423, %v1418, 0
        %1430 = vmatprep.subr.bf16.mxu0 %v1428
        %1431 = vmatpush1.bf16.msra.mxu0 %v1425
        %1432 = vmatprep.subr.bf16.mxu0 0
        %1433 = vmatpush1.bf16.msra.mxu0 0
        %1434 = vmatprep.subr.bf16.mxu0 0
        %1435 = vmatpush1.bf16.msra.mxu0 0
        %1436 = vmatprep.subr.bf16.mxu0 0
        %1437 = vmatpush1.bf16.msra.mxu0 0
        %1438 = vmatprep.subr.bf16.mxu0 0
        %1439 = vmatpush1.bf16.msra.mxu0 0
        %1440 = vmatprep.subr.bf16.mxu0 0
        %1441 = vmatpush1.bf16.msra.mxu0 0
        %1442 = vmatprep.subr.bf16.mxu0 0
        %1443 = vmatpush1.bf16.msra.mxu0 0
        %1444 = vmatprep.subr.bf16.mxu0 0
        %1445 = vmatpush1.bf16.msra.mxu0 0
        %1446 = vmatprep.subr.bf16.mxu0 0
        %1447 = vmatpush1.bf16.msra.mxu0 0
        %1448 = vmatprep.subr.bf16.mxu0 0
        %1449 = vmatpush1.bf16.msra.mxu0 0
        %1450 = vmatprep.subr.bf16.mxu0 0
        %1451 = vmatpush1.bf16.msra.mxu0 0
        %1452 = vmatprep.subr.bf16.mxu0 0
        %1453 = vmatpush1.bf16.msra.mxu0 0
        %1454 = vmatprep.subr.bf16.mxu0 0
        %1455 = vmatpush1.bf16.msra.mxu0 0
        %1456 = vmatprep.subr.bf16.mxu0 0
        %1457 = vmatpush1.bf16.msra.mxu0 0
        %1458 = vmatprep.subr.bf16.mxu0 0
        %1459 = vmatpush1.bf16.msra.mxu0 0
        %1460 = vmatprep.subr.bf16.mxu0 0
        %1461 = vmatpush1.bf16.msra.mxu0 0
        %1462 = vmatprep.mubr.bf16.mxu0 0
        %1463 = vmatmul.mubr.bf16.gmra.mrb[0].mxu0 %v1421
        %v1464 = vpop.f32.mrb[0].mxu0
        %v1465 = vadd.f32 0.0, %v1464
        %v1466 = vpop.f32.mrb[0].mxu0
        %v1467 = vadd.f32 0.0, %v1466
        %v1468 = vpop.f32.mrb[0].mxu0
        %v1469 = vpop.f32.mrb[0].mxu0
        %1470 = vdwg.mxu0
        %v1471 = vpack.c.bf16 %v795, %v795
        %v1472 = vpack.c.bf16 %v1309, %v1309
        %v1473 = vpack.c.bf16 %v1311, %v1311
        %v1475 = vsel %vm1419, %v1471, 0
        %v1478 = vsel %vm1423, %v1472, 0
        %v1481 = vsel %vm1423, %v1473, 0
        %1483 = vmatprep.subr.bf16.mxu0 %v1481
        %1484 = vmatpush1.bf16.msra.mxu0 %v1478
        %1485 = vmatprep.subr.bf16.mxu0 0
        %1486 = vmatpush1.bf16.msra.mxu0 0
        %1487 = vmatprep.subr.bf16.mxu0 0
        %1488 = vmatpush1.bf16.msra.mxu0 0
        %1489 = vmatprep.subr.bf16.mxu0 0
        %1490 = vmatpush1.bf16.msra.mxu0 0
        %1491 = vmatprep.subr.bf16.mxu0 0
        %1492 = vmatpush1.bf16.msra.mxu0 0
        %1493 = vmatprep.subr.bf16.mxu0 0
        %1494 = vmatpush1.bf16.msra.mxu0 0
        %1495 = vmatprep.subr.bf16.mxu0 0
        %1496 = vmatpush1.bf16.msra.mxu0 0
        %1497 = vmatprep.subr.bf16.mxu0 0
        %1498 = vmatpush1.bf16.msra.mxu0 0
        %1499 = vmatprep.subr.bf16.mxu0 0
        %1500 = vmatpush1.bf16.msra.mxu0 0
        %1501 = vmatprep.subr.bf16.mxu0 0
        %1502 = vmatpush1.bf16.msra.mxu0 0
        %1503 = vmatprep.subr.bf16.mxu0 0
        %1504 = vmatpush1.bf16.msra.mxu0 0
        %1505 = vmatprep.subr.bf16.mxu0 0
        %1506 = vmatpush1.bf16.msra.mxu0 0
        %1507 = vmatprep.subr.bf16.mxu0 0
        %1508 = vmatpush1.bf16.msra.mxu0 0
        %1509 = vmatprep.subr.bf16.mxu0 0
        %1510 = vmatpush1.bf16.msra.mxu0 0
        %1511 = vmatprep.subr.bf16.mxu0 0
        %1512 = vmatpush1.bf16.msra.mxu0 0
        %1513 = vmatprep.subr.bf16.mxu0 0
        %1514 = vmatpush1.bf16.msra.mxu0 0
        %1515 = vmatprep.mubr.bf16.mxu0 0
        %1516 = vmatmul.mubr.bf16.gmra.mrb[0].mxu0 %v1475
        %v1517 = vpop.f32.mrb[0].mxu0
        %v1518 = vadd.f32 0.0, %v1517
        %v1519 = vpop.f32.mrb[0].mxu0
        %v1520 = vadd.f32 0.0, %v1519
        %v1521 = vpop.f32.mrb[0].mxu0
        %v1522 = vpop.f32.mrb[0].mxu0
        %1523 = vdwg.mxu0
        %v1524 = vpack.c.bf16 %v861, %v861
        %v1525 = vpack.c.bf16 %v1315, %v1315
        %v1526 = vpack.c.bf16 %v1317, %v1317
        %v1528 = vsel %vm1419, %v1524, 0
        %v1531 = vsel %vm1423, %v1525, 0
        %v1534 = vsel %vm1423, %v1526, 0
        %1536 = vmatprep.subr.bf16.mxu0 %v1534
        %1537 = vmatpush1.bf16.msra.mxu0 %v1531
        %1538 = vmatprep.subr.bf16.mxu0 0
        %1539 = vmatpush1.bf16.msra.mxu0 0
        %1540 = vmatprep.subr.bf16.mxu0 0
        %1541 = vmatpush1.bf16.msra.mxu0 0
        %1542 = vmatprep.subr.bf16.mxu0 0
        %1543 = vmatpush1.bf16.msra.mxu0 0
        %1544 = vmatprep.subr.bf16.mxu0 0
        %1545 = vmatpush1.bf16.msra.mxu0 0
        %1546 = vmatprep.subr.bf16.mxu0 0
        %1547 = vmatpush1.bf16.msra.mxu0 0
        %1548 = vmatprep.subr.bf16.mxu0 0
        %1549 = vmatpush1.bf16.msra.mxu0 0
        %1550 = vmatprep.subr.bf16.mxu0 0
        %1551 = vmatpush1.bf16.msra.mxu0 0
        %1552 = vmatprep.subr.bf16.mxu0 0
        %1553 = vmatpush1.bf16.msra.mxu0 0
        %1554 = vmatprep.subr.bf16.mxu0 0
        %1555 = vmatpush1.bf16.msra.mxu0 0
        %1556 = vmatprep.subr.bf16.mxu0 0
        %1557 = vmatpush1.bf16.msra.mxu0 0
        %1558 = vmatprep.subr.bf16.mxu0 0
        %1559 = vmatpush1.bf16.msra.mxu0 0
        %1560 = vmatprep.subr.bf16.mxu0 0
        %1561 = vmatpush1.bf16.msra.mxu0 0
        %1562 = vmatprep.subr.bf16.mxu0 0
        %1563 = vmatpush1.bf16.msra.mxu0 0
        %1564 = vmatprep.subr.bf16.mxu0 0
        %1565 = vmatpush1.bf16.msra.mxu0 0
        %1566 = vmatprep.subr.bf16.mxu0 0
        %1567 = vmatpush1.bf16.msra.mxu0 0
        %1568 = vmatprep.mubr.bf16.mxu0 0
        %1569 = vmatmul.mubr.bf16.gmra.mrb[0].mxu0 %v1528
        %v1570 = vpop.f32.mrb[0].mxu0
        %v1571 = vadd.f32 0.0, %v1570
        %v1572 = vpop.f32.mrb[0].mxu0
        %v1573 = vadd.f32 0.0, %v1572
        %v1574 = vpop.f32.mrb[0].mxu0
        %v1575 = vpop.f32.mrb[0].mxu0
        %1576 = vdwg.mxu0
        %v1577 = vpack.c.bf16 %v927, %v927
        %v1578 = vpack.c.bf16 %v1319, %v1319
        %v1579 = vpack.c.bf16 %v1321, %v1321
        %v1581 = vsel %vm1419, %v1577, 0
        %v1584 = vsel %vm1423, %v1578, 0
        %v1587 = vsel %vm1423, %v1579, 0
        %1589 = vmatprep.subr.bf16.mxu0 %v1587
        %1590 = vmatpush1.bf16.msra.mxu0 %v1584
        %1591 = vmatprep.subr.bf16.mxu0 0
        %1592 = vmatpush1.bf16.msra.mxu0 0
        %1593 = vmatprep.subr.bf16.mxu0 0
        %1594 = vmatpush1.bf16.msra.mxu0 0
        %1595 = vmatprep.subr.bf16.mxu0 0
        %1596 = vmatpush1.bf16.msra.mxu0 0
        %1597 = vmatprep.subr.bf16.mxu0 0
        %1598 = vmatpush1.bf16.msra.mxu0 0
        %1599 = vmatprep.subr.bf16.mxu0 0
        %1600 = vmatpush1.bf16.msra.mxu0 0
        %1601 = vmatprep.subr.bf16.mxu0 0
        %1602 = vmatpush1.bf16.msra.mxu0 0
        %1603 = vmatprep.subr.bf16.mxu0 0
        %1604 = vmatpush1.bf16.msra.mxu0 0
        %1605 = vmatprep.subr.bf16.mxu0 0
        %1606 = vmatpush1.bf16.msra.mxu0 0
        %1607 = vmatprep.subr.bf16.mxu0 0
        %1608 = vmatpush1.bf16.msra.mxu0 0
        %1609 = vmatprep.subr.bf16.mxu0 0
        %1610 = vmatpush1.bf16.msra.mxu0 0
        %1611 = vmatprep.subr.bf16.mxu0 0
        %1612 = vmatpush1.bf16.msra.mxu0 0
        %1613 = vmatprep.subr.bf16.mxu0 0
        %1614 = vmatpush1.bf16.msra.mxu0 0
        %1615 = vmatprep.subr.bf16.mxu0 0
        %1616 = vmatpush1.bf16.msra.mxu0 0
        %1617 = vmatprep.subr.bf16.mxu0 0
        %1618 = vmatpush1.bf16.msra.mxu0 0
        %1619 = vmatprep.subr.bf16.mxu0 0
        %1620 = vmatpush1.bf16.msra.mxu0 0
        %1621 = vmatprep.mubr.bf16.mxu0 0
        %1622 = vmatmul.mubr.bf16.gmra.mrb[0].mxu0 %v1581
        %v1623 = vpop.f32.mrb[0].mxu0
        %v1624 = vadd.f32 0.0, %v1623
        %v1625 = vpop.f32.mrb[0].mxu0
        %v1626 = vadd.f32 0.0, %v1625
        %v1627 = vpop.f32.mrb[0].mxu0
        %v1628 = vpop.f32.mrb[0].mxu0
        %1629 = vdwg.mxu0
        %v1630 = vpack.c.bf16 %v732, %v732
        %v1631 = vpack.c.bf16 %v1378, %v1378
        %v1632 = vpack.c.bf16 %v1380, %v1380
        %v1634 = vsel %vm1419, %v1630, 0
        %v1637 = vsel %vm1423, %v1631, 0
        %v1640 = vsel %vm1423, %v1632, 0
        %1642 = vmatprep.subr.bf16.mxu0 %v1640
        %1643 = vmatpush1.bf16.msra.mxu0 %v1637
        %1644 = vmatprep.subr.bf16.mxu0 0
        %1645 = vmatpush1.bf16.msra.mxu0 0
        %1646 = vmatprep.subr.bf16.mxu0 0
        %1647 = vmatpush1.bf16.msra.mxu0 0
        %1648 = vmatprep.subr.bf16.mxu0 0
        %1649 = vmatpush1.bf16.msra.mxu0 0
        %1650 = vmatprep.subr.bf16.mxu0 0
        %1651 = vmatpush1.bf16.msra.mxu0 0
        %1652 = vmatprep.subr.bf16.mxu0 0
        %1653 = vmatpush1.bf16.msra.mxu0 0
        %1654 = vmatprep.subr.bf16.mxu0 0
        %1655 = vmatpush1.bf16.msra.mxu0 0
        %1656 = vmatprep.subr.bf16.mxu0 0
        %1657 = vmatpush1.bf16.msra.mxu0 0
        %1658 = vmatprep.subr.bf16.mxu0 0
        %1659 = vmatpush1.bf16.msra.mxu0 0
        %1660 = vmatprep.subr.bf16.mxu0 0
        %1661 = vmatpush1.bf16.msra.mxu0 0
        %1662 = vmatprep.subr.bf16.mxu0 0
        %1663 = vmatpush1.bf16.msra.mxu0 0
        %1664 = vmatprep.subr.bf16.mxu0 0
        %1665 = vmatpush1.bf16.msra.mxu0 0
        %1666 = vmatprep.subr.bf16.mxu0 0
        %1667 = vmatpush1.bf16.msra.mxu0 0
        %1668 = vmatprep.subr.bf16.mxu0 0
        %1669 = vmatpush1.bf16.msra.mxu0 0
        %1670 = vmatprep.subr.bf16.mxu0 0
        %1671 = vmatpush1.bf16.msra.mxu0 0
        %1672 = vmatprep.subr.bf16.mxu0 0
        %1673 = vmatpush1.bf16.msra.mxu0 0
        %1674 = vmatprep.mubr.bf16.mxu0 0
        %1675 = vmatmul.mubr.bf16.gmra.mrb[0].mxu0 %v1634
        %v1676 = vpop.f32.mrb[0].mxu0
        %v1677 = vadd.f32 0.0, %v1676
        %v1678 = vpop.f32.mrb[0].mxu0
        %v1679 = vadd.f32 0.0, %v1678
        %v1680 = vpop.f32.mrb[0].mxu0
        %v1681 = vpop.f32.mrb[0].mxu0
        %1682 = vdwg.mxu0
        %v1683 = vpack.c.bf16 %v798, %v798
        %v1684 = vpack.c.bf16 %v1382, %v1382
        %v1685 = vpack.c.bf16 %v1384, %v1384
        %v1687 = vsel %vm1419, %v1683, 0
        %v1690 = vsel %vm1423, %v1684, 0
        %v1693 = vsel %vm1423, %v1685, 0
        %1695 = vmatprep.subr.bf16.mxu0 %v1693
        %1696 = vmatpush1.bf16.msra.mxu0 %v1690
        %1697 = vmatprep.subr.bf16.mxu0 0
        %1698 = vmatpush1.bf16.msra.mxu0 0
        %1699 = vmatprep.subr.bf16.mxu0 0
        %1700 = vmatpush1.bf16.msra.mxu0 0
        %1701 = vmatprep.subr.bf16.mxu0 0
        %1702 = vmatpush1.bf16.msra.mxu0 0
        %1703 = vmatprep.subr.bf16.mxu0 0
        %1704 = vmatpush1.bf16.msra.mxu0 0
        %1705 = vmatprep.subr.bf16.mxu0 0
        %1706 = vmatpush1.bf16.msra.mxu0 0
        %1707 = vmatprep.subr.bf16.mxu0 0
        %1708 = vmatpush1.bf16.msra.mxu0 0
        %1709 = vmatprep.subr.bf16.mxu0 0
        %1710 = vmatpush1.bf16.msra.mxu0 0
        %1711 = vmatprep.subr.bf16.mxu0 0
        %1712 = vmatpush1.bf16.msra.mxu0 0
        %1713 = vmatprep.subr.bf16.mxu0 0
        %1714 = vmatpush1.bf16.msra.mxu0 0
        %1715 = vmatprep.subr.bf16.mxu0 0
        %1716 = vmatpush1.bf16.msra.mxu0 0
        %1717 = vmatprep.subr.bf16.mxu0 0
        %1718 = vmatpush1.bf16.msra.mxu0 0
        %1719 = vmatprep.subr.bf16.mxu0 0
        %1720 = vmatpush1.bf16.msra.mxu0 0
        %1721 = vmatprep.subr.bf16.mxu0 0
        %1722 = vmatpush1.bf16.msra.mxu0 0
        %1723 = vmatprep.subr.bf16.mxu0 0
        %1724 = vmatpush1.bf16.msra.mxu0 0
        %1725 = vmatprep.subr.bf16.mxu0 0
        %1726 = vmatpush1.bf16.msra.mxu0 0
        %1727 = vmatprep.mubr.bf16.mxu0 0
        %1728 = vmatmul.mubr.bf16.gmra.mrb[0].mxu0 %v1687
        %v1729 = vpop.f32.mrb[0].mxu0
        %v1730 = vadd.f32 0.0, %v1729
        %v1731 = vpop.f32.mrb[0].mxu0
        %v1732 = vadd.f32 0.0, %v1731
        %v1733 = vpop.f32.mrb[0].mxu0
        %v1734 = vpop.f32.mrb[0].mxu0
        %1735 = vdwg.mxu0
        %v1736 = vpack.c.bf16 %v864, %v864
        %v1737 = vpack.c.bf16 %v1388, %v1388
        %v1738 = vpack.c.bf16 %v1390, %v1390
        %v1740 = vsel %vm1419, %v1736, 0
        %v1743 = vsel %vm1423, %v1737, 0
        %v1746 = vsel %vm1423, %v1738, 0
        %1748 = vmatprep.subr.bf16.mxu0 %v1746
        %1749 = vmatpush1.bf16.msra.mxu0 %v1743
        %1750 = vmatprep.subr.bf16.mxu0 0
        %1751 = vmatpush1.bf16.msra.mxu0 0
        %1752 = vmatprep.subr.bf16.mxu0 0
        %1753 = vmatpush1.bf16.msra.mxu0 0
        %1754 = vmatprep.subr.bf16.mxu0 0
        %1755 = vmatpush1.bf16.msra.mxu0 0
        %1756 = vmatprep.subr.bf16.mxu0 0
        %1757 = vmatpush1.bf16.msra.mxu0 0
        %1758 = vmatprep.subr.bf16.mxu0 0
        %1759 = vmatpush1.bf16.msra.mxu0 0
        %1760 = vmatprep.subr.bf16.mxu0 0
        %1761 = vmatpush1.bf16.msra.mxu0 0
        %1762 = vmatprep.subr.bf16.mxu0 0
        %1763 = vmatpush1.bf16.msra.mxu0 0
        %1764 = vmatprep.subr.bf16.mxu0 0
        %1765 = vmatpush1.bf16.msra.mxu0 0
        %1766 = vmatprep.subr.bf16.mxu0 0
        %1767 = vmatpush1.bf16.msra.mxu0 0
        %1768 = vmatprep.subr.bf16.mxu0 0
        %1769 = vmatpush1.bf16.msra.mxu0 0
        %1770 = vmatprep.subr.bf16.mxu0 0
        %1771 = vmatpush1.bf16.msra.mxu0 0
        %1772 = vmatprep.subr.bf16.mxu0 0
        %1773 = vmatpush1.bf16.msra.mxu0 0
        %1774 = vmatprep.subr.bf16.mxu0 0
        %1775 = vmatpush1.bf16.msra.mxu0 0
        %1776 = vmatprep.subr.bf16.mxu0 0
        %1777 = vmatpush1.bf16.msra.mxu0 0
        %1778 = vmatprep.subr.bf16.mxu0 0
        %1779 = vmatpush1.bf16.msra.mxu0 0
        %1780 = vmatprep.mubr.bf16.mxu0 0
        %1781 = vmatmul.mubr.bf16.gmra.mrb[0].mxu0 %v1740
        %v1782 = vpop.f32.mrb[0].mxu0
        %v1783 = vadd.f32 0.0, %v1782
        %v1784 = vpop.f32.mrb[0].mxu0
        %v1785 = vadd.f32 0.0, %v1784
        %v1786 = vpop.f32.mrb[0].mxu0
        %v1787 = vpop.f32.mrb[0].mxu0
        %1788 = vdwg.mxu0
        %v1789 = vpack.c.bf16 %v930, %v930
        %v1790 = vpack.c.bf16 %v1392, %v1392
        %v1791 = vpack.c.bf16 %v1394, %v1394
        %v1793 = vsel %vm1419, %v1789, 0
        %v1796 = vsel %vm1423, %v1790, 0
        %v1799 = vsel %vm1423, %v1791, 0
        %1801 = vmatprep.subr.bf16.mxu0 %v1799
        %1802 = vmatpush1.bf16.msra.mxu0 %v1796
        %1803 = vmatprep.subr.bf16.mxu0 0
        %1804 = vmatpush1.bf16.msra.mxu0 0
        %1805 = vmatprep.subr.bf16.mxu0 0
        %1806 = vmatpush1.bf16.msra.mxu0 0
        %1807 = vmatprep.subr.bf16.mxu0 0
        %1808 = vmatpush1.bf16.msra.mxu0 0
        %1809 = vmatprep.subr.bf16.mxu0 0
        %1810 = vmatpush1.bf16.msra.mxu0 0
        %1811 = vmatprep.subr.bf16.mxu0 0
        %1812 = vmatpush1.bf16.msra.mxu0 0
        %1813 = vmatprep.subr.bf16.mxu0 0
        %1814 = vmatpush1.bf16.msra.mxu0 0
        %1815 = vmatprep.subr.bf16.mxu0 0
        %1816 = vmatpush1.bf16.msra.mxu0 0
        %1817 = vmatprep.subr.bf16.mxu0 0
        %1818 = vmatpush1.bf16.msra.mxu0 0
        %1819 = vmatprep.subr.bf16.mxu0 0
        %1820 = vmatpush1.bf16.msra.mxu0 0
        %1821 = vmatprep.subr.bf16.mxu0 0
        %1822 = vmatpush1.bf16.msra.mxu0 0
        %1823 = vmatprep.subr.bf16.mxu0 0
        %1824 = vmatpush1.bf16.msra.mxu0 0
        %1825 = vmatprep.subr.bf16.mxu0 0
        %1826 = vmatpush1.bf16.msra.mxu0 0
        %1827 = vmatprep.subr.bf16.mxu0 0
        %1828 = vmatpush1.bf16.msra.mxu0 0
        %1829 = vmatprep.subr.bf16.mxu0 0
        %1830 = vmatpush1.bf16.msra.mxu0 0
        %1831 = vmatprep.subr.bf16.mxu0 0
        %1832 = vmatpush1.bf16.msra.mxu0 0
        %1833 = vmatprep.mubr.bf16.mxu0 0
        %1834 = vmatmul.mubr.bf16.gmra.mrb[0].mxu0 %v1793
        %v1835 = vpop.f32.mrb[0].mxu0
        %v1836 = vadd.f32 0.0, %v1835
        %v1837 = vpop.f32.mrb[0].mxu0
        %v1838 = vadd.f32 0.0, %v1837
        %v1839 = vpop.f32.mrb[0].mxu0
        %v1840 = vpop.f32.mrb[0].mxu0
        %1841 = vdwg.mxu0
        %v1842 = vmax.f32 %v1465, %v1467
        %1843 = vmax.xlane.f32.xlu0 %v1842
        %v1844 = vpop.xlane.xlu0 %1843
        %v1845 = vmax.f32 %v1518, %v1520
        %1846 = vmax.xlane.f32.xlu0 %v1845
        %v1847 = vpop.xlane.xlu0 %1846
        %v1848 = vmax.f32 %v1571, %v1573
        %1849 = vmax.xlane.f32.xlu0 %v1848
        %v1850 = vpop.xlane.xlu0 %1849
        %v1851 = vmax.f32 %v1624, %v1626
        %1852 = vmax.xlane.f32.xlu0 %v1851
        %v1853 = vpop.xlane.xlu0 %1852
        %v1854 = vmax.f32 %v1677, %v1679
        %1855 = vmax.xlane.f32.xlu0 %v1854
        %v1856 = vpop.xlane.xlu0 %1855
        %v1857 = vmax.f32 %v1730, %v1732
        %1858 = vmax.xlane.f32.xlu0 %v1857
        %v1859 = vpop.xlane.xlu0 %1858
        %v1860 = vmax.f32 %v1783, %v1785
        %1861 = vmax.xlane.f32.xlu0 %v1860
        %v1862 = vpop.xlane.xlu0 %1861
        %v1863 = vmax.f32 %v1836, %v1838
        %1864 = vmax.xlane.f32.xlu0 %v1863
        %v1865 = vpop.xlane.xlu0 %1864
        %v1866 = vsub.f32 %v1465, %v1844
        %v1867 = vsub.f32 %v1467, %v1844
        %v1868 = vsub.f32 %v1518, %v1847
        %v1869 = vsub.f32 %v1520, %v1847
        %v1870 = vsub.f32 %v1571, %v1850
        %v1871 = vsub.f32 %v1573, %v1850
        %v1872 = vsub.f32 %v1624, %v1853
        %v1873 = vsub.f32 %v1626, %v1853
        %v1874 = vsub.f32 %v1677, %v1856
        %v1875 = vsub.f32 %v1679, %v1856
        %v1876 = vsub.f32 %v1730, %v1859
        %v1877 = vsub.f32 %v1732, %v1859
        %v1878 = vsub.f32 %v1783, %v1862
        %v1879 = vsub.f32 %v1785, %v1862
        %v1880 = vsub.f32 %v1836, %v1865
        %v1881 = vsub.f32 %v1838, %v1865
        %v1882 = vmul.f32 %v1866, 1.442695
        %v1883 = vpow.pop %v1882
        %v1884 = vmul.f32 %v1867, 1.442695
        %v1885 = vpow.pop %v1884
        %v1886 = vmul.f32 %v1868, 1.442695
        %v1887 = vpow.pop %v1886
        %v1888 = vmul.f32 %v1869, 1.442695
        %v1889 = vpow.pop %v1888
        %v1890 = vmul.f32 %v1870, 1.442695
        %v1891 = vpow.pop %v1890
        %v1892 = vmul.f32 %v1871, 1.442695
        %v1893 = vpow.pop %v1892
        %v1894 = vmul.f32 %v1872, 1.442695
        %v1895 = vpow.pop %v1894
        %v1896 = vmul.f32 %v1873, 1.442695
        %v1897 = vpow.pop %v1896
        %v1898 = vmul.f32 %v1874, 1.442695
        %v1899 = vpow.pop %v1898
        %v1900 = vmul.f32 %v1875, 1.442695
        %v1901 = vpow.pop %v1900
        %v1902 = vmul.f32 %v1876, 1.442695
        %v1903 = vpow.pop %v1902
        %v1904 = vmul.f32 %v1877, 1.442695
        %v1905 = vpow.pop %v1904
        %v1906 = vmul.f32 %v1878, 1.442695
        %v1907 = vpow.pop %v1906
        %v1908 = vmul.f32 %v1879, 1.442695
        %v1909 = vpow.pop %v1908
        %v1910 = vmul.f32 %v1880, 1.442695
        %v1911 = vpow.pop %v1910
        %v1912 = vmul.f32 %v1881, 1.442695
        %v1913 = vpow.pop %v1912
        %v1914 = vadd.f32 %v1883, %v1885
        %1915 = vadd.xlane.f32.xlu0 %v1914
        %v1916 = vpop.xlane.xlu0 %1915
        %v1917 = vadd.f32 %v1887, %v1889
        %1918 = vadd.xlane.f32.xlu0 %v1917
        %v1919 = vpop.xlane.xlu0 %1918
        %v1920 = vadd.f32 %v1891, %v1893
        %1921 = vadd.xlane.f32.xlu0 %v1920
        %v1922 = vpop.xlane.xlu0 %1921
        %v1923 = vadd.f32 %v1895, %v1897
        %1924 = vadd.xlane.f32.xlu0 %v1923
        %v1925 = vpop.xlane.xlu0 %1924
        %v1926 = vadd.f32 %v1899, %v1901
        %1927 = vadd.xlane.f32.xlu0 %v1926
        %v1928 = vpop.xlane.xlu0 %1927
        %v1929 = vadd.f32 %v1903, %v1905
        %1930 = vadd.xlane.f32.xlu0 %v1929
        %v1931 = vpop.xlane.xlu0 %1930
        %v1932 = vadd.f32 %v1907, %v1909
        %1933 = vadd.xlane.f32.xlu0 %v1932
        %v1934 = vpop.xlane.xlu0 %1933
        %v1935 = vadd.f32 %v1911, %v1913
        %1936 = vadd.xlane.f32.xlu0 %v1935
        %v1937 = vpop.xlane.xlu0 %1936
        %v1938 = vrcp.pop %v1916
        %v1939 = vrcp.pop %v1919
        %v1940 = vrcp.pop %v1922
        %v1941 = vrcp.pop %v1925
        %v1942 = vrcp.pop %v1928
        %v1943 = vrcp.pop %v1931
        %v1944 = vrcp.pop %v1934
        %v1945 = vrcp.pop %v1937
        %v1946 = vmul.f32 %v1883, %v1938
        %v1947 = vmul.f32 %v1885, %v1938
        %v1948 = vmul.f32 %v1887, %v1939
        %v1949 = vmul.f32 %v1889, %v1939
        %v1950 = vmul.f32 %v1891, %v1940
        %v1951 = vmul.f32 %v1893, %v1940
        %v1952 = vmul.f32 %v1895, %v1941
        %v1953 = vmul.f32 %v1897, %v1941
        %v1954 = vmul.f32 %v1899, %v1942
        %v1955 = vmul.f32 %v1901, %v1942
        %v1956 = vmul.f32 %v1903, %v1943
        %v1957 = vmul.f32 %v1905, %v1943
        %v1958 = vmul.f32 %v1907, %v1944
        %v1959 = vmul.f32 %v1909, %v1944
        %v1960 = vmul.f32 %v1911, %v1945
        %v1961 = vmul.f32 %v1913, %v1945
        %v1962 = vpack.c.bf16 %v1948, %v1946
        %v1963 = vpack.c.bf16 %v1949, %v1947
        %v1964 = vpack.c.bf16 %v1952, %v1950
        %v1965 = vpack.c.bf16 %v1953, %v1951
        %v1966 = vpack.c.bf16 %v1956, %v1954
        %v1967 = vpack.c.bf16 %v1957, %v1955
        %v1968 = vpack.c.bf16 %v1960, %v1958
        %v1969 = vpack.c.bf16 %v1961, %v1959
        %v1970 = vld [vmem:[%s11] sm:$0x1]
        %v1972 = vlaneseq
        %v1973 = vshrl.u32 %v1972, 7
        %v1974 = vsub.s32 0, %v1973
        %v1975 = vrot.slane %v1970, %v1974
        %v1977 = vadd.f32 %v619, %v1975
        %v1978 = vadd.f32 %v620, %v1975
        %v1979 = vpack.c.bf16 %v1325, %v1325
        %v1980 = vpack.c.bf16 %v1327, %v1327
        %1981 = vmatprep.subr.bf16.mxu0 %v1980
        %1982 = vmatpush1.bf16.xpose.msra.mxu0 %v1979
        %1983 = vmatprep.subr.bf16.mxu0 0
        %1984 = vmatpush1.bf16.xpose.msra.mxu0 0
        %1985 = vmatprep.subr.bf16.mxu0 0
        %1986 = vmatpush1.bf16.xpose.msra.mxu0 0
        %1987 = vmatprep.subr.bf16.mxu0 0
        %1988 = vmatpush1.bf16.xpose.msra.mxu0 0
        %1989 = vmatprep.subr.bf16.mxu0 0
        %1990 = vmatpush1.bf16.xpose.msra.mxu0 0
        %1991 = vmatprep.subr.bf16.mxu0 0
        %1992 = vmatpush1.bf16.xpose.msra.mxu0 0
        %1993 = vmatprep.subr.bf16.mxu0 0
        %1994 = vmatpush1.bf16.xpose.msra.mxu0 0
        %1995 = vmatprep.subr.bf16.mxu0 0
        %1996 = vmatpush1.bf16.xpose.msra.mxu0 0
        %1997 = vmatprep.subr.bf16.mxu0 0
        %1998 = vmatpush1.bf16.xpose.msra.mxu0 0
        %1999 = vmatprep.subr.bf16.mxu0 0
        %2000 = vmatpush1.bf16.xpose.msra.mxu0 0
        %2001 = vmatprep.subr.bf16.mxu0 0
        %2002 = vmatpush1.bf16.xpose.msra.mxu0 0
        %2003 = vmatprep.subr.bf16.mxu0 0
        %2004 = vmatpush1.bf16.xpose.msra.mxu0 0
        %2005 = vmatprep.subr.bf16.mxu0 0
        %2006 = vmatpush1.bf16.xpose.msra.mxu0 0
        %2007 = vmatprep.subr.bf16.mxu0 0
        %2008 = vmatpush1.bf16.xpose.msra.mxu0 0
        %2009 = vmatprep.subr.bf16.mxu0 0
        %2010 = vmatpush1.bf16.xpose.msra.mxu0 0
        %2011 = vmatprep.subr.bf16.mxu0 0
        %2012 = vmatpush1.bf16.xpose.msra.mxu0 0
        %2013 = vmatprep.mubr.bf16.mxu0 %v1963
        %2014 = vmatmul.mubr.bf16.gmra.mrb[0].mxu0 %v1962
        %v2015 = vpop.f32.mrb[0].mxu0
        %v2016 = vadd.f32 0.0, %v2015
        %v2017 = vpop.f32.mrb[0].mxu0
        %v2018 = vpop.f32.mrb[0].mxu0
        %v2019 = vpop.f32.mrb[0].mxu0
        %2020 = vdwg.mxu0
        %v2021 = vpack.c.bf16 %v1398, %v1398
        %v2022 = vpack.c.bf16 %v1400, %v1400
        %2023 = vmatprep.subr.bf16.mxu0 %v2022
        %2024 = vmatpush1.bf16.xpose.msra.mxu0 %v2021
        %2025 = vmatprep.subr.bf16.mxu0 0
        %2026 = vmatpush1.bf16.xpose.msra.mxu0 0
        %2027 = vmatprep.subr.bf16.mxu0 0
        %2028 = vmatpush1.bf16.xpose.msra.mxu0 0
        %2029 = vmatprep.subr.bf16.mxu0 0
        %2030 = vmatpush1.bf16.xpose.msra.mxu0 0
        %2031 = vmatprep.subr.bf16.mxu0 0
        %2032 = vmatpush1.bf16.xpose.msra.mxu0 0
        %2033 = vmatprep.subr.bf16.mxu0 0
        %2034 = vmatpush1.bf16.xpose.msra.mxu0 0
        %2035 = vmatprep.subr.bf16.mxu0 0
        %2036 = vmatpush1.bf16.xpose.msra.mxu0 0
        %2037 = vmatprep.subr.bf16.mxu0 0
        %2038 = vmatpush1.bf16.xpose.msra.mxu0 0
        %2039 = vmatprep.subr.bf16.mxu0 0
        %2040 = vmatpush1.bf16.xpose.msra.mxu0 0
        %2041 = vmatprep.subr.bf16.mxu0 0
        %2042 = vmatpush1.bf16.xpose.msra.mxu0 0
        %2043 = vmatprep.subr.bf16.mxu0 0
        %2044 = vmatpush1.bf16.xpose.msra.mxu0 0
        %2045 = vmatprep.subr.bf16.mxu0 0
        %2046 = vmatpush1.bf16.xpose.msra.mxu0 0
        %2047 = vmatprep.subr.bf16.mxu0 0
        %2048 = vmatpush1.bf16.xpose.msra.mxu0 0
        %2049 = vmatprep.subr.bf16.mxu0 0
        %2050 = vmatpush1.bf16.xpose.msra.mxu0 0
        %2051 = vmatprep.subr.bf16.mxu0 0
        %2052 = vmatpush1.bf16.xpose.msra.mxu0 0
        %2053 = vmatprep.subr.bf16.mxu0 0
        %2054 = vmatpush1.bf16.xpose.msra.mxu0 0
        %2055 = vmatprep.mubr.bf16.mxu0 %v1967
        %2056 = vmatmul.mubr.bf16.gmra.mrb[0].mxu0 %v1966
        %v2057 = vpop.f32.mrb[0].mxu0
        %v2058 = vadd.f32 0.0, %v2057
        %v2059 = vpop.f32.mrb[0].mxu0
        %v2060 = vpop.f32.mrb[0].mxu0
        %v2061 = vpop.f32.mrb[0].mxu0
        %2062 = vdwg.mxu0
        %v2063 = vpack.c.bf16 %v2058, %v2016
        %v2064 = vld [vmem:[%s10] sm:$0xf]
        %v2066 = vsel %vm1419, %v2063, 0
        %v2069 = vsel %vm1423, %v2064, 0
        %2071 = vmatprep.subr.bf16.mxu0 0
        %2072 = vmatpush1.bf16.msra.mxu0 %v2069
        %2073 = vmatprep.subr.bf16.mxu0 0
        %2074 = vmatpush1.bf16.msra.mxu0 0
        %2075 = vmatprep.subr.bf16.mxu0 0
        %2076 = vmatpush1.bf16.msra.mxu0 0
        %2077 = vmatprep.subr.bf16.mxu0 0
        %2078 = vmatpush1.bf16.msra.mxu0 0
        %2079 = vmatprep.subr.bf16.mxu0 0
        %2080 = vmatpush1.bf16.msra.mxu0 0
        %2081 = vmatprep.subr.bf16.mxu0 0
        %2082 = vmatpush1.bf16.msra.mxu0 0
        %2083 = vmatprep.subr.bf16.mxu0 0
        %2084 = vmatpush1.bf16.msra.mxu0 0
        %2085 = vmatprep.subr.bf16.mxu0 0
        %2086 = vmatpush1.bf16.msra.mxu0 0
        %2087 = vmatprep.subr.bf16.mxu0 0
        %2088 = vmatpush1.bf16.msra.mxu0 0
        %2089 = vmatprep.subr.bf16.mxu0 0
        %2090 = vmatpush1.bf16.msra.mxu0 0
        %2091 = vmatprep.subr.bf16.mxu0 0
        %2092 = vmatpush1.bf16.msra.mxu0 0
        %2093 = vmatprep.subr.bf16.mxu0 0
        %2094 = vmatpush1.bf16.msra.mxu0 0
        %2095 = vmatprep.subr.bf16.mxu0 0
        %2096 = vmatpush1.bf16.msra.mxu0 0
        %2097 = vmatprep.subr.bf16.mxu0 0
        %2098 = vmatpush1.bf16.msra.mxu0 0
        %2099 = vmatprep.subr.bf16.mxu0 0
        %2100 = vmatpush1.bf16.msra.mxu0 0
        %2101 = vmatprep.subr.bf16.mxu0 0
        %2102 = vmatpush1.bf16.msra.mxu0 0
        %2103 = vmatprep.mubr.bf16.mxu0 0
        %2104 = vmatmul.mubr.bf16.gmra.mrb[0].mxu0 %v2066
        %v2105 = vpop.f32.mrb[0].mxu0
        %v2106 = vadd.f32 0.0, %v2105
        %v2107 = vpop.f32.mrb[0].mxu0
        %v2108 = vpop.f32.mrb[0].mxu0
        %v2109 = vadd.f32 0.0, %v2108
        %v2110 = vpop.f32.mrb[0].mxu0
        %2111 = vdwg.mxu0
        %v2112 = vadd.f32 %v1977, %v2106
        %v2113 = vadd.f32 %v1978, %v2109
        %v2114 = vpack.c.bf16 %v1329, %v1329
        %v2115 = vpack.c.bf16 %v1331, %v1331
        %v2118 = vrot.slane %v1962, 4
        %v2119 = vrot.slane %v1963, 4
        %2122 = vmatprep.subr.bf16.mxu0 %v2115
        %2123 = vmatpush1.bf16.xpose.msra.mxu0 %v2114
        %2124 = vmatprep.subr.bf16.mxu0 0
        %2125 = vmatpush1.bf16.xpose.msra.mxu0 0
        %2126 = vmatprep.subr.bf16.mxu0 0
        %2127 = vmatpush1.bf16.xpose.msra.mxu0 0
        %2128 = vmatprep.subr.bf16.mxu0 0
        %2129 = vmatpush1.bf16.xpose.msra.mxu0 0
        %2130 = vmatprep.subr.bf16.mxu0 0
        %2131 = vmatpush1.bf16.xpose.msra.mxu0 0
        %2132 = vmatprep.subr.bf16.mxu0 0
        %2133 = vmatpush1.bf16.xpose.msra.mxu0 0
        %2134 = vmatprep.subr.bf16.mxu0 0
        %2135 = vmatpush1.bf16.xpose.msra.mxu0 0
        %2136 = vmatprep.subr.bf16.mxu0 0
        %2137 = vmatpush1.bf16.xpose.msra.mxu0 0
        %2138 = vmatprep.subr.bf16.mxu0 0
        %2139 = vmatpush1.bf16.xpose.msra.mxu0 0
        %2140 = vmatprep.subr.bf16.mxu0 0
        %2141 = vmatpush1.bf16.xpose.msra.mxu0 0
        %2142 = vmatprep.subr.bf16.mxu0 0
        %2143 = vmatpush1.bf16.xpose.msra.mxu0 0
        %2144 = vmatprep.subr.bf16.mxu0 0
        %2145 = vmatpush1.bf16.xpose.msra.mxu0 0
        %2146 = vmatprep.subr.bf16.mxu0 0
        %2147 = vmatpush1.bf16.xpose.msra.mxu0 0
        %2148 = vmatprep.subr.bf16.mxu0 0
        %2149 = vmatpush1.bf16.xpose.msra.mxu0 0
        %2150 = vmatprep.subr.bf16.mxu0 0
        %2151 = vmatpush1.bf16.xpose.msra.mxu0 0
        %2152 = vmatprep.subr.bf16.mxu0 0
        %2153 = vmatpush1.bf16.xpose.msra.mxu0 0
        %2154 = vmatprep.mubr.bf16.mxu0 %v2119
        %2155 = vmatmul.mubr.bf16.gmra.mrb[0].mxu0 %v2118
        %v2156 = vpop.f32.mrb[0].mxu0
        %v2157 = vadd.f32 0.0, %v2156
        %v2158 = vpop.f32.mrb[0].mxu0
        %v2159 = vpop.f32.mrb[0].mxu0
        %v2160 = vpop.f32.mrb[0].mxu0
        %2161 = vdwg.mxu0
        %v2162 = vpack.c.bf16 %v1402, %v1402
        %v2163 = vpack.c.bf16 %v1404, %v1404
        %v2166 = vrot.slane %v1966, 4
        %v2167 = vrot.slane %v1967, 4
        %2170 = vmatprep.subr.bf16.mxu0 %v2163
        %2171 = vmatpush1.bf16.xpose.msra.mxu0 %v2162
        %2172 = vmatprep.subr.bf16.mxu0 0
        %2173 = vmatpush1.bf16.xpose.msra.mxu0 0
        %2174 = vmatprep.subr.bf16.mxu0 0
        %2175 = vmatpush1.bf16.xpose.msra.mxu0 0
        %2176 = vmatprep.subr.bf16.mxu0 0
        %2177 = vmatpush1.bf16.xpose.msra.mxu0 0
        %2178 = vmatprep.subr.bf16.mxu0 0
        %2179 = vmatpush1.bf16.xpose.msra.mxu0 0
        %2180 = vmatprep.subr.bf16.mxu0 0
        %2181 = vmatpush1.bf16.xpose.msra.mxu0 0
        %2182 = vmatprep.subr.bf16.mxu0 0
        %2183 = vmatpush1.bf16.xpose.msra.mxu0 0
        %2184 = vmatprep.subr.bf16.mxu0 0
        %2185 = vmatpush1.bf16.xpose.msra.mxu0 0
        %2186 = vmatprep.subr.bf16.mxu0 0
        %2187 = vmatpush1.bf16.xpose.msra.mxu0 0
        %2188 = vmatprep.subr.bf16.mxu0 0
        %2189 = vmatpush1.bf16.xpose.msra.mxu0 0
        %2190 = vmatprep.subr.bf16.mxu0 0
        %2191 = vmatpush1.bf16.xpose.msra.mxu0 0
        %2192 = vmatprep.subr.bf16.mxu0 0
        %2193 = vmatpush1.bf16.xpose.msra.mxu0 0
        %2194 = vmatprep.subr.bf16.mxu0 0
        %2195 = vmatpush1.bf16.xpose.msra.mxu0 0
        %2196 = vmatprep.subr.bf16.mxu0 0
        %2197 = vmatpush1.bf16.xpose.msra.mxu0 0
        %2198 = vmatprep.subr.bf16.mxu0 0
        %2199 = vmatpush1.bf16.xpose.msra.mxu0 0
        %2200 = vmatprep.subr.bf16.mxu0 0
        %2201 = vmatpush1.bf16.xpose.msra.mxu0 0
        %2202 = vmatprep.mubr.bf16.mxu0 %v2167
        %2203 = vmatmul.mubr.bf16.gmra.mrb[0].mxu0 %v2166
        %v2204 = vpop.f32.mrb[0].mxu0
        %v2205 = vadd.f32 0.0, %v2204
        %v2206 = vpop.f32.mrb[0].mxu0
        %v2207 = vpop.f32.mrb[0].mxu0
        %v2208 = vpop.f32.mrb[0].mxu0
        %2209 = vdwg.mxu0
        %v2210 = vpack.c.bf16 %v2205, %v2157
        %s2211 = scalar_lea.vmem %s10, 4
        %v2212 = vld [vmem:[%s2211] sm:$0xf]
        %v2214 = vsel %vm1419, %v2210, 0
        %v2217 = vsel %vm1423, %v2212, 0
        %2219 = vmatprep.subr.bf16.mxu0 0
        %2220 = vmatpush1.bf16.msra.mxu0 %v2217
        %2221 = vmatprep.subr.bf16.mxu0 0
        %2222 = vmatpush1.bf16.msra.mxu0 0
        %2223 = vmatprep.subr.bf16.mxu0 0
        %2224 = vmatpush1.bf16.msra.mxu0 0
        %2225 = vmatprep.subr.bf16.mxu0 0
        %2226 = vmatpush1.bf16.msra.mxu0 0
        %2227 = vmatprep.subr.bf16.mxu0 0
        %2228 = vmatpush1.bf16.msra.mxu0 0
        %2229 = vmatprep.subr.bf16.mxu0 0
        %2230 = vmatpush1.bf16.msra.mxu0 0
        %2231 = vmatprep.subr.bf16.mxu0 0
        %2232 = vmatpush1.bf16.msra.mxu0 0
        %2233 = vmatprep.subr.bf16.mxu0 0
        %2234 = vmatpush1.bf16.msra.mxu0 0
        %2235 = vmatprep.subr.bf16.mxu0 0
        %2236 = vmatpush1.bf16.msra.mxu0 0
        %2237 = vmatprep.subr.bf16.mxu0 0
        %2238 = vmatpush1.bf16.msra.mxu0 0
        %2239 = vmatprep.subr.bf16.mxu0 0
        %2240 = vmatpush1.bf16.msra.mxu0 0
        %2241 = vmatprep.subr.bf16.mxu0 0
        %2242 = vmatpush1.bf16.msra.mxu0 0
        %2243 = vmatprep.subr.bf16.mxu0 0
        %2244 = vmatpush1.bf16.msra.mxu0 0
        %2245 = vmatprep.subr.bf16.mxu0 0
        %2246 = vmatpush1.bf16.msra.mxu0 0
        %2247 = vmatprep.subr.bf16.mxu0 0
        %2248 = vmatpush1.bf16.msra.mxu0 0
        %2249 = vmatprep.subr.bf16.mxu0 0
        %2250 = vmatpush1.bf16.msra.mxu0 0
        %2251 = vmatprep.mubr.bf16.mxu0 0
        %2252 = vmatmul.mubr.bf16.gmra.mrb[0].mxu0 %v2214
        %v2253 = vpop.f32.mrb[0].mxu0
        %v2254 = vadd.f32 0.0, %v2253
        %v2255 = vpop.f32.mrb[0].mxu0
        %v2256 = vpop.f32.mrb[0].mxu0
        %v2257 = vadd.f32 0.0, %v2256
        %v2258 = vpop.f32.mrb[0].mxu0
        %2259 = vdwg.mxu0
        %v2260 = vadd.f32 %v2112, %v2254
        %v2261 = vadd.f32 %v2113, %v2257
        %v2262 = vpack.c.bf16 %v1335, %v1335
        %v2263 = vpack.c.bf16 %v1337, %v1337
        %2264 = vmatprep.subr.bf16.mxu0 %v2263
        %2265 = vmatpush1.bf16.xpose.msra.mxu0 %v2262
        %2266 = vmatprep.subr.bf16.mxu0 0
        %2267 = vmatpush1.bf16.xpose.msra.mxu0 0
        %2268 = vmatprep.subr.bf16.mxu0 0
        %2269 = vmatpush1.bf16.xpose.msra.mxu0 0
        %2270 = vmatprep.subr.bf16.mxu0 0
        %2271 = vmatpush1.bf16.xpose.msra.mxu0 0
        %2272 = vmatprep.subr.bf16.mxu0 0
        %2273 = vmatpush1.bf16.xpose.msra.mxu0 0
        %2274 = vmatprep.subr.bf16.mxu0 0
        %2275 = vmatpush1.bf16.xpose.msra.mxu0 0
        %2276 = vmatprep.subr.bf16.mxu0 0
        %2277 = vmatpush1.bf16.xpose.msra.mxu0 0
        %2278 = vmatprep.subr.bf16.mxu0 0
        %2279 = vmatpush1.bf16.xpose.msra.mxu0 0
        %2280 = vmatprep.subr.bf16.mxu0 0
        %2281 = vmatpush1.bf16.xpose.msra.mxu0 0
        %2282 = vmatprep.subr.bf16.mxu0 0
        %2283 = vmatpush1.bf16.xpose.msra.mxu0 0
        %2284 = vmatprep.subr.bf16.mxu0 0
        %2285 = vmatpush1.bf16.xpose.msra.mxu0 0
        %2286 = vmatprep.subr.bf16.mxu0 0
        %2287 = vmatpush1.bf16.xpose.msra.mxu0 0
        %2288 = vmatprep.subr.bf16.mxu0 0
        %2289 = vmatpush1.bf16.xpose.msra.mxu0 0
        %2290 = vmatprep.subr.bf16.mxu0 0
        %2291 = vmatpush1.bf16.xpose.msra.mxu0 0
        %2292 = vmatprep.subr.bf16.mxu0 0
        %2293 = vmatpush1.bf16.xpose.msra.mxu0 0
        %2294 = vmatprep.subr.bf16.mxu0 0
        %2295 = vmatpush1.bf16.xpose.msra.mxu0 0
        %2296 = vmatprep.mubr.bf16.mxu0 %v1965
        %2297 = vmatmul.mubr.bf16.gmra.mrb[0].mxu0 %v1964
        %v2298 = vpop.f32.mrb[0].mxu0
        %v2299 = vadd.f32 0.0, %v2298
        %v2300 = vpop.f32.mrb[0].mxu0
        %v2301 = vpop.f32.mrb[0].mxu0
        %v2302 = vpop.f32.mrb[0].mxu0
        %2303 = vdwg.mxu0
        %v2304 = vpack.c.bf16 %v1408, %v1408
        %v2305 = vpack.c.bf16 %v1410, %v1410
        %2306 = vmatprep.subr.bf16.mxu0 %v2305
        %2307 = vmatpush1.bf16.xpose.msra.mxu0 %v2304
        %2308 = vmatprep.subr.bf16.mxu0 0
        %2309 = vmatpush1.bf16.xpose.msra.mxu0 0
        %2310 = vmatprep.subr.bf16.mxu0 0
        %2311 = vmatpush1.bf16.xpose.msra.mxu0 0
        %2312 = vmatprep.subr.bf16.mxu0 0
        %2313 = vmatpush1.bf16.xpose.msra.mxu0 0
        %2314 = vmatprep.subr.bf16.mxu0 0
        %2315 = vmatpush1.bf16.xpose.msra.mxu0 0
        %2316 = vmatprep.subr.bf16.mxu0 0
        %2317 = vmatpush1.bf16.xpose.msra.mxu0 0
        %2318 = vmatprep.subr.bf16.mxu0 0
        %2319 = vmatpush1.bf16.xpose.msra.mxu0 0
        %2320 = vmatprep.subr.bf16.mxu0 0
        %2321 = vmatpush1.bf16.xpose.msra.mxu0 0
        %2322 = vmatprep.subr.bf16.mxu0 0
        %2323 = vmatpush1.bf16.xpose.msra.mxu0 0
        %2324 = vmatprep.subr.bf16.mxu0 0
        %2325 = vmatpush1.bf16.xpose.msra.mxu0 0
        %2326 = vmatprep.subr.bf16.mxu0 0
        %2327 = vmatpush1.bf16.xpose.msra.mxu0 0
        %2328 = vmatprep.subr.bf16.mxu0 0
        %2329 = vmatpush1.bf16.xpose.msra.mxu0 0
        %2330 = vmatprep.subr.bf16.mxu0 0
        %2331 = vmatpush1.bf16.xpose.msra.mxu0 0
        %2332 = vmatprep.subr.bf16.mxu0 0
        %2333 = vmatpush1.bf16.xpose.msra.mxu0 0
        %2334 = vmatprep.subr.bf16.mxu0 0
        %2335 = vmatpush1.bf16.xpose.msra.mxu0 0
        %2336 = vmatprep.subr.bf16.mxu0 0
        %2337 = vmatpush1.bf16.xpose.msra.mxu0 0
        %2338 = vmatprep.mubr.bf16.mxu0 %v1969
        %2339 = vmatmul.mubr.bf16.gmra.mrb[0].mxu0 %v1968
        %v2340 = vpop.f32.mrb[0].mxu0
        %v2341 = vadd.f32 0.0, %v2340
        %v2342 = vpop.f32.mrb[0].mxu0
        %v2343 = vpop.f32.mrb[0].mxu0
        %v2344 = vpop.f32.mrb[0].mxu0
        %2345 = vdwg.mxu0
        %v2346 = vpack.c.bf16 %v2341, %v2299
        %s2347 = scalar_lea.vmem %s10, 8
        %v2348 = vld [vmem:[%s2347] sm:$0xf]
        %v2350 = vsel %vm1419, %v2346, 0
        %v2353 = vsel %vm1423, %v2348, 0
        %2355 = vmatprep.subr.bf16.mxu0 0
        %2356 = vmatpush1.bf16.msra.mxu0 %v2353
        %2357 = vmatprep.subr.bf16.mxu0 0
        %2358 = vmatpush1.bf16.msra.mxu0 0
        %2359 = vmatprep.subr.bf16.mxu0 0
        %2360 = vmatpush1.bf16.msra.mxu0 0
        %2361 = vmatprep.subr.bf16.mxu0 0
        %2362 = vmatpush1.bf16.msra.mxu0 0
        %2363 = vmatprep.subr.bf16.mxu0 0
        %2364 = vmatpush1.bf16.msra.mxu0 0
        %2365 = vmatprep.subr.bf16.mxu0 0
        %2366 = vmatpush1.bf16.msra.mxu0 0
        %2367 = vmatprep.subr.bf16.mxu0 0
        %2368 = vmatpush1.bf16.msra.mxu0 0
        %2369 = vmatprep.subr.bf16.mxu0 0
        %2370 = vmatpush1.bf16.msra.mxu0 0
        %2371 = vmatprep.subr.bf16.mxu0 0
        %2372 = vmatpush1.bf16.msra.mxu0 0
        %2373 = vmatprep.subr.bf16.mxu0 0
        %2374 = vmatpush1.bf16.msra.mxu0 0
        %2375 = vmatprep.subr.bf16.mxu0 0
        %2376 = vmatpush1.bf16.msra.mxu0 0
        %2377 = vmatprep.subr.bf16.mxu0 0
        %2378 = vmatpush1.bf16.msra.mxu0 0
        %2379 = vmatprep.subr.bf16.mxu0 0
        %2380 = vmatpush1.bf16.msra.mxu0 0
        %2381 = vmatprep.subr.bf16.mxu0 0
        %2382 = vmatpush1.bf16.msra.mxu0 0
        %2383 = vmatprep.subr.bf16.mxu0 0
        %2384 = vmatpush1.bf16.msra.mxu0 0
        %2385 = vmatprep.subr.bf16.mxu0 0
        %2386 = vmatpush1.bf16.msra.mxu0 0
        %2387 = vmatprep.mubr.bf16.mxu0 0
        %2388 = vmatmul.mubr.bf16.gmra.mrb[0].mxu0 %v2350
        %v2389 = vpop.f32.mrb[0].mxu0
        %v2390 = vadd.f32 0.0, %v2389
        %v2391 = vpop.f32.mrb[0].mxu0
        %v2392 = vpop.f32.mrb[0].mxu0
        %v2393 = vadd.f32 0.0, %v2392
        %v2394 = vpop.f32.mrb[0].mxu0
        %2395 = vdwg.mxu0
        %v2396 = vadd.f32 %v2260, %v2390
        %v2397 = vadd.f32 %v2261, %v2393
        %v2398 = vpack.c.bf16 %v1339, %v1339
        %v2399 = vpack.c.bf16 %v1341, %v1341
        %v2402 = vrot.slane %v1964, 4
        %v2403 = vrot.slane %v1965, 4
        %2406 = vmatprep.subr.bf16.mxu0 %v2399
        %2407 = vmatpush1.bf16.xpose.msra.mxu0 %v2398
        %2408 = vmatprep.subr.bf16.mxu0 0
        %2409 = vmatpush1.bf16.xpose.msra.mxu0 0
        %2410 = vmatprep.subr.bf16.mxu0 0
        %2411 = vmatpush1.bf16.xpose.msra.mxu0 0
        %2412 = vmatprep.subr.bf16.mxu0 0
        %2413 = vmatpush1.bf16.xpose.msra.mxu0 0
        %2414 = vmatprep.subr.bf16.mxu0 0
        %2415 = vmatpush1.bf16.xpose.msra.mxu0 0
        %2416 = vmatprep.subr.bf16.mxu0 0
        %2417 = vmatpush1.bf16.xpose.msra.mxu0 0
        %2418 = vmatprep.subr.bf16.mxu0 0
        %2419 = vmatpush1.bf16.xpose.msra.mxu0 0
        %2420 = vmatprep.subr.bf16.mxu0 0
        %2421 = vmatpush1.bf16.xpose.msra.mxu0 0
        %2422 = vmatprep.subr.bf16.mxu0 0
        %2423 = vmatpush1.bf16.xpose.msra.mxu0 0
        %2424 = vmatprep.subr.bf16.mxu0 0
        %2425 = vmatpush1.bf16.xpose.msra.mxu0 0
        %2426 = vmatprep.subr.bf16.mxu0 0
        %2427 = vmatpush1.bf16.xpose.msra.mxu0 0
        %2428 = vmatprep.subr.bf16.mxu0 0
        %2429 = vmatpush1.bf16.xpose.msra.mxu0 0
        %2430 = vmatprep.subr.bf16.mxu0 0
        %2431 = vmatpush1.bf16.xpose.msra.mxu0 0
        %2432 = vmatprep.subr.bf16.mxu0 0
        %2433 = vmatpush1.bf16.xpose.msra.mxu0 0
        %2434 = vmatprep.subr.bf16.mxu0 0
        %2435 = vmatpush1.bf16.xpose.msra.mxu0 0
        %2436 = vmatprep.subr.bf16.mxu0 0
        %2437 = vmatpush1.bf16.xpose.msra.mxu0 0
        %2438 = vmatprep.mubr.bf16.mxu0 %v2403
        %2439 = vmatmul.mubr.bf16.gmra.mrb[0].mxu0 %v2402
        %v2440 = vpop.f32.mrb[0].mxu0
        %v2441 = vadd.f32 0.0, %v2440
        %v2442 = vpop.f32.mrb[0].mxu0
        %v2443 = vpop.f32.mrb[0].mxu0
        %v2444 = vpop.f32.mrb[0].mxu0
        %2445 = vdwg.mxu0
        %v2446 = vpack.c.bf16 %v1412, %v1412
        %v2447 = vpack.c.bf16 %v1414, %v1414
        %v2450 = vrot.slane %v1968, 4
        %v2451 = vrot.slane %v1969, 4
        %2454 = vmatprep.subr.bf16.mxu0 %v2447
        %2455 = vmatpush1.bf16.xpose.msra.mxu0 %v2446
        %2456 = vmatprep.subr.bf16.mxu0 0
        %2457 = vmatpush1.bf16.xpose.msra.mxu0 0
        %2458 = vmatprep.subr.bf16.mxu0 0
        %2459 = vmatpush1.bf16.xpose.msra.mxu0 0
        %2460 = vmatprep.subr.bf16.mxu0 0
        %2461 = vmatpush1.bf16.xpose.msra.mxu0 0
        %2462 = vmatprep.subr.bf16.mxu0 0
        %2463 = vmatpush1.bf16.xpose.msra.mxu0 0
        %2464 = vmatprep.subr.bf16.mxu0 0
        %2465 = vmatpush1.bf16.xpose.msra.mxu0 0
        %2466 = vmatprep.subr.bf16.mxu0 0
        %2467 = vmatpush1.bf16.xpose.msra.mxu0 0
        %2468 = vmatprep.subr.bf16.mxu0 0
        %2469 = vmatpush1.bf16.xpose.msra.mxu0 0
        %2470 = vmatprep.subr.bf16.mxu0 0
        %2471 = vmatpush1.bf16.xpose.msra.mxu0 0
        %2472 = vmatprep.subr.bf16.mxu0 0
        %2473 = vmatpush1.bf16.xpose.msra.mxu0 0
        %2474 = vmatprep.subr.bf16.mxu0 0
        %2475 = vmatpush1.bf16.xpose.msra.mxu0 0
        %2476 = vmatprep.subr.bf16.mxu0 0
        %2477 = vmatpush1.bf16.xpose.msra.mxu0 0
        %2478 = vmatprep.subr.bf16.mxu0 0
        %2479 = vmatpush1.bf16.xpose.msra.mxu0 0
        %2480 = vmatprep.subr.bf16.mxu0 0
        %2481 = vmatpush1.bf16.xpose.msra.mxu0 0
        %2482 = vmatprep.subr.bf16.mxu0 0
        %2483 = vmatpush1.bf16.xpose.msra.mxu0 0
        %2484 = vmatprep.subr.bf16.mxu0 0
        %2485 = vmatpush1.bf16.xpose.msra.mxu0 0
        %2486 = vmatprep.mubr.bf16.mxu0 %v2451
        %2487 = vmatmul.mubr.bf16.gmra.mrb[0].mxu0 %v2450
        %v2488 = vpop.f32.mrb[0].mxu0
        %v2489 = vadd.f32 0.0, %v2488
        %v2490 = vpop.f32.mrb[0].mxu0
        %v2491 = vpop.f32.mrb[0].mxu0
        %v2492 = vpop.f32.mrb[0].mxu0
        %2493 = vdwg.mxu0
        %v2494 = vpack.c.bf16 %v2489, %v2441
        %s2495 = scalar_lea.vmem %s10, 12
        %v2496 = vld [vmem:[%s2495] sm:$0xf]
        %v2498 = vsel %vm1419, %v2494, 0
        %v2501 = vsel %vm1423, %v2496, 0
        %2503 = vmatprep.subr.bf16.mxu0 0
        %2504 = vmatpush1.bf16.msra.mxu0 %v2501
        %2505 = vmatprep.subr.bf16.mxu0 0
        %2506 = vmatpush1.bf16.msra.mxu0 0
        %2507 = vmatprep.subr.bf16.mxu0 0
        %2508 = vmatpush1.bf16.msra.mxu0 0
        %2509 = vmatprep.subr.bf16.mxu0 0
        %2510 = vmatpush1.bf16.msra.mxu0 0
        %2511 = vmatprep.subr.bf16.mxu0 0
        %2512 = vmatpush1.bf16.msra.mxu0 0
        %2513 = vmatprep.subr.bf16.mxu0 0
        %2514 = vmatpush1.bf16.msra.mxu0 0
        %2515 = vmatprep.subr.bf16.mxu0 0
        %2516 = vmatpush1.bf16.msra.mxu0 0
        %2517 = vmatprep.subr.bf16.mxu0 0
        %2518 = vmatpush1.bf16.msra.mxu0 0
        %2519 = vmatprep.subr.bf16.mxu0 0
        %2520 = vmatpush1.bf16.msra.mxu0 0
        %2521 = vmatprep.subr.bf16.mxu0 0
        %2522 = vmatpush1.bf16.msra.mxu0 0
        %2523 = vmatprep.subr.bf16.mxu0 0
        %2524 = vmatpush1.bf16.msra.mxu0 0
        %2525 = vmatprep.subr.bf16.mxu0 0
        %2526 = vmatpush1.bf16.msra.mxu0 0
        %2527 = vmatprep.subr.bf16.mxu0 0
        %2528 = vmatpush1.bf16.msra.mxu0 0
        %2529 = vmatprep.subr.bf16.mxu0 0
        %2530 = vmatpush1.bf16.msra.mxu0 0
        %2531 = vmatprep.subr.bf16.mxu0 0
        %2532 = vmatpush1.bf16.msra.mxu0 0
        %2533 = vmatprep.subr.bf16.mxu0 0
        %2534 = vmatpush1.bf16.msra.mxu0 0
        %2535 = vmatprep.mubr.bf16.mxu0 0
        %2536 = vmatmul.mubr.bf16.gmra.mrb[0].mxu0 %v2498
        %v2537 = vpop.f32.mrb[0].mxu0
        %v2538 = vadd.f32 0.0, %v2537
        %v2539 = vpop.f32.mrb[0].mxu0
        %v2540 = vpop.f32.mrb[0].mxu0
        %v2541 = vadd.f32 0.0, %v2540
        %v2542 = vpop.f32.mrb[0].mxu0
        %2543 = vdwg.mxu0
        %v2544 = vadd.f32 %v2396, %v2538
        %v2545 = vadd.f32 %v2397, %v2541
        %2546 = vst.msk [vmem:[%s588] sm:$0xff] %vm621, %v2544
        %2547 = vst.msk [vmem:[%s588 + $0x8] sm:$0xff] %vm621, %v2545
        %v2548 = vld [vmem:[%s16] sm:$0xff]
        %v2549 = vld [vmem:[%s16 + $0x8] sm:$0xff]
        %v2550 = vld [vmem:[%s16 + $0x10] sm:$0x1]
        %v2551 = vld [vmem:[%s16 + $0x18] sm:$0x1]
        %v2553 = vsel %vm621, %v2544, 0
        %2555 = vmatprep.subr.mxu0 %v946
        %2556 = vmatpush1.msra.mxu0 %v945
        %2557 = vmatprep.subr.mxu0 %v948
        %2558 = vmatpush1.msra.mxu0 %v947
        %2559 = vmatprep.subr.mxu0 %v950
        %2560 = vmatpush1.msra.mxu0 %v949
        %2561 = vmatprep.subr.mxu0 %v952
        %2562 = vmatpush1.msra.mxu0 %v951
        %2563 = vmatprep.subr.mxu0 0.0
        %2564 = vmatpush1.msra.mxu0 0.0
        %2565 = vmatprep.subr.mxu0 0.0
        %2566 = vmatpush1.msra.mxu0 0.0
        %2567 = vmatprep.subr.mxu0 0.0
        %2568 = vmatpush1.msra.mxu0 0.0
        %2569 = vmatprep.subr.mxu0 0.0
        %2570 = vmatpush1.msra.mxu0 0.0
        %2571 = vmatprep.subr.mxu0 0.0
        %2572 = vmatpush1.msra.mxu0 0.0
        %2573 = vmatprep.subr.mxu0 0.0
        %2574 = vmatpush1.msra.mxu0 0.0
        %2575 = vmatprep.subr.mxu0 0.0
        %2576 = vmatpush1.msra.mxu0 0.0
        %2577 = vmatprep.subr.mxu0 0.0
        %2578 = vmatpush1.msra.mxu0 0.0
        %2579 = vmatprep.subr.mxu0 0.0
        %2580 = vmatpush1.msra.mxu0 0.0
        %2581 = vmatprep.subr.mxu0 0.0
        %2582 = vmatpush1.msra.mxu0 0.0
        %2583 = vmatprep.subr.mxu0 0.0
        %2584 = vmatpush1.msra.mxu0 0.0
        %2585 = vmatprep.subr.mxu0 0.0
        %2586 = vmatpush1.msra.mxu0 0.0
        %2587 = vmatprep.subr.mxu0 0.0
        %2588 = vmatpush1.msra.mxu0 0.0
        %2589 = vmatprep.subr.mxu0 0.0
        %2590 = vmatpush1.msra.mxu0 0.0
        %2591 = vmatprep.subr.mxu0 0.0
        %2592 = vmatpush1.msra.mxu0 0.0
        %2593 = vmatprep.subr.mxu0 0.0
        %2594 = vmatpush1.msra.mxu0 0.0
        %2595 = vmatprep.subr.mxu0 0.0
        %2596 = vmatpush1.msra.mxu0 0.0
        %2597 = vmatprep.subr.mxu0 0.0
        %2598 = vmatpush1.msra.mxu0 0.0
        %2599 = vmatprep.subr.mxu0 0.0
        %2600 = vmatpush1.msra.mxu0 0.0
        %2601 = vmatprep.subr.mxu0 0.0
        %2602 = vmatpush1.msra.mxu0 0.0
        %2603 = vmatprep.subr.mxu0 0.0
        %2604 = vmatpush1.msra.mxu0 0.0
        %2605 = vmatprep.subr.mxu0 0.0
        %2606 = vmatpush1.msra.mxu0 0.0
        %2607 = vmatprep.subr.mxu0 0.0
        %2608 = vmatpush1.msra.mxu0 0.0
        %2609 = vmatprep.subr.mxu0 0.0
        %2610 = vmatpush1.msra.mxu0 0.0
        %2611 = vmatprep.subr.mxu0 0.0
        %2612 = vmatpush1.msra.mxu0 0.0
        %2613 = vmatprep.subr.mxu0 0.0
        %2614 = vmatpush1.msra.mxu0 0.0
        %2615 = vmatprep.subr.mxu0 0.0
        %2616 = vmatpush1.msra.mxu0 0.0
        %2617 = vmatprep.subr.mxu0 0.0
        %2618 = vmatpush1.msra.mxu0 0.0
        %2619 = vmatprep.mubr.f32.mxu0 0.0
        %2620 = vmatmul.mubr.f32.gmra.mrb[0].mxu0 %v2553
        %v2621 = vpop.f32.mrb[0].mxu0
        %v2622 = vadd.f32 0.0, %v2621
        %v2623 = vpop.f32.mrb[0].mxu0
        %v2624 = vadd.f32 0.0, %v2623
        %2625 = vdwg.mxu0
        %2626 = vrot.lane.b32.xlu0 %v2622, 17
        %v2627 = vpop.permute.xlu0 %2626
        %2628 = vrot.lane.b32.xlu0 %v2624, 17
        %v2629 = vpop.permute.xlu0 %2628
        %v2630 = vlaneseq
        %v2631 = vand.u32 %v2630, 127
        %vm2632 = vcmp.lt.s32.totalorder %v2631, 17
        %v2633 = vsel %vm2632, %v2627, %v2629
        %v2634 = vsel %vm2632, %v2629, %v2627
        %v2635 = vlaneseq
        %v2636 = vshrl.u32 %v2635, 7
        %v2637 = vsub.s32 0, %v2636
        %v2638 = vrot.slane %v2548, %v2637
        %v2639 = vlaneseq
        %v2640 = vshrl.u32 %v2639, 7
        %v2641 = vsub.s32 0, %v2640
        %v2642 = vrot.slane %v2549, %v2641
        %v2643 = vmul.f32 %v2634, %v2638
        %v2644 = vmul.f32 %v2633, %v2642
        %v2645 = vpack.c.bf16 %v2643, %v2643
        %v2646 = vpack.c.bf16 %v2644, %v2644
        %v2649 = vunpack.c.l.b16 %v2645
        %v2650 = vunpack.c.l.b16 %v2646
        %v2651 = vpack.c.b16 %v2650, %v2649
        %2653 = vst [vmem:[#allocation2] sm:$0xff] %v2651
        %2654 = vrot.lane.b32.xlu0 %v2622, 16
        %v2655 = vpop.permute.xlu0 %2654
        %2656 = vrot.lane.b32.xlu0 %v2624, 16
        %v2657 = vpop.permute.xlu0 %2656
        %vm2658 = vcmp.lt.s32.totalorder %v2631, 16
        %v2659 = vsel %vm2658, %v2655, %v2657
        %v2660 = vsel %vm2658, %v2657, %v2655
        %v2661 = vlaneseq
        %v2662 = vshrl.u32 %v2661, 7
        %v2663 = vsub.s32 1, %v2662
        %v2664 = vrot.slane %v2548, %v2663
        %v2665 = vlaneseq
        %v2666 = vshrl.u32 %v2665, 7
        %v2667 = vsub.s32 1, %v2666
        %v2668 = vrot.slane %v2549, %v2667
        %v2669 = vmul.f32 %v2660, %v2664
        %v2670 = vmul.f32 %v2659, %v2668
        %v2671 = vpack.c.bf16 %v2669, %v2669
        %v2672 = vpack.c.bf16 %v2670, %v2670
        %v2675 = vunpack.c.l.b16 %v2671
        %v2676 = vunpack.c.l.b16 %v2672
        %v2677 = vpack.c.b16 %v2676, %v2675
        %2679 = vst [vmem:[#allocation2 + $0x10] sm:$0xff] %v2677
        %2680 = vrot.lane.b32.xlu0 %v2622, 15
        %v2681 = vpop.permute.xlu0 %2680
        %2682 = vrot.lane.b32.xlu0 %v2624, 15
        %v2683 = vpop.permute.xlu0 %2682
        %vm2684 = vcmp.lt.s32.totalorder %v2631, 15
        %v2685 = vsel %vm2684, %v2681, %v2683
        %v2686 = vsel %vm2684, %v2683, %v2681
        %v2687 = vlaneseq
        %v2688 = vshrl.u32 %v2687, 7
        %v2689 = vsub.s32 2, %v2688
        %v2690 = vrot.slane %v2548, %v2689
        %v2691 = vlaneseq
        %v2692 = vshrl.u32 %v2691, 7
        %v2693 = vsub.s32 2, %v2692
        %v2694 = vrot.slane %v2549, %v2693
        %v2695 = vmul.f32 %v2686, %v2690
        %v2696 = vmul.f32 %v2685, %v2694
        %v2697 = vpack.c.bf16 %v2695, %v2695
        %v2698 = vpack.c.bf16 %v2696, %v2696
        %v2701 = vunpack.c.l.b16 %v2697
        %v2702 = vunpack.c.l.b16 %v2698
        %v2703 = vpack.c.b16 %v2702, %v2701
        %2705 = vst [vmem:[#allocation2 + $0x20] sm:$0xff] %v2703
        %2706 = vrot.lane.b32.xlu0 %v2622, 1
        %v2707 = vpop.permute.xlu0 %2706
        %2708 = vrot.lane.b32.xlu0 %v2624, 1
        %v2709 = vpop.permute.xlu0 %2708
        %vm2710 = vcmp.lt.s32.totalorder %v2631, 1
        %v2711 = vsel %vm2710, %v2707, %v2709
        %v2712 = vsel %vm2710, %v2709, %v2707
        %v2713 = vlaneseq
        %v2714 = vshrl.u32 %v2713, 7
        %v2715 = vsub.s32 3, %v2714
        %v2716 = vrot.slane %v2548, %v2715
        %v2717 = vlaneseq
        %v2718 = vshrl.u32 %v2717, 7
        %v2719 = vsub.s32 3, %v2718
        %v2720 = vrot.slane %v2549, %v2719
        %v2721 = vmul.f32 %v2712, %v2716
        %v2722 = vmul.f32 %v2711, %v2720
        %v2723 = vpack.c.bf16 %v2721, %v2721
        %v2724 = vpack.c.bf16 %v2722, %v2722
        %v2727 = vunpack.c.l.b16 %v2723
        %v2728 = vunpack.c.l.b16 %v2724
        %v2729 = vpack.c.b16 %v2728, %v2727
        %2731 = vst [vmem:[#allocation2 + $0x30] sm:$0xff] %v2729
        %v2732 = vlaneseq
        %v2733 = vshrl.u32 %v2732, 7
        %v2734 = vsub.s32 4, %v2733
        %v2735 = vrot.slane %v2548, %v2734
        %v2736 = vlaneseq
        %v2737 = vshrl.u32 %v2736, 7
        %v2738 = vsub.s32 4, %v2737
        %v2739 = vrot.slane %v2549, %v2738
        %v2740 = vmul.f32 %v2622, %v2735
        %v2741 = vmul.f32 %v2624, %v2739
        %v2742 = vpack.c.bf16 %v2740, %v2740
        %v2743 = vpack.c.bf16 %v2741, %v2741
        %v2746 = vunpack.c.l.b16 %v2742
        %v2747 = vunpack.c.l.b16 %v2743
        %v2748 = vpack.c.b16 %v2747, %v2746
        %2750 = vst [vmem:[#allocation2 + $0x40] sm:$0xff] %v2748
        %2751 = vrot.lane.b32.xlu0 %v2622, 127
        %v2752 = vpop.permute.xlu0 %2751
        %2753 = vrot.lane.b32.xlu0 %v2624, 127
        %v2754 = vpop.permute.xlu0 %2753
        %vm2755 = vcmp.lt.s32.totalorder %v2631, 127
        %v2756 = vsel %vm2755, %v2752, %v2754
        %v2757 = vsel %vm2755, %v2754, %v2752
        %v2758 = vlaneseq
        %v2759 = vshrl.u32 %v2758, 7
        %v2760 = vsub.s32 5, %v2759
        %v2761 = vrot.slane %v2548, %v2760
        %v2762 = vlaneseq
        %v2763 = vshrl.u32 %v2762, 7
        %v2764 = vsub.s32 5, %v2763
        %v2765 = vrot.slane %v2549, %v2764
        %v2766 = vmul.f32 %v2756, %v2761
        %v2767 = vmul.f32 %v2757, %v2765
        %v2768 = vpack.c.bf16 %v2766, %v2766
        %v2769 = vpack.c.bf16 %v2767, %v2767
        %v2772 = vunpack.c.l.b16 %v2768
        %v2773 = vunpack.c.l.b16 %v2769
        %v2774 = vpack.c.b16 %v2773, %v2772
        %2776 = vst [vmem:[#allocation2 + $0x50] sm:$0xff] %v2774
        %2777 = vrot.lane.b32.xlu0 %v2622, 113
        %v2778 = vpop.permute.xlu0 %2777
        %2779 = vrot.lane.b32.xlu0 %v2624, 113
        %v2780 = vpop.permute.xlu0 %2779
        %vm2781 = vcmp.lt.s32.totalorder %v2631, 113
        %v2782 = vsel %vm2781, %v2778, %v2780
        %v2783 = vsel %vm2781, %v2780, %v2778
        %v2784 = vlaneseq
        %v2785 = vshrl.u32 %v2784, 7
        %v2786 = vsub.s32 6, %v2785
        %v2787 = vrot.slane %v2548, %v2786
        %v2788 = vlaneseq
        %v2789 = vshrl.u32 %v2788, 7
        %v2790 = vsub.s32 6, %v2789
        %v2791 = vrot.slane %v2549, %v2790
        %v2792 = vmul.f32 %v2782, %v2787
        %v2793 = vmul.f32 %v2783, %v2791
        %v2794 = vpack.c.bf16 %v2792, %v2792
        %v2795 = vpack.c.bf16 %v2793, %v2793
        %v2798 = vunpack.c.l.b16 %v2794
        %v2799 = vunpack.c.l.b16 %v2795
        %v2800 = vpack.c.b16 %v2799, %v2798
        %2802 = vst [vmem:[#allocation2 + $0x60] sm:$0xff] %v2800
        %2803 = vrot.lane.b32.xlu0 %v2622, 112
        %v2804 = vpop.permute.xlu0 %2803
        %2805 = vrot.lane.b32.xlu0 %v2624, 112
        %v2806 = vpop.permute.xlu0 %2805
        %vm2807 = vcmp.lt.s32.totalorder %v2631, 112
        %v2808 = vsel %vm2807, %v2804, %v2806
        %v2809 = vsel %vm2807, %v2806, %v2804
        %v2810 = vlaneseq
        %v2811 = vshrl.u32 %v2810, 7
        %v2812 = vsub.s32 7, %v2811
        %v2813 = vrot.slane %v2548, %v2812
        %v2814 = vlaneseq
        %v2815 = vshrl.u32 %v2814, 7
        %v2816 = vsub.s32 7, %v2815
        %v2817 = vrot.slane %v2549, %v2816
        %v2818 = vmul.f32 %v2808, %v2813
        %v2819 = vmul.f32 %v2809, %v2817
        %v2820 = vpack.c.bf16 %v2818, %v2818
        %v2821 = vpack.c.bf16 %v2819, %v2819
        %v2824 = vunpack.c.l.b16 %v2820
        %v2825 = vunpack.c.l.b16 %v2821
        %v2826 = vpack.c.b16 %v2825, %v2824
        %2828 = vst [vmem:[#allocation2 + $0x70] sm:$0xff] %v2826
        %2829 = vrot.lane.b32.xlu0 %v2622, 111
        %v2830 = vpop.permute.xlu0 %2829
        %2831 = vrot.lane.b32.xlu0 %v2624, 111
        %v2832 = vpop.permute.xlu0 %2831
        %vm2833 = vcmp.lt.s32.totalorder %v2631, 111
        %v2834 = vsel %vm2833, %v2830, %v2832
        %v2835 = vsel %vm2833, %v2832, %v2830
        %v2836 = vlaneseq
        %v2837 = vshrl.u32 %v2836, 7
        %v2838 = vsub.s32 0, %v2837
        %v2839 = vrot.slane %v2550, %v2838
        %v2840 = vlaneseq
        %v2841 = vshrl.u32 %v2840, 7
        %v2842 = vsub.s32 0, %v2841
        %v2843 = vrot.slane %v2551, %v2842
        %v2844 = vmul.f32 %v2834, %v2839
        %v2845 = vmul.f32 %v2835, %v2843
        %v2846 = vpack.c.bf16 %v2844, %v2844
        %v2847 = vpack.c.bf16 %v2845, %v2845
        %v2850 = vunpack.c.l.b16 %v2846
        %v2851 = vunpack.c.l.b16 %v2847
        %v2852 = vpack.c.b16 %v2851, %v2850
        %2854 = vst [vmem:[#allocation2 + $0x80] sm:$0xff] %v2852
        %v2856 = vsel %vm621, %v2545, 0
        %2858 = vmatprep.subr.mxu0 %v1087
        %2859 = vmatpush1.msra.mxu0 %v1086
        %2860 = vmatprep.subr.mxu0 %v1089
        %2861 = vmatpush1.msra.mxu0 %v1088
        %2862 = vmatprep.subr.mxu0 %v1091
        %2863 = vmatpush1.msra.mxu0 %v1090
        %2864 = vmatprep.subr.mxu0 %v1093
        %2865 = vmatpush1.msra.mxu0 %v1092
        %2866 = vmatprep.subr.mxu0 0.0
        %2867 = vmatpush1.msra.mxu0 0.0
        %2868 = vmatprep.subr.mxu0 0.0
        %2869 = vmatpush1.msra.mxu0 0.0
        %2870 = vmatprep.subr.mxu0 0.0
        %2871 = vmatpush1.msra.mxu0 0.0
        %2872 = vmatprep.subr.mxu0 0.0
        %2873 = vmatpush1.msra.mxu0 0.0
        %2874 = vmatprep.subr.mxu0 0.0
        %2875 = vmatpush1.msra.mxu0 0.0
        %2876 = vmatprep.subr.mxu0 0.0
        %2877 = vmatpush1.msra.mxu0 0.0
        %2878 = vmatprep.subr.mxu0 0.0
        %2879 = vmatpush1.msra.mxu0 0.0
        %2880 = vmatprep.subr.mxu0 0.0
        %2881 = vmatpush1.msra.mxu0 0.0
        %2882 = vmatprep.subr.mxu0 0.0
        %2883 = vmatpush1.msra.mxu0 0.0
        %2884 = vmatprep.subr.mxu0 0.0
        %2885 = vmatpush1.msra.mxu0 0.0
        %2886 = vmatprep.subr.mxu0 0.0
        %2887 = vmatpush1.msra.mxu0 0.0
        %2888 = vmatprep.subr.mxu0 0.0
        %2889 = vmatpush1.msra.mxu0 0.0
        %2890 = vmatprep.subr.mxu0 0.0
        %2891 = vmatpush1.msra.mxu0 0.0
        %2892 = vmatprep.subr.mxu0 0.0
        %2893 = vmatpush1.msra.mxu0 0.0
        %2894 = vmatprep.subr.mxu0 0.0
        %2895 = vmatpush1.msra.mxu0 0.0
        %2896 = vmatprep.subr.mxu0 0.0
        %2897 = vmatpush1.msra.mxu0 0.0
        %2898 = vmatprep.subr.mxu0 0.0
        %2899 = vmatpush1.msra.mxu0 0.0
        %2900 = vmatprep.subr.mxu0 0.0
        %2901 = vmatpush1.msra.mxu0 0.0
        %2902 = vmatprep.subr.mxu0 0.0
        %2903 = vmatpush1.msra.mxu0 0.0
        %2904 = vmatprep.subr.mxu0 0.0
        %2905 = vmatpush1.msra.mxu0 0.0
        %2906 = vmatprep.subr.mxu0 0.0
        %2907 = vmatpush1.msra.mxu0 0.0
        %2908 = vmatprep.subr.mxu0 0.0
        %2909 = vmatpush1.msra.mxu0 0.0
        %2910 = vmatprep.subr.mxu0 0.0
        %2911 = vmatpush1.msra.mxu0 0.0
        %2912 = vmatprep.subr.mxu0 0.0
        %2913 = vmatpush1.msra.mxu0 0.0
        %2914 = vmatprep.subr.mxu0 0.0
        %2915 = vmatpush1.msra.mxu0 0.0
        %2916 = vmatprep.subr.mxu0 0.0
        %2917 = vmatpush1.msra.mxu0 0.0
        %2918 = vmatprep.subr.mxu0 0.0
        %2919 = vmatpush1.msra.mxu0 0.0
        %2920 = vmatprep.subr.mxu0 0.0
        %2921 = vmatpush1.msra.mxu0 0.0
        %2922 = vmatprep.mubr.f32.mxu0 0.0
        %2923 = vmatmul.mubr.f32.gmra.mrb[0].mxu0 %v2856
        %v2924 = vpop.f32.mrb[0].mxu0
        %v2925 = vadd.f32 0.0, %v2924
        %v2926 = vpop.f32.mrb[0].mxu0
        %v2927 = vadd.f32 0.0, %v2926
        %2928 = vdwg.mxu0
        %2929 = vrot.lane.b32.xlu0 %v2925, 17
        %v2930 = vpop.permute.xlu0 %2929
        %2931 = vrot.lane.b32.xlu0 %v2927, 17
        %v2932 = vpop.permute.xlu0 %2931
        %v2933 = vsel %vm2632, %v2930, %v2932
        %v2934 = vsel %vm2632, %v2932, %v2930
        %v2935 = vmul.f32 %v2934, %v2638
        %v2936 = vmul.f32 %v2933, %v2642
        %v2937 = vpack.c.bf16 %v2935, %v2935
        %v2938 = vpack.c.bf16 %v2936, %v2936
        %v2941 = vunpack.c.l.b16 %v2937
        %v2942 = vunpack.c.l.b16 %v2938
        %v2943 = vpack.c.b16 %v2942, %v2941
        %2945 = vst [vmem:[#allocation2 + $0x8] sm:$0xff] %v2943
        %2946 = vrot.lane.b32.xlu0 %v2925, 16
        %v2947 = vpop.permute.xlu0 %2946
        %2948 = vrot.lane.b32.xlu0 %v2927, 16
        %v2949 = vpop.permute.xlu0 %2948
        %v2950 = vsel %vm2658, %v2947, %v2949
        %v2951 = vsel %vm2658, %v2949, %v2947
        %v2952 = vmul.f32 %v2951, %v2664
        %v2953 = vmul.f32 %v2950, %v2668
        %v2954 = vpack.c.bf16 %v2952, %v2952
        %v2955 = vpack.c.bf16 %v2953, %v2953
        %v2958 = vunpack.c.l.b16 %v2954
        %v2959 = vunpack.c.l.b16 %v2955
        %v2960 = vpack.c.b16 %v2959, %v2958
        %2962 = vst [vmem:[#allocation2 + $0x18] sm:$0xff] %v2960
        %2963 = vrot.lane.b32.xlu0 %v2925, 15
        %v2964 = vpop.permute.xlu0 %2963
        %2965 = vrot.lane.b32.xlu0 %v2927, 15
        %v2966 = vpop.permute.xlu0 %2965
        %v2967 = vsel %vm2684, %v2964, %v2966
        %v2968 = vsel %vm2684, %v2966, %v2964
        %v2969 = vmul.f32 %v2968, %v2690
        %v2970 = vmul.f32 %v2967, %v2694
        %v2971 = vpack.c.bf16 %v2969, %v2969
        %v2972 = vpack.c.bf16 %v2970, %v2970
        %v2975 = vunpack.c.l.b16 %v2971
        %v2976 = vunpack.c.l.b16 %v2972
        %v2977 = vpack.c.b16 %v2976, %v2975
        %2979 = vst [vmem:[#allocation2 + $0x28] sm:$0xff] %v2977
        %2980 = vrot.lane.b32.xlu0 %v2925, 1
        %v2981 = vpop.permute.xlu0 %2980
        %2982 = vrot.lane.b32.xlu0 %v2927, 1
        %v2983 = vpop.permute.xlu0 %2982
        %v2984 = vsel %vm2710, %v2981, %v2983
        %v2985 = vsel %vm2710, %v2983, %v2981
        %v2986 = vmul.f32 %v2985, %v2716
        %v2987 = vmul.f32 %v2984, %v2720
        %v2988 = vpack.c.bf16 %v2986, %v2986
        %v2989 = vpack.c.bf16 %v2987, %v2987
        %v2992 = vunpack.c.l.b16 %v2988
        %v2993 = vunpack.c.l.b16 %v2989
        %v2994 = vpack.c.b16 %v2993, %v2992
        %2996 = vst [vmem:[#allocation2 + $0x38] sm:$0xff] %v2994
        %v2997 = vmul.f32 %v2925, %v2735
        %v2998 = vmul.f32 %v2927, %v2739
        %v2999 = vpack.c.bf16 %v2997, %v2997
        %v3000 = vpack.c.bf16 %v2998, %v2998
        %v3003 = vunpack.c.l.b16 %v2999
        %v3004 = vunpack.c.l.b16 %v3000
        %v3005 = vpack.c.b16 %v3004, %v3003
        %3007 = vst [vmem:[#allocation2 + $0x48] sm:$0xff] %v3005
        %3008 = vrot.lane.b32.xlu0 %v2925, 127
        %v3009 = vpop.permute.xlu0 %3008
        %3010 = vrot.lane.b32.xlu0 %v2927, 127
        %v3011 = vpop.permute.xlu0 %3010
        %v3012 = vsel %vm2755, %v3009, %v3011
        %v3013 = vsel %vm2755, %v3011, %v3009
        %v3014 = vmul.f32 %v3012, %v2761
        %v3015 = vmul.f32 %v3013, %v2765
        %v3016 = vpack.c.bf16 %v3014, %v3014
        %v3017 = vpack.c.bf16 %v3015, %v3015
        %v3020 = vunpack.c.l.b16 %v3016
        %v3021 = vunpack.c.l.b16 %v3017
        %v3022 = vpack.c.b16 %v3021, %v3020
        %3024 = vst [vmem:[#allocation2 + $0x58] sm:$0xff] %v3022
        %3025 = vrot.lane.b32.xlu0 %v2925, 113
        %v3026 = vpop.permute.xlu0 %3025
        %3027 = vrot.lane.b32.xlu0 %v2927, 113
        %v3028 = vpop.permute.xlu0 %3027
        %v3029 = vsel %vm2781, %v3026, %v3028
        %v3030 = vsel %vm2781, %v3028, %v3026
        %v3031 = vmul.f32 %v3029, %v2787
        %v3032 = vmul.f32 %v3030, %v2791
        %v3033 = vpack.c.bf16 %v3031, %v3031
        %v3034 = vpack.c.bf16 %v3032, %v3032
        %v3037 = vunpack.c.l.b16 %v3033
        %v3038 = vunpack.c.l.b16 %v3034
        %v3039 = vpack.c.b16 %v3038, %v3037
        %3041 = vst [vmem:[#allocation2 + $0x68] sm:$0xff] %v3039
        %3042 = vrot.lane.b32.xlu0 %v2925, 112
        %v3043 = vpop.permute.xlu0 %3042
        %3044 = vrot.lane.b32.xlu0 %v2927, 112
        %v3045 = vpop.permute.xlu0 %3044
        %v3046 = vsel %vm2807, %v3043, %v3045
        %v3047 = vsel %vm2807, %v3045, %v3043
        %v3048 = vmul.f32 %v3046, %v2813
        %v3049 = vmul.f32 %v3047, %v2817
        %v3050 = vpack.c.bf16 %v3048, %v3048
        %v3051 = vpack.c.bf16 %v3049, %v3049
        %v3054 = vunpack.c.l.b16 %v3050
        %v3055 = vunpack.c.l.b16 %v3051
        %v3056 = vpack.c.b16 %v3055, %v3054
        %3058 = vst [vmem:[#allocation2 + $0x78] sm:$0xff] %v3056
        %3059 = vrot.lane.b32.xlu0 %v2925, 111
        %v3060 = vpop.permute.xlu0 %3059
        %3061 = vrot.lane.b32.xlu0 %v2927, 111
        %v3062 = vpop.permute.xlu0 %3061
        %v3063 = vsel %vm2833, %v3060, %v3062
        %v3064 = vsel %vm2833, %v3062, %v3060
        %v3065 = vmul.f32 %v3063, %v2839
        %v3066 = vmul.f32 %v3064, %v2843
        %v3067 = vpack.c.bf16 %v3065, %v3065
        %v3068 = vpack.c.bf16 %v3066, %v3066
        %v3071 = vunpack.c.l.b16 %v3067
        %v3072 = vunpack.c.l.b16 %v3068
        %v3073 = vpack.c.b16 %v3072, %v3071
        %3075 = vst [vmem:[#allocation2 + $0x88] sm:$0xff] %v3073
        %v3076 = vld [vmem:[%s12] sm:$0xf]
        %v3077 = vld [vmem:[%s12 + $0x4] sm:$0xf]
        %v3078 = vld [vmem:[%s12 + $0x8] sm:$0xf]
        %v3079 = vld [vmem:[%s12 + $0xc] sm:$0xf]
        %v3080 = vld [vmem:[#allocation2] sm:$0xff]
        %v3081 = vld [vmem:[#allocation2 + $0x8] sm:$0xff]
        %v3082 = vld [vmem:[#allocation2 + $0x10] sm:$0xff]
        %v3083 = vld [vmem:[#allocation2 + $0x18] sm:$0xff]
        %v3084 = vld [vmem:[#allocation2 + $0x20] sm:$0xff]
        %v3085 = vld [vmem:[#allocation2 + $0x28] sm:$0xff]
        %v3086 = vld [vmem:[#allocation2 + $0x30] sm:$0xff]
        %v3087 = vld [vmem:[#allocation2 + $0x38] sm:$0xff]
        %v3088 = vld [vmem:[#allocation2 + $0x40] sm:$0xff]
        %v3089 = vld [vmem:[#allocation2 + $0x48] sm:$0xff]
        %v3090 = vld [vmem:[#allocation2 + $0x50] sm:$0xff]
        %v3091 = vld [vmem:[#allocation2 + $0x58] sm:$0xff]
        %v3092 = vld [vmem:[#allocation2 + $0x60] sm:$0xff]
        %v3093 = vld [vmem:[#allocation2 + $0x68] sm:$0xff]
        %v3094 = vld [vmem:[#allocation2 + $0x70] sm:$0xff]
        %v3095 = vld [vmem:[#allocation2 + $0x78] sm:$0xff]
        %v3096 = vld [vmem:[#allocation2 + $0x80] sm:$0xff]
        %v3097 = vld [vmem:[#allocation2 + $0x88] sm:$0xff]
        %v3098 = vld [vmem:[%s13] sm:$0xff]
        %v3099 = vld [vmem:[%s13 + $0x8] sm:$0xff]
        %v3100 = vld [vmem:[%s13 + $0x10] sm:$0xff]
        %v3101 = vld [vmem:[%s13 + $0x18] sm:$0xff]
        %3103 = vset.pattern.permute.xlu0 0
        %3104 = vperm.xlu0 %3103, %v3098
        %v3105 = vpop.permute.xlu0 %3104
        %3108 = vset.pattern.permute.xlu0 0
        %3109 = vperm.xlu0 %3108, %v3099
        %v3110 = vpop.permute.xlu0 %3109
        %3113 = vset.pattern.permute.xlu0 0
        %3114 = vperm.xlu0 %3113, %v3100
        %v3115 = vpop.permute.xlu0 %3114
        %3118 = vset.pattern.permute.xlu0 0
        %3119 = vperm.xlu0 %3118, %v3101
        %v3120 = vpop.permute.xlu0 %3119
        %v3126 = vunpack.c.l.b16 %v3076
        %v3127 = vunpack.c.l.b16 %v3077
        %v3128 = vunpack.c.l.b16 %v3078
        %v3129 = vunpack.c.l.b16 %v3079
        %v3130 = vpack.c.b16 %v3127, %v3126
        %v3131 = vpack.c.b16 %v3129, %v3128
        %v3150 = vunpack.c.l.b16 %v3080
        %v3151 = vunpack.c.h.b16 %v3080
        %v3152 = vunpack.c.l.b16 %v3081
        %v3153 = vunpack.c.h.b16 %v3081
        %v3154 = vunpack.c.l.b16 %v3082
        %v3155 = vunpack.c.h.b16 %v3082
        %v3156 = vunpack.c.l.b16 %v3083
        %v3157 = vunpack.c.h.b16 %v3083
        %v3158 = vunpack.c.l.b16 %v3084
        %v3159 = vunpack.c.h.b16 %v3084
        %v3160 = vunpack.c.l.b16 %v3085
        %v3161 = vunpack.c.h.b16 %v3085
        %v3162 = vunpack.c.l.b16 %v3086
        %v3163 = vunpack.c.h.b16 %v3086
        %v3164 = vunpack.c.l.b16 %v3087
        %v3165 = vunpack.c.h.b16 %v3087
        %v3166 = vunpack.c.l.b16 %v3088
        %v3167 = vunpack.c.h.b16 %v3088
        %v3168 = vunpack.c.l.b16 %v3089
        %v3169 = vunpack.c.h.b16 %v3089
        %v3170 = vunpack.c.l.b16 %v3090
        %v3171 = vunpack.c.h.b16 %v3090
        %v3172 = vunpack.c.l.b16 %v3091
        %v3173 = vunpack.c.h.b16 %v3091
        %v3174 = vunpack.c.l.b16 %v3092
        %v3175 = vunpack.c.h.b16 %v3092
        %v3176 = vunpack.c.l.b16 %v3093
        %v3177 = vunpack.c.h.b16 %v3093
        %v3178 = vunpack.c.l.b16 %v3094
        %v3179 = vunpack.c.h.b16 %v3094
        %v3180 = vunpack.c.l.b16 %v3095
        %v3181 = vunpack.c.h.b16 %v3095
        %v3182 = vunpack.c.l.b16 %v3096
        %v3183 = vunpack.c.h.b16 %v3096
        %v3184 = vunpack.c.l.b16 %v3097
        %v3185 = vunpack.c.h.b16 %v3097
        %v3186 = vpack.c.b16 %v3154, %v3150
        %v3187 = vpack.c.b16 %v3155, %v3151
        %v3188 = vpack.c.b16 %v3156, %v3152
        %v3189 = vpack.c.b16 %v3157, %v3153
        %v3190 = vpack.c.b16 %v3162, %v3158
        %v3191 = vpack.c.b16 %v3163, %v3159
        %v3192 = vpack.c.b16 %v3164, %v3160
        %v3193 = vpack.c.b16 %v3165, %v3161
        %v3194 = vpack.c.b16 %v3170, %v3166
        %v3195 = vpack.c.b16 %v3171, %v3167
        %v3196 = vpack.c.b16 %v3172, %v3168
        %v3197 = vpack.c.b16 %v3173, %v3169
        %v3198 = vpack.c.b16 %v3178, %v3174
        %v3199 = vpack.c.b16 %v3179, %v3175
        %v3200 = vpack.c.b16 %v3180, %v3176
        %v3201 = vpack.c.b16 %v3181, %v3177
        %v3202 = vpack.c.b16 %v3182, %v3182
        %v3203 = vpack.c.b16 %v3183, %v3183
        %v3204 = vpack.c.b16 %v3184, %v3184
        %v3205 = vpack.c.b16 %v3185, %v3185
        %vm3222 = vcmask 588800
        %v3224 = vsel %vm3222, %v3130, 0
        %v3227 = vsel %vm3222, %v3131, 0
        %v3230 = vsel %vm1423, %v3202, 0
        %v3233 = vsel %vm1423, %v3203, 0
        %v3236 = vsel %vm1423, %v3204, 0
        %v3239 = vsel %vm1423, %v3205, 0
        %3241 = vmatprep.subr.bf16.mxu0 %v3187
        %3242 = vmatpush1.bf16.msra.mxu0 %v3186
        %3243 = vmatprep.subr.bf16.mxu0 %v3191
        %3244 = vmatpush1.bf16.msra.mxu0 %v3190
        %3245 = vmatprep.subr.bf16.mxu0 %v3195
        %3246 = vmatpush1.bf16.msra.mxu0 %v3194
        %3247 = vmatprep.subr.bf16.mxu0 %v3199
        %3248 = vmatpush1.bf16.msra.mxu0 %v3198
        %3249 = vmatprep.subr.bf16.mxu0 %v3233
        %3250 = vmatpush1.bf16.msra.mxu0 %v3230
        %3251 = vmatprep.subr.bf16.mxu0 0
        %3252 = vmatpush1.bf16.msra.mxu0 0
        %3253 = vmatprep.subr.bf16.mxu0 0
        %3254 = vmatpush1.bf16.msra.mxu0 0
        %3255 = vmatprep.subr.bf16.mxu0 0
        %3256 = vmatpush1.bf16.msra.mxu0 0
        %3257 = vmatprep.subr.bf16.mxu0 0
        %3258 = vmatpush1.bf16.msra.mxu0 0
        %3259 = vmatprep.subr.bf16.mxu0 0
        %3260 = vmatpush1.bf16.msra.mxu0 0
        %3261 = vmatprep.subr.bf16.mxu0 0
        %3262 = vmatpush1.bf16.msra.mxu0 0
        %3263 = vmatprep.subr.bf16.mxu0 0
        %3264 = vmatpush1.bf16.msra.mxu0 0
        %3265 = vmatprep.subr.bf16.mxu0 0
        %3266 = vmatpush1.bf16.msra.mxu0 0
        %3267 = vmatprep.subr.bf16.mxu0 0
        %3268 = vmatpush1.bf16.msra.mxu0 0
        %3269 = vmatprep.subr.bf16.mxu0 0
        %3270 = vmatpush1.bf16.msra.mxu0 0
        %3271 = vmatprep.subr.bf16.mxu0 0
        %3272 = vmatpush1.bf16.msra.mxu0 0
        %3273 = vmatprep.mubr.bf16.mxu0 0
        %3274 = vmatmul.mubr.bf16.gmra.mrb[0].mxu0 %v3224
        %v3275 = vpop.f32.mrb[0].mxu0
        %v3276 = vadd.f32 %v3105, %v3275
        %v3277 = vpop.f32.mrb[0].mxu0
        %v3278 = vadd.f32 %v3105, %v3277
        %v3279 = vpop.f32.mrb[0].mxu0
        %v3280 = vadd.f32 %v3110, %v3279
        %v3281 = vpop.f32.mrb[0].mxu0
        %v3282 = vadd.f32 %v3110, %v3281
        %3283 = vmatprep.mubr.bf16.mxu0 0
        %3284 = vmatmul.mubr.bf16.gmra.mrb[0].mxu0 %v3227
        %v3285 = vpop.f32.mrb[0].mxu0
        %v3286 = vadd.f32 %v3115, %v3285
        %v3287 = vpop.f32.mrb[0].mxu0
        %v3288 = vadd.f32 %v3115, %v3287
        %v3289 = vpop.f32.mrb[0].mxu0
        %v3290 = vadd.f32 %v3120, %v3289
        %v3291 = vpop.f32.mrb[0].mxu0
        %v3292 = vadd.f32 %v3120, %v3291
        %3293 = vdwg.mxu0
        %3294 = vmatprep.subr.bf16.mxu0 %v3189
        %3295 = vmatpush1.bf16.msra.mxu0 %v3188
        %3296 = vmatprep.subr.bf16.mxu0 %v3193
        %3297 = vmatpush1.bf16.msra.mxu0 %v3192
        %3298 = vmatprep.subr.bf16.mxu0 %v3197
        %3299 = vmatpush1.bf16.msra.mxu0 %v3196
        %3300 = vmatprep.subr.bf16.mxu0 %v3201
        %3301 = vmatpush1.bf16.msra.mxu0 %v3200
        %3302 = vmatprep.subr.bf16.mxu0 %v3239
        %3303 = vmatpush1.bf16.msra.mxu0 %v3236
        %3304 = vmatprep.subr.bf16.mxu0 0
        %3305 = vmatpush1.bf16.msra.mxu0 0
        %3306 = vmatprep.subr.bf16.mxu0 0
        %3307 = vmatpush1.bf16.msra.mxu0 0
        %3308 = vmatprep.subr.bf16.mxu0 0
        %3309 = vmatpush1.bf16.msra.mxu0 0
        %3310 = vmatprep.subr.bf16.mxu0 0
        %3311 = vmatpush1.bf16.msra.mxu0 0
        %3312 = vmatprep.subr.bf16.mxu0 0
        %3313 = vmatpush1.bf16.msra.mxu0 0
        %3314 = vmatprep.subr.bf16.mxu0 0
        %3315 = vmatpush1.bf16.msra.mxu0 0
        %3316 = vmatprep.subr.bf16.mxu0 0
        %3317 = vmatpush1.bf16.msra.mxu0 0
        %3318 = vmatprep.subr.bf16.mxu0 0
        %3319 = vmatpush1.bf16.msra.mxu0 0
        %3320 = vmatprep.subr.bf16.mxu0 0
        %3321 = vmatpush1.bf16.msra.mxu0 0
        %3322 = vmatprep.subr.bf16.mxu0 0
        %3323 = vmatpush1.bf16.msra.mxu0 0
        %3324 = vmatprep.subr.bf16.mxu0 0
        %3325 = vmatpush1.bf16.msra.mxu0 0
        %3326 = vmatprep.mubr.bf16.mxu0 0
        %3327 = vmatmul.mubr.bf16.gmra.mrb[0].mxu0 %v3224
        %v3328 = vpop.f32.mrb[0].mxu0
        %v3329 = vadd.f32 %v3105, %v3328
        %v3330 = vpop.f32.mrb[0].mxu0
        %v3331 = vadd.f32 %v3105, %v3330
        %v3332 = vpop.f32.mrb[0].mxu0
        %v3333 = vadd.f32 %v3110, %v3332
        %v3334 = vpop.f32.mrb[0].mxu0
        %v3335 = vadd.f32 %v3110, %v3334
        %3336 = vmatprep.mubr.bf16.mxu0 0
        %3337 = vmatmul.mubr.bf16.gmra.mrb[0].mxu0 %v3227
        %v3338 = vpop.f32.mrb[0].mxu0
        %v3339 = vadd.f32 %v3115, %v3338
        %v3340 = vpop.f32.mrb[0].mxu0
        %v3341 = vadd.f32 %v3115, %v3340
        %v3342 = vpop.f32.mrb[0].mxu0
        %v3343 = vadd.f32 %v3120, %v3342
        %v3344 = vpop.f32.mrb[0].mxu0
        %v3345 = vadd.f32 %v3120, %v3344
        %3346 = vdwg.mxu0
        %v3347 = vld [vmem:[%s14] sm:$0xff]
        %v3348 = vld [vmem:[%s14 + $0x8] sm:$0xff]
        %v3349 = vld [vmem:[%s14 + $0x10] sm:$0xff]
        %v3350 = vld [vmem:[%s14 + $0x18] sm:$0xff]
        %3352 = vset.pattern.permute.xlu0 0
        %3353 = vperm.xlu0 %3352, %v3347
        %v3354 = vpop.permute.xlu0 %3353
        %3357 = vset.pattern.permute.xlu0 0
        %3358 = vperm.xlu0 %3357, %v3348
        %v3359 = vpop.permute.xlu0 %3358
        %3362 = vset.pattern.permute.xlu0 0
        %3363 = vperm.xlu0 %3362, %v3349
        %v3364 = vpop.permute.xlu0 %3363
        %3367 = vset.pattern.permute.xlu0 0
        %3368 = vperm.xlu0 %3367, %v3350
        %v3369 = vpop.permute.xlu0 %3368
        %v3371 = vmul.f32 %v3276, %v3354
        %v3372 = vmul.f32 %v3278, %v3354
        %v3373 = vmul.f32 %v3329, %v3354
        %v3374 = vmul.f32 %v3331, %v3354
        %v3375 = vmul.f32 %v3280, %v3359
        %v3376 = vmul.f32 %v3282, %v3359
        %v3377 = vmul.f32 %v3333, %v3359
        %v3378 = vmul.f32 %v3335, %v3359
        %v3379 = vmul.f32 %v3286, %v3364
        %v3380 = vmul.f32 %v3288, %v3364
        %v3381 = vmul.f32 %v3339, %v3364
        %v3382 = vmul.f32 %v3341, %v3364
        %v3383 = vmul.f32 %v3290, %v3369
        %v3384 = vmul.f32 %v3292, %v3369
        %v3385 = vmul.f32 %v3343, %v3369
        %v3386 = vmul.f32 %v3345, %v3369
        %v3387 = vld [vmem:[%s15] sm:$0xff]
        %v3388 = vld [vmem:[%s15 + $0x8] sm:$0xff]
        %v3389 = vld [vmem:[%s15 + $0x10] sm:$0xff]
        %v3390 = vld [vmem:[%s15 + $0x18] sm:$0xff]
        %3392 = vset.pattern.permute.xlu0 0
        %3393 = vperm.xlu0 %3392, %v3387
        %v3394 = vpop.permute.xlu0 %3393
        %3397 = vset.pattern.permute.xlu0 0
        %3398 = vperm.xlu0 %3397, %v3388
        %v3399 = vpop.permute.xlu0 %3398
        %3402 = vset.pattern.permute.xlu0 0
        %3403 = vperm.xlu0 %3402, %v3389
        %v3404 = vpop.permute.xlu0 %3403
        %3407 = vset.pattern.permute.xlu0 0
        %3408 = vperm.xlu0 %3407, %v3390
        %v3409 = vpop.permute.xlu0 %3408
        %v3411 = vadd.f32 %v3371, %v3394
        %v3412 = vadd.f32 %v3372, %v3394
        %v3413 = vadd.f32 %v3373, %v3394
        %v3414 = vadd.f32 %v3374, %v3394
        %v3415 = vadd.f32 %v3375, %v3399
        %v3416 = vadd.f32 %v3376, %v3399
        %v3417 = vadd.f32 %v3377, %v3399
        %v3418 = vadd.f32 %v3378, %v3399
        %v3419 = vadd.f32 %v3379, %v3404
        %v3420 = vadd.f32 %v3380, %v3404
        %v3421 = vadd.f32 %v3381, %v3404
        %v3422 = vadd.f32 %v3382, %v3404
        %v3423 = vadd.f32 %v3383, %v3409
        %v3424 = vadd.f32 %v3384, %v3409
        %v3425 = vadd.f32 %v3385, %v3409
        %v3426 = vadd.f32 %v3386, %v3409
        %v3427 = vmul.f32 %v3411, %v3411
        %v3428 = vmul.f32 %v3412, %v3412
        %v3429 = vmul.f32 %v3413, %v3413
        %v3430 = vmul.f32 %v3414, %v3414
        %v3431 = vmul.f32 %v3415, %v3415
        %v3432 = vmul.f32 %v3416, %v3416
        %v3433 = vmul.f32 %v3417, %v3417
        %v3434 = vmul.f32 %v3418, %v3418
        %v3435 = vmul.f32 %v3419, %v3419
        %v3436 = vmul.f32 %v3420, %v3420
        %v3437 = vmul.f32 %v3421, %v3421
        %v3438 = vmul.f32 %v3422, %v3422
        %v3439 = vmul.f32 %v3423, %v3423
        %v3440 = vmul.f32 %v3424, %v3424
        %v3441 = vmul.f32 %v3425, %v3425
        %v3442 = vmul.f32 %v3426, %v3426
        %v3443 = vmul.f32 %v3411, %v3427
        %v3444 = vmul.f32 %v3412, %v3428
        %v3445 = vmul.f32 %v3413, %v3429
        %v3446 = vmul.f32 %v3414, %v3430
        %v3447 = vmul.f32 %v3415, %v3431
        %v3448 = vmul.f32 %v3416, %v3432
        %v3449 = vmul.f32 %v3417, %v3433
        %v3450 = vmul.f32 %v3418, %v3434
        %v3451 = vmul.f32 %v3419, %v3435
        %v3452 = vmul.f32 %v3420, %v3436
        %v3453 = vmul.f32 %v3421, %v3437
        %v3454 = vmul.f32 %v3422, %v3438
        %v3455 = vmul.f32 %v3423, %v3439
        %v3456 = vmul.f32 %v3424, %v3440
        %v3457 = vmul.f32 %v3425, %v3441
        %v3458 = vmul.f32 %v3426, %v3442
        %v3459 = vmul.f32 %v3443, 0.044715
        %v3460 = vmul.f32 %v3444, 0.044715
        %v3461 = vmul.f32 %v3445, 0.044715
        %v3462 = vmul.f32 %v3446, 0.044715
        %v3463 = vmul.f32 %v3447, 0.044715
        %v3464 = vmul.f32 %v3448, 0.044715
        %v3465 = vmul.f32 %v3449, 0.044715
        %v3466 = vmul.f32 %v3450, 0.044715
        %v3467 = vmul.f32 %v3451, 0.044715
        %v3468 = vmul.f32 %v3452, 0.044715
        %v3469 = vmul.f32 %v3453, 0.044715
        %v3470 = vmul.f32 %v3454, 0.044715
        %v3471 = vmul.f32 %v3455, 0.044715
        %v3472 = vmul.f32 %v3456, 0.044715
        %v3473 = vmul.f32 %v3457, 0.044715
        %v3474 = vmul.f32 %v3458, 0.044715
        %v3475 = vadd.f32 %v3411, %v3459
        %v3476 = vadd.f32 %v3412, %v3460
        %v3477 = vadd.f32 %v3413, %v3461
        %v3478 = vadd.f32 %v3414, %v3462
        %v3479 = vadd.f32 %v3415, %v3463
        %v3480 = vadd.f32 %v3416, %v3464
        %v3481 = vadd.f32 %v3417, %v3465
        %v3482 = vadd.f32 %v3418, %v3466
        %v3483 = vadd.f32 %v3419, %v3467
        %v3484 = vadd.f32 %v3420, %v3468
        %v3485 = vadd.f32 %v3421, %v3469
        %v3486 = vadd.f32 %v3422, %v3470
        %v3487 = vadd.f32 %v3423, %v3471
        %v3488 = vadd.f32 %v3424, %v3472
        %v3489 = vadd.f32 %v3425, %v3473
        %v3490 = vadd.f32 %v3426, %v3474
        %v3491 = vmul.f32 %v3475, 0.7978846
        %v3492 = vmul.f32 %v3476, 0.7978846
        %v3493 = vmul.f32 %v3477, 0.7978846
        %v3494 = vmul.f32 %v3478, 0.7978846
        %v3495 = vmul.f32 %v3479, 0.7978846
        %v3496 = vmul.f32 %v3480, 0.7978846
        %v3497 = vmul.f32 %v3481, 0.7978846
        %v3498 = vmul.f32 %v3482, 0.7978846
        %v3499 = vmul.f32 %v3483, 0.7978846
        %v3500 = vmul.f32 %v3484, 0.7978846
        %v3501 = vmul.f32 %v3485, 0.7978846
        %v3502 = vmul.f32 %v3486, 0.7978846
        %v3503 = vmul.f32 %v3487, 0.7978846
        %v3504 = vmul.f32 %v3488, 0.7978846
        %v3505 = vmul.f32 %v3489, 0.7978846
        %v3506 = vmul.f32 %v3490, 0.7978846
        %v3507 = vtanh.pop %v3491
        %v3508 = vtanh.pop %v3492
        %v3509 = vtanh.pop %v3493
        %v3510 = vtanh.pop %v3494
        %v3511 = vtanh.pop %v3495
        %v3512 = vtanh.pop %v3496
        %v3513 = vtanh.pop %v3497
        %v3514 = vtanh.pop %v3498
        %v3515 = vtanh.pop %v3499
        %v3516 = vtanh.pop %v3500
        %v3517 = vtanh.pop %v3501
        %v3518 = vtanh.pop %v3502
        %v3519 = vtanh.pop %v3503
        %v3520 = vtanh.pop %v3504
        %v3521 = vtanh.pop %v3505
        %v3522 = vtanh.pop %v3506
        %v3523 = vadd.f32 %v3507, 1.0
        %v3524 = vadd.f32 %v3508, 1.0
        %v3525 = vadd.f32 %v3509, 1.0
        %v3526 = vadd.f32 %v3510, 1.0
        %v3527 = vadd.f32 %v3511, 1.0
        %v3528 = vadd.f32 %v3512, 1.0
        %v3529 = vadd.f32 %v3513, 1.0
        %v3530 = vadd.f32 %v3514, 1.0
        %v3531 = vadd.f32 %v3515, 1.0
        %v3532 = vadd.f32 %v3516, 1.0
        %v3533 = vadd.f32 %v3517, 1.0
        %v3534 = vadd.f32 %v3518, 1.0
        %v3535 = vadd.f32 %v3519, 1.0
        %v3536 = vadd.f32 %v3520, 1.0
        %v3537 = vadd.f32 %v3521, 1.0
        %v3538 = vadd.f32 %v3522, 1.0
        %v3539 = vmul.f32 %v3523, 0.5
        %v3540 = vmul.f32 %v3524, 0.5
        %v3541 = vmul.f32 %v3525, 0.5
        %v3542 = vmul.f32 %v3526, 0.5
        %v3543 = vmul.f32 %v3527, 0.5
        %v3544 = vmul.f32 %v3528, 0.5
        %v3545 = vmul.f32 %v3529, 0.5
        %v3546 = vmul.f32 %v3530, 0.5
        %v3547 = vmul.f32 %v3531, 0.5
        %v3548 = vmul.f32 %v3532, 0.5
        %v3549 = vmul.f32 %v3533, 0.5
        %v3550 = vmul.f32 %v3534, 0.5
        %v3551 = vmul.f32 %v3535, 0.5
        %v3552 = vmul.f32 %v3536, 0.5
        %v3553 = vmul.f32 %v3537, 0.5
        %v3554 = vmul.f32 %v3538, 0.5
        %v3555 = vmul.f32 %v3411, %v3539
        %v3556 = vmul.f32 %v3412, %v3540
        %v3557 = vmul.f32 %v3413, %v3541
        %v3558 = vmul.f32 %v3414, %v3542
        %v3559 = vmul.f32 %v3415, %v3543
        %v3560 = vmul.f32 %v3416, %v3544
        %v3561 = vmul.f32 %v3417, %v3545
        %v3562 = vmul.f32 %v3418, %v3546
        %v3563 = vmul.f32 %v3419, %v3547
        %v3564 = vmul.f32 %v3420, %v3548
        %v3565 = vmul.f32 %v3421, %v3549
        %v3566 = vmul.f32 %v3422, %v3550
        %v3567 = vmul.f32 %v3423, %v3551
        %v3568 = vmul.f32 %v3424, %v3552
        %v3569 = vmul.f32 %v3425, %v3553
        %v3570 = vmul.f32 %v3426, %v3554
        %v3571 = vpack.c.bf16 %v3559, %v3555
        %v3572 = vpack.c.bf16 %v3560, %v3556
        %v3573 = vpack.c.bf16 %v3567, %v3563
        %v3574 = vpack.c.bf16 %v3568, %v3564
        %v3579 = vunpack.c.l.b16 %v3571
        %v3580 = vunpack.c.l.b16 %v3572
        %v3581 = vunpack.c.h.b16 %v3571
        %v3582 = vunpack.c.h.b16 %v3572
        %v3583 = vunpack.c.l.b16 %v3573
        %v3584 = vunpack.c.l.b16 %v3574
        %v3585 = vunpack.c.h.b16 %v3573
        %v3586 = vunpack.c.h.b16 %v3574
        %v3587 = vpack.c.b16 %v3580, %v3579
        %v3588 = vpack.c.b16 %v3582, %v3581
        %v3589 = vpack.c.b16 %v3584, %v3583
        %v3590 = vpack.c.b16 %v3586, %v3585
        %3595 = vst [vmem:[%s616] sm:$0xff] %v3587
        %3596 = vst [vmem:[%s616 + $0x8] sm:$0xff] %v3588
        %3597 = vst [vmem:[%s616 + $0x10] sm:$0xff] %v3589
        %3598 = vst [vmem:[%s616 + $0x18] sm:$0xff] %v3590
        %v3599 = vpack.c.bf16 %v3561, %v3557
        %v3600 = vpack.c.bf16 %v3562, %v3558
        %v3601 = vpack.c.bf16 %v3569, %v3565
        %v3602 = vpack.c.bf16 %v3570, %v3566
        %v3607 = vunpack.c.l.b16 %v3599
        %v3608 = vunpack.c.l.b16 %v3600
        %v3609 = vunpack.c.h.b16 %v3599
        %v3610 = vunpack.c.h.b16 %v3600
        %v3611 = vunpack.c.l.b16 %v3601
        %v3612 = vunpack.c.l.b16 %v3602
        %v3613 = vunpack.c.h.b16 %v3601
        %v3614 = vunpack.c.h.b16 %v3602
        %v3615 = vpack.c.b16 %v3608, %v3607
        %v3616 = vpack.c.b16 %v3610, %v3609
        %v3617 = vpack.c.b16 %v3612, %v3611
        %v3618 = vpack.c.b16 %v3614, %v3613
        %s3623 = scalar_lea.vmem %s616, 32
        %3624 = vst [vmem:[%s3623] sm:$0xff] %v3615
        %3625 = vst [vmem:[%s3623 + $0x8] sm:$0xff] %v3616
        %3626 = vst [vmem:[%s3623 + $0x10] sm:$0xff] %v3617
        %3627 = vst [vmem:[%s3623 + $0x18] sm:$0xff] %v3618
        %s3628 = sand.u32 %s408, 1
        %s3629 = scalar_lea.sflag [#allocation4], %s3628
        %s3630 = sand.u32 %s408, 1
        %s3631 = smul.addr %s3630, 16
        %s3632 = scalar_lea.vmem [#allocation3], %s3631
        %s3633 = smul.u32 2, %s33
        %p3634 = scmp.lt.s32.totalorder %s3633, 3
        %s3635 = scalar_select %p3634, %s3633, 3
        %s3636 = smul.addr %s3635, 8
        %s3637 = smul.addr %s3636, 4
        %s3638 = scalar_lea.vmem %s18, %s3637
        // Predicated region
        $region89: #{semantic2feature_forward.1} parent=87 // pred_check
          %p3639 = pneg %p418
        $region90: #{semantic2feature_forward.1} parent=87 // pred_check_branch
          %3641 = sbr.rel (%p3639) target = $region92
        $region91: #{semantic2feature_forward.1} parent=87 // pred_region
          %s3642 = smul.u32 2, %s33
          %s3644 = ssub.s32 256, 256
          %3645 = vsyncadd %s3629, %s3644
          %s3646 = smul.addr %s3642, 128
          %s3647 = scalar_lea.hbm %s17, %s3646
          %s3648 = sshll.u32 %s3632, 4
          %s3649 = int_to_ptr.vmem [resolvable:$true] %s3648
          %3654 = dma.vmem_to_hbm [thread:$0]  %s3649, 256, %s3647, %s3629, 128, 128, 8
        $region92: #{semantic2feature_forward.1} parent=87 // pred_fallthru
          _
        // Predicated region
        $region93: #{semantic2feature_forward.1} parent=87 // pred_check
          %p3655 = pneg %p444
        $region94: #{semantic2feature_forward.1} parent=87 // pred_check_branch
          %3657 = sbr.rel (%p3655) target = $region96
        $region95: #{semantic2feature_forward.1} parent=87 // pred_region
          %s3658 = smul.u32 2, %s33
        $region96: #{semantic2feature_forward.1} parent=87 // pred_fallthru
          _
      $region88: #{semantic2feature_forward.1} parent=5 // pred_fallthru
        _
      %p3659 = scmp.le.s32.totalorder 2, %s28
      // Predicated region
      $region97: #{semantic2feature_forward.1} parent=5 // pred_check
        %p3660 = pneg %p3659
      $region98: #{semantic2feature_forward.1} parent=5 // pred_check_branch
        %3662 = sbr.rel (%p3660) target = $region100
      $region99: #{semantic2feature_forward.1} parent=5 // pred_region
        %s3663 = ssub.s32 %s28, 2
        // Predicated region
        $region101: #{semantic2feature_forward.1} parent=99 // pred_check
          %p3664 = pneg %p424
        $region102: #{semantic2feature_forward.1} parent=99 // pred_check_branch
          %3666 = sbr.rel (%p3664) target = $region104
        $region103: #{semantic2feature_forward.1} parent=99 // pred_region
          %s3667 = sand.u32 %s409, 1
          %s3668 = scalar_lea.sflag [#allocation4], %s3667
          %s3669 = sand.u32 %s409, 1
          %s3670 = smul.addr %s3669, 16
          %s3671 = scalar_lea.vmem [#allocation3], %s3670
          %3672 = dma.done %s3668, 256
        $region104: #{semantic2feature_forward.1} parent=99 // pred_fallthru
          _
        // Predicated region
        $region105: #{semantic2feature_forward.1} parent=99 // pred_check
          %p3673 = pneg %p450
        $region106: #{semantic2feature_forward.1} parent=99 // pred_check_branch
          %3675 = sbr.rel (%p3673) target = $region108
        $region107: #{semantic2feature_forward.1} parent=99 // pred_region
          %s3676 = smul.u32 2, %s34
          %p3677 = scmp.lt.s32.totalorder %s3676, 3
          %s3678 = scalar_select %p3677, %s3676, 3
          %s3679 = smul.addr %s3678, 8
          %s3680 = smul.addr %s3679, 4
          %s3681 = scalar_lea.vmem %s18, %s3680
        $region108: #{semantic2feature_forward.1} parent=99 // pred_fallthru
          _
      $region100: #{semantic2feature_forward.1} parent=5 // pred_fallthru
        _
    $region6: #{semantic2feature_forward.1} parent=1 // loop_footer
      %s32 = sadd.s32 1, %s28
    $region7: #{semantic2feature_forward.1} parent=1 // loop_footer_branch
      %27 = sbr.rel target = $region3
    $region8: #{semantic2feature_forward.1} parent=1 // loop_exit
      _
    %3682 = vsyncpa [#allocation4], 1
    %s3683 = scalar_lea.sflag [#allocation4], 1
    %3684 = vsyncpa %s3683, 1

</llo_original>
